<compile_context>
chip_gen: v7x
topology: tpu7x:2x2x1
jax: 0.10.0
libtpu: 0.0.40
codegen_flags: <defaults>
</compile_context>

<pallas_src>
import jax
import jax.numpy as jnp
from jax.experimental import pallas as pl
from jax.experimental.pallas import tpu as pltpu

K = 7                         # neighbours per EdgeConv (conv_params)
CONV_PARAMS = [(K, (32, 32, 32)), (K, (64, 64, 64))]
INPUT_DIMS = 3                # ParticleNet(input_dims=3)
FC_HIDDEN = 128
FUSION_OUT = 128              # clip(96 // 128 * 128, 128, 1024)

PARAM_ORDER = (
    "bn_s", "bn_b",
    "ec0_wcat", "ec0_b0", "ec0_w1", "ec0_b1", "ec0_w2", "ec0_b2", "ec0_bsc",
    "ec1_wcat", "ec1_b0", "ec1_w1", "ec1_b1", "ec1_w2", "ec1_b2", "ec1_bsc",
    "fus_w", "fus_b",
)

# weight matrices fed to the MXU in bf16 (f32 accumulation); biases stay f32
BF16_PARAMS = frozenset(
    n for n in PARAM_ORDER
    if n.endswith(("_wcat", "_w1", "_w2")) or n == "fus_w"
)


# ----------------------------------------------------------------------------
# in-kernel helper (traced inside the Pallas kernel body)
# ----------------------------------------------------------------------------
def _edge_conv(pts3, fts_flat, wcat, b0, w1, b1, w2, b2, bsc, k):
    """EdgeConvBlock.forward for a (Bt, P, *) slab.

    pts3:     (Bt, P, Cp)  coordinates (already coord-shifted), f32
    fts_flat: (Bt*P, Cin)  features, f32
    wcat = [ (W0a-W0b)^T | W0b^T | Wsc^T ]  (BN folded, bf16, one MXU launch)
    Returns (Bt*P, Cout) = ReLU(shortcut + mean_k MLP([x_i, x_j - x_i])), f32.
    """
    bt, p, _ = pts3.shape
    kp = k * p
    c0 = w1.shape[0]          # first MLP layer width
    c2 = w2.shape[1]          # last MLP layer width (= shortcut width)

    # ---------------- knn: packed-key single-reduction arg-top-k -------------
    # score[b,i,j] = 2<p_i,p_j> - ||p_j||^2  (= torch pairwise_distance plus a
    # per-row constant ||p_i||^2, so the per-row top-k is identical), computed
    # via an augmented-coordinate matmul -> no in-kernel transpose needed.
    xx = jnp.sum(pts3 * pts3, axis=2, keepdims=True)                 # (Bt,P,1)
    ones = jnp.ones((bt, p, 1), jnp.float32)
    aug_q = jnp.concatenate([2.0 * pts3, -ones], axis=2)             # (Bt,P,Cp+1)
    aug_k = jnp.concatenate([pts3, xx], axis=2)                      # (Bt,P,Cp+1)
    score = jnp.einsum("bic,bjc->bij", aug_q, aug_k,
                       preferred_element_type=jnp.float32)           # (Bt,P,P) f32

    col = jax.lax.broadcasted_iota(jnp.int32, (1, p, p), 2)          # broadcast
    row = jax.lax.broadcasted_iota(jnp.int32, (1, p, p), 1)          # over batch
    nbits = max(1, (p - 1).bit_length())
    lowmask = (1 << nbits) - 1
    int_min = jnp.int32(jnp.iinfo(jnp.int32).min)

    # monotone int32 key of the f32 score (sign-aware bit trick), with the
    # low nbits replaced by (lowmask - col) so a single max reduction gives
    # both the maximum and its smallest achieving column index.
    bits = pltpu.bitcast(score, jnp.int32)
    key = jnp.where(bits < 0, bits ^ jnp.int32(0x7FFFFFFF), bits)
    key = (key & jnp.int32(~lowmask)) | (lowmask - col)
    key = jnp.where(col == row, int_min, key)          # pre-mask self (diag)
    # TODO(synk): tie-breaking is smallest-index (and scores equal in the low
    # nbits mantissa bits tie by index); torch.topk order for exactly
    # coincident points is unspecified, so duplicate-point events may pick a
    # different (equally near) neighbour set.

    oh_list = []
    for t in range(k):
        mkey = jnp.max(key, axis=2, keepdims=True)                   # (Bt,P,1)
        sel = lowmask - (mkey & lowmask)                             # col index
        oh = col == sel                                              # (Bt,P,P)
        oh_list.append(oh)                                           # bool
        if t + 1 < k:
            key = jnp.where(oh, int_min, key)
    onehot = jnp.concatenate(oh_list, axis=1).astype(jnp.bfloat16)   # (Bt,kP,P)

    # -------- fused projections + gather + EdgeConv MLP ----------------------
    fts16 = fts_flat.astype(jnp.bfloat16)                            # (Bt*P, Cin)
    hcat = jnp.dot(fts16, wcat, preferred_element_type=jnp.float32)  # (Bt*P, 2c0+c2)
    h_self = hcat[:, 0:c0] + b0                                      # (W0a-W0b)x_i
    z3 = hcat[:, c0:2 * c0].reshape(bt, p, c0).astype(jnp.bfloat16)  # W0b x_j src
    sc = hcat[:, 2 * c0:2 * c0 + c2] + bsc                           # shortcut

    gathered = jnp.einsum("bqp,bpc->bqc", onehot, z3,
                          preferred_element_type=jnp.float32)        # (Bt,kP,C0)
    # broadcast-add the self term over the k neighbour blocks (no concat copy)
    y = jnp.maximum(gathered.reshape(bt, k, p, c0)
                    + h_self.reshape(bt, 1, p, c0), 0.0)             # layer 0

    # layers 1..2 on the whole (Bt*k*P, C) slab
    y = y.reshape(bt * kp, c0).astype(jnp.bfloat16)
    y = jnp.maximum(jnp.dot(y, w1, preferred_element_type=jnp.float32) + b1, 0.0)
    y = y.astype(jnp.bfloat16)
    y = jnp.maximum(jnp.dot(y, w2, preferred_element_type=jnp.float32) + b2, 0.0)

    # mean over the k neighbours via static leading-axis slices
    y4 = y.reshape(bt, k, p, c2)
    acc = y4[:, 0]
    for t in range(1, k):
        acc = acc + y4[:, t]
    mean_fts = acc.reshape(bt * p, c2) * (1.0 / float(k))            # (Bt*P, C2)

    return jnp.maximum(sc + mean_fts, 0.0)                           # (Bt*P, C2)


# ----------------------------------------------------------------------------
# the Pallas kernel: ParticleNet trunk for Bt batch elements per grid step
# ----------------------------------------------------------------------------
def _particlenet_kernel(
        inp_ref,
        bn_s, bn_b,
        e0wcat, e0b0, e0w1, e0b1, e0w2, e0b2, e0bsc,
        e1wcat, e1b0, e1w1, e1b1, e1w2, e1b2, e1bsc,
        fus_w, fus_b,
        out_ref):
    bt, p, _ = inp_ref.shape
    data = inp_ref[...]                                    # (Bt, P, 6) f32
    pts = data[:, :, 0:INPUT_DIMS]                         # (Bt, P, 3)
    feat = data[:, :, INPUT_DIMS:2 * INPUT_DIMS]           # (Bt, P, 3)

    # mask = features.abs().sum(channel) != 0   (mask=None path of ParticleNet)
    mask3 = (jnp.sum(jnp.abs(feat), axis=2, keepdims=True) != 0).astype(jnp.float32)
    pts = pts * mask3
    feat = feat * mask3
    coord_shift = (1.0 - mask3) * 1.0e9                    # (Bt, P, 1)
    counts = jnp.maximum(jnp.sum(mask3, axis=1), 1.0)      # (Bt, 1)

    mask_flat = mask3.reshape(bt * p, 1)
    # use_fts_bn: eval-mode BatchNorm1d folded to per-channel scale/shift
    fts = (feat.reshape(bt * p, INPUT_DIMS) * bn_s[...] + bn_b[...]) * mask_flat

    # EdgeConv block 0: k=7, 3 -> (32, 32, 32)
    fts1 = _edge_conv(pts + coord_shift, fts,
                      e0wcat[...], e0b0[...], e0w1[...], e0b1[...],
                      e0w2[...], e0b2[...], e0bsc[...],
                      K) * mask_flat                       # (Bt*P, 32)
    c1 = fts1.shape[1]

    # EdgeConv block 1: k=7, 32 -> (64, 64, 64); coordinates are previous fts
    fts2 = _edge_conv(fts1.reshape(bt, p, c1) + coord_shift, fts1,
                      e1wcat[...], e1b0[...], e1w1[...], e1b1[...],
                      e1w2[...], e1b2[...], e1bsc[...],
                      K) * mask_flat                       # (Bt*P, 64)

    # fusion block: Conv1d(96 -> 128, bias=False)+BN+ReLU as two half matmuls
    fw = fus_w[...]                                        # (96, 128) bf16
    fus = jnp.maximum(
        jnp.dot(fts1.astype(jnp.bfloat16), fw[:c1],
                preferred_element_type=jnp.float32)
        + jnp.dot(fts2.astype(jnp.bfloat16), fw[c1:],
                  preferred_element_type=jnp.float32)
        + fus_b[...], 0.0) * mask_flat                     # (Bt*P, 128)

    # use_counts: masked mean pooling over points -> lane-dense (Bt, 128) output
    pooled = jnp.sum(fus.reshape(bt, p, FUSION_OUT), axis=1) / counts
    out_ref[...] = pooled.reshape(out_ref.shape)


# ----------------------------------------------------------------------------
# wrapper
# ----------------------------------------------------------------------------
def _const_index_map(ndim):
    return lambda b: (0,) * ndim


def particlenet_tagger(params, pf_points, pf_features, pf_mask=None,
                       sv_points=None, sv_features=None, sv_mask=None,
                       batch_block=8):
    """Forward pass of ParticleNetTagger (pf path only, as in the reference).

    pf_points / pf_features: (B, 3, P) channel-major, like the PyTorch module.
    Returns logits (B, num_classes).  sv_* / pf_mask are accepted but unused,
    matching the reference forward (mask=None, no input dropout).

    batch_block: events per grid step.  8 is a safe default on all gens;
    raise to 16-32 on v6e (128 MiB VMEM), keep <=16 on v7x (64 MiB per TC).
    """
    B, _, P = pf_points.shape
    assert P >= K + 1, "need at least k+1 points per event"

    # pad the batch with fully-masked dummy events instead of shrinking bt
    bt = max(1, min(int(batch_block), int(B)))
    nb = -(-B // bt)                 # ceil division
    b_pad = nb * bt

    # layout glue: NCW (B, C, P) -> point-major (B, P, C), merged into one
    # (B, P, 6) input stream (single BlockSpec / DMA stream).
    pts = jnp.transpose(pf_points.astype(jnp.float32), (0, 2, 1))
    fts = jnp.transpose(pf_features.astype(jnp.float32), (0, 2, 1))
    inp = jnp.concatenate([pts, fts], axis=2)              # (B, P, 6)
    if b_pad != B:
        pad = jnp.zeros((b_pad - B, P, 2 * INPUT_DIMS), jnp.float32)
        inp = jnp.concatenate([inp, pad], axis=0)          # zero feats => masked

    def prep(name):
        v = params[name]
        return v.astype(jnp.bfloat16) if name in BF16_PARAMS else v.astype(jnp.float32)

    param_list = [prep(n) for n in PARAM_ORDER]

    in_specs = (
        [pl.BlockSpec((bt, P, 2 * INPUT_DIMS), lambda b: (b, 0, 0))]
        + [pl.BlockSpec(p_.shape, _const_index_map(p_.ndim)) for p_ in param_list]
    )

    pooled = pl.pallas_call(
        _particlenet_kernel,
        out_shape=jax.ShapeDtypeStruct((nb, bt, FUSION_OUT), jnp.float32),
        grid=(nb,),
        in_specs=in_specs,
        out_specs=pl.BlockSpec((1, bt, FUSION_OUT), lambda b: (b, 0, 0)),
        compiler_params=pltpu.CompilerParams(
            dimension_semantics=("parallel",),
            vmem_limit_bytes=56 * 1024 * 1024),
    )(inp, *param_list)

    pooled = pooled.reshape(b_pad, FUSION_OUT)[:B]

    # fc head: Linear(128,128)+ReLU+Dropout(eval=identity)+Linear(128,NC)
    # done outside the kernel as one lane-dense batched matmul.
    h = jnp.maximum(pooled @ params["fc1_w"] + params["fc1_b"], 0.0)
    return h @ params["fc2_w"] + params["fc2_b"]


# ----------------------------------------------------------------------------
# deterministic synthetic parameter initialisation (BN folded, eval mode)
# ----------------------------------------------------------------------------
def init_params(key, num_classes):
    eps = 1e-5
    kit = iter(jax.random.split(key, 128))

    def nrm(shape, scale=0.2):
        return scale * jax.random.normal(next(kit), shape, dtype=jnp.float32)

    def bn_fold(c):
        gamma = 1.0 + 0.1 * jax.random.normal(next(kit), (c,), dtype=jnp.float32)
        beta = 0.1 * jax.random.normal(next(kit), (c,), dtype=jnp.float32)
        rmean = 0.1 * jax.random.normal(next(kit), (c,), dtype=jnp.float32)
        rvar = 1.0 + 0.1 * jnp.abs(jax.random.normal(next(kit), (c,), dtype=jnp.float32))
        s = gamma / jnp.sqrt(rvar + eps)
        b = beta - rmean * s
        return s, b

    p = {}
    # ParticleNet.bn_fts (BatchNorm1d(3))
    s, b = bn_fold(INPUT_DIMS)
    p["bn_s"], p["bn_b"] = s.reshape(1, -1), b.reshape(1, -1)

    in_feat = INPUT_DIMS
    for bi, (_, channels) in enumerate(CONV_PARAMS):
        # layer 0: Conv2d(2*in_feat -> c0, 1x1, bias=False) + BN2d, folded,
        # reassociated into self/neighbour terms and fused with the shortcut
        # projection into ONE (Cin, 2*c0 + c_last) weight matrix.
        c0 = channels[0]
        w = nrm((c0, 2 * in_feat))                 # torch weight (Cout, 2*Cin)
        s, b = bn_fold(c0)
        wf = w * s[:, None]
        wa, wb = wf[:, :in_feat], wf[:, in_feat:]
        wself = (wa - wb).T                        # acts on x_i       (Cin, C0)
        wnbr = wb.T                                # acts on gathered x_j
        p[f"ec{bi}_b0"] = b.reshape(1, -1)
        cin = c0
        for li, cout in enumerate(channels[1:], start=1):
            w = nrm((cout, cin))
            s, b = bn_fold(cout)
            p[f"ec{bi}_w{li}"] = (w * s[:, None]).T
            p[f"ec{bi}_b{li}"] = b.reshape(1, -1)
            cin = cout
        wsc = nrm((channels[-1], in_feat))         # shortcut Conv1d + BN1d folded
        s, b = bn_fold(channels[-1])
        wsc_f = (wsc * s[:, None]).T               # (Cin, Clast)
        p[f"ec{bi}_bsc"] = b.reshape(1, -1)
        p[f"ec{bi}_wcat"] = jnp.concatenate([wself, wnbr, wsc_f], axis=1)
        in_feat = channels[-1]

    # fusion block: Conv1d(96 -> 128, bias=False) + BN1d
    in_chn = sum(c[-1] for _, c in CONV_PARAMS)    # 96
    wf = nrm((FUSION_OUT, in_chn))
    s, b = bn_fold(FUSION_OUT)
    p["fus_w"] = (wf * s[:, None]).T
    p["fus_b"] = b.reshape(1, -1)

    # fc: Linear(128,128) -> ReLU -> Dropout -> Linear(128, num_classes)
    w1 = nrm((FC_HIDDEN, FUSION_OUT))
    p["fc1_w"] = w1.T
    p["fc1_b"] = nrm((FC_HIDDEN,), 0.05).reshape(1, -1)
    w2 = nrm((num_classes, FC_HIDDEN))
    p["fc2_w"] = w2.T
    p["fc2_b"] = nrm((num_classes,), 0.05).reshape(1, -1)
    return p


# ----------------------------------------------------------------------------
if __name__ == "__main__":
    B, P, NC = 2, 16, 5          # batch, points, num_classes (P > k+1 = 8)
    key = jax.random.PRNGKey(0)
    kp, kf, kw = jax.random.split(key, 3)

    pf_points = jax.random.normal(kp, (B, INPUT_DIMS, P), dtype=jnp.float32)
    pf_features = jax.random.normal(kf, (B, INPUT_DIMS, P), dtype=jnp.float32)
    # zero the last 3 points so the feature-derived padding mask is exercised
    valid = (jnp.arange(P) < P - 3).astype(jnp.float32)[None, None, :]
    pf_points = pf_points * valid
    pf_features = pf_features * valid
    pf_mask = jnp.ones((B, 1, P), jnp.float32) * valid

    # sv_* inputs are unused by the reference forward (dead code there too)
    sv_points = jnp.zeros((B, INPUT_DIMS, 4), jnp.float32)
    sv_features = jnp.zeros((B, INPUT_DIMS, 4), jnp.float32)
    sv_mask = jnp.zeros((B, 1, 4), jnp.float32)

    params = init_params(kw, num_classes=NC)

    # NOTE: BatchNorm is eval-mode (folded running stats), Dropout is identity.
    # TODO(synk): training-mode BatchNorm (batch statistics) / stochastic Dropout
    # are not reproduced; only inference semantics are implemented.
    logits = particlenet_tagger(params, pf_points, pf_features, pf_mask,
                                sv_points, sv_features, sv_mask)
    jax.block_until_ready(logits)
    assert logits.shape == (B, NC), logits.shape
    assert bool(jnp.all(jnp.isfinite(logits)))
    print("KERNEL_OK")
</pallas_src>

<mosaic_0001>
module attributes {stable_mosaic.version = 11 : i64} {
  func.func @_particlenet_kernel(%arg0: i32, %arg1: memref<2x16x6xf32, #tpu.memory_space<vmem>>, %arg2: memref<1x3xf32, #tpu.memory_space<vmem>>, %arg3: memref<1x3xf32, #tpu.memory_space<vmem>>, %arg4: memref<3x96xbf16, #tpu.memory_space<vmem>>, %arg5: memref<1x32xf32, #tpu.memory_space<vmem>>, %arg6: memref<32x32xbf16, #tpu.memory_space<vmem>>, %arg7: memref<1x32xf32, #tpu.memory_space<vmem>>, %arg8: memref<32x32xbf16, #tpu.memory_space<vmem>>, %arg9: memref<1x32xf32, #tpu.memory_space<vmem>>, %arg10: memref<1x32xf32, #tpu.memory_space<vmem>>, %arg11: memref<32x192xbf16, #tpu.memory_space<vmem>>, %arg12: memref<1x64xf32, #tpu.memory_space<vmem>>, %arg13: memref<64x64xbf16, #tpu.memory_space<vmem>>, %arg14: memref<1x64xf32, #tpu.memory_space<vmem>>, %arg15: memref<64x64xbf16, #tpu.memory_space<vmem>>, %arg16: memref<1x64xf32, #tpu.memory_space<vmem>>, %arg17: memref<1x64xf32, #tpu.memory_space<vmem>>, %arg18: memref<96x128xbf16, #tpu.memory_space<vmem>>, %arg19: memref<1x128xf32, #tpu.memory_space<vmem>>, %arg20: memref<1x2x128xf32, #tpu.memory_space<vmem>>) attributes {dimension_semantics = [#tpu.dimension_semantics<parallel>], iteration_bounds = array<i64: 1>, scalar_prefetch = 0 : i64, scratch_operands = 0 : i64, tpu.core_type = #tpu.core_type<tc>, window_params = [{transform_indices = @transform_0, window_bounds = array<i64: 2, 16, 6>}, {pipeline_mode = #tpu.pipeline_mode<synchronous>, transform_indices = @transform_1, window_bounds = array<i64: 1, 3>}, {pipeline_mode = #tpu.pipeline_mode<synchronous>, transform_indices = @transform_2, window_bounds = array<i64: 1, 3>}, {pipeline_mode = #tpu.pipeline_mode<synchronous>, transform_indices = @transform_3, window_bounds = array<i64: 3, 96>}, {pipeline_mode = #tpu.pipeline_mode<synchronous>, transform_indices = @transform_4, window_bounds = array<i64: 1, 32>}, {pipeline_mode = #tpu.pipeline_mode<synchronous>, transform_indices = @transform_5, window_bounds = array<i64: 32, 32>}, {pipeline_mode = #tpu.pipeline_mode<synchronous>, transform_indices = @transform_6, window_bounds = array<i64: 1, 32>}, {pipeline_mode = #tpu.pipeline_mode<synchronous>, transform_indices = @transform_7, window_bounds = array<i64: 32, 32>}, {pipeline_mode = #tpu.pipeline_mode<synchronous>, transform_indices = @transform_8, window_bounds = array<i64: 1, 32>}, {pipeline_mode = #tpu.pipeline_mode<synchronous>, transform_indices = @transform_9, window_bounds = array<i64: 1, 32>}, {pipeline_mode = #tpu.pipeline_mode<synchronous>, transform_indices = @transform_10, window_bounds = array<i64: 32, 192>}, {pipeline_mode = #tpu.pipeline_mode<synchronous>, transform_indices = @transform_11, window_bounds = array<i64: 1, 64>}, {pipeline_mode = #tpu.pipeline_mode<synchronous>, transform_indices = @transform_12, window_bounds = array<i64: 64, 64>}, {pipeline_mode = #tpu.pipeline_mode<synchronous>, transform_indices = @transform_13, window_bounds = array<i64: 1, 64>}, {pipeline_mode = #tpu.pipeline_mode<synchronous>, transform_indices = @transform_14, window_bounds = array<i64: 64, 64>}, {pipeline_mode = #tpu.pipeline_mode<synchronous>, transform_indices = @transform_15, window_bounds = array<i64: 1, 64>}, {pipeline_mode = #tpu.pipeline_mode<synchronous>, transform_indices = @transform_16, window_bounds = array<i64: 1, 64>}, {pipeline_mode = #tpu.pipeline_mode<synchronous>, transform_indices = @transform_17, window_bounds = array<i64: 96, 128>}, {pipeline_mode = #tpu.pipeline_mode<synchronous>, transform_indices = @transform_18, window_bounds = array<i64: 1, 128>}, {transform_indices = @transform_19, window_bounds = array<i64: 1, 2, 128>}]} {
    %c0 = arith.constant 0 : index
    %c0_0 = arith.constant 0 : index
    %c0_1 = arith.constant 0 : index
    %0 = vector.load %arg1[%c0, %c0_0, %c0_1] : memref<2x16x6xf32, #tpu.memory_space<vmem>>, vector<2x16x6xf32>
    %1 = vector.extract_strided_slice %0 {offsets = [0, 0, 0], sizes = [2, 16, 3], strides = [1, 1, 1]} : vector<2x16x6xf32> to vector<2x16x3xf32>
    %2 = vector.extract_strided_slice %0 {offsets = [0, 0, 3], sizes = [2, 16, 3], strides = [1, 1, 1]} : vector<2x16x6xf32> to vector<2x16x3xf32>
    %3 = math.absf %2 : vector<2x16x3xf32>
    %cst = arith.constant dense<0.000000e+00> : vector<2x16xf32>
    %4 = vector.multi_reduction <add>, %3, %cst [2] : vector<2x16x3xf32> to vector<2x16xf32>
    %5 = vector.shape_cast %4 : vector<2x16xf32> to vector<2x16x1xf32>
    %cst_2 = arith.constant 0.000000e+00 : f32
    %6 = vector.broadcast %cst_2 : f32 to vector<2x16x1xf32>
    %7 = arith.cmpf one, %5, %6 : vector<2x16x1xf32>
    %8 = arith.extui %7 : vector<2x16x1xi1> to vector<2x16x1xi32>
    %9 = arith.sitofp %8 : vector<2x16x1xi32> to vector<2x16x1xf32>
    %10 = vector.broadcast %9 : vector<2x16x1xf32> to vector<2x16x3xf32>
    %11 = arith.mulf %1, %10 : vector<2x16x3xf32>
    %12 = vector.broadcast %9 : vector<2x16x1xf32> to vector<2x16x3xf32>
    %13 = arith.mulf %2, %12 : vector<2x16x3xf32>
    %cst_3 = arith.constant 1.000000e+00 : f32
    %14 = vector.broadcast %cst_3 : f32 to vector<2x16x1xf32>
    %15 = arith.subf %14, %9 : vector<2x16x1xf32>
    %cst_4 = arith.constant 1.000000e+09 : f32
    %16 = vector.broadcast %cst_4 : f32 to vector<2x16x1xf32>
    %17 = arith.mulf %15, %16 : vector<2x16x1xf32>
    %cst_5 = arith.constant dense<0.000000e+00> : vector<2x1xf32>
    %18 = vector.multi_reduction <add>, %9, %cst_5 [1] : vector<2x16x1xf32> to vector<2x1xf32>
    %cst_6 = arith.constant 1.000000e+00 : f32
    %19 = vector.broadcast %cst_6 : f32 to vector<2x1xf32>
    %20 = arith.maximumf %18, %19 : vector<2x1xf32>
    %21 = vector.shape_cast %9 : vector<2x16x1xf32> to vector<32x1xf32>
    %22 = vector.shape_cast %13 : vector<2x16x3xf32> to vector<32x3xf32>
    %c0_7 = arith.constant 0 : index
    %c0_8 = arith.constant 0 : index
    %23 = vector.load %arg2[%c0_7, %c0_8] : memref<1x3xf32, #tpu.memory_space<vmem>>, vector<1x3xf32>
    %24 = vector.broadcast %23 : vector<1x3xf32> to vector<32x3xf32>
    %25 = arith.mulf %22, %24 : vector<32x3xf32>
    %c0_9 = arith.constant 0 : index
    %c0_10 = arith.constant 0 : index
    %26 = vector.load %arg3[%c0_9, %c0_10] : memref<1x3xf32, #tpu.memory_space<vmem>>, vector<1x3xf32>
    %27 = vector.broadcast %26 : vector<1x3xf32> to vector<32x3xf32>
    %28 = arith.addf %25, %27 : vector<32x3xf32>
    %29 = vector.broadcast %21 : vector<32x1xf32> to vector<32x3xf32>
    %30 = arith.mulf %28, %29 : vector<32x3xf32>
    %31 = vector.broadcast %17 : vector<2x16x1xf32> to vector<2x16x3xf32>
    %32 = arith.addf %11, %31 : vector<2x16x3xf32>
    %c0_11 = arith.constant 0 : index
    %c0_12 = arith.constant 0 : index
    %33 = vector.load %arg4[%c0_11, %c0_12] : memref<3x96xbf16, #tpu.memory_space<vmem>>, vector<3x96xbf16>
    %c0_13 = arith.constant 0 : index
    %c0_14 = arith.constant 0 : index
    %34 = vector.load %arg5[%c0_13, %c0_14] : memref<1x32xf32, #tpu.memory_space<vmem>>, vector<1x32xf32>
    %c0_15 = arith.constant 0 : index
    %c0_16 = arith.constant 0 : index
    %35 = vector.load %arg6[%c0_15, %c0_16] : memref<32x32xbf16, #tpu.memory_space<vmem>>, vector<32x32xbf16>
    %c0_17 = arith.constant 0 : index
    %c0_18 = arith.constant 0 : index
    %36 = vector.load %arg7[%c0_17, %c0_18] : memref<1x32xf32, #tpu.memory_space<vmem>>, vector<1x32xf32>
    %c0_19 = arith.constant 0 : index
    %c0_20 = arith.constant 0 : index
    %37 = vector.load %arg8[%c0_19, %c0_20] : memref<32x32xbf16, #tpu.memory_space<vmem>>, vector<32x32xbf16>
    %c0_21 = arith.constant 0 : index
    %c0_22 = arith.constant 0 : index
    %38 = vector.load %arg9[%c0_21, %c0_22] : memref<1x32xf32, #tpu.memory_space<vmem>>, vector<1x32xf32>
    %c0_23 = arith.constant 0 : index
    %c0_24 = arith.constant 0 : index
    %39 = vector.load %arg10[%c0_23, %c0_24] : memref<1x32xf32, #tpu.memory_space<vmem>>, vector<1x32xf32>
    %40 = arith.mulf %32, %32 : vector<2x16x3xf32>
    %cst_25 = arith.constant dense<0.000000e+00> : vector<2x16xf32>
    %41 = vector.multi_reduction <add>, %40, %cst_25 [2] : vector<2x16x3xf32> to vector<2x16xf32>
    %42 = vector.shape_cast %41 : vector<2x16xf32> to vector<2x16x1xf32>
    %cst_26 = arith.constant 1.000000e+00 : f32
    %43 = vector.broadcast %cst_26 : f32 to vector<2x16x1xf32>
    %cst_27 = arith.constant 2.000000e+00 : f32
    %44 = vector.broadcast %cst_27 : f32 to vector<2x16x3xf32>
    %45 = arith.mulf %44, %32 : vector<2x16x3xf32>
    %cst_28 = arith.constant 0.000000e+00 : f32
    %46 = vector.broadcast %cst_28 : f32 to vector<2x16x1xf32>
    %47 = arith.subf %46, %43 : vector<2x16x1xf32>
    %48 = tpu.concatenate %45, %47 in 2 : vector<2x16x3xf32>, vector<2x16x1xf32> -> vector<2x16x4xf32>
    %49 = tpu.concatenate %32, %42 in 2 : vector<2x16x3xf32>, vector<2x16x1xf32> -> vector<2x16x4xf32>
    "tpu.trace_start"() <{level = 10 : i32, message = "bic,bjc->bij"}> : () -> ()
    %cst_29 = arith.constant dense<0.000000e+00> : vector<2x16x16xf32>
    %50 = tpu.matmul %48, %49, %cst_29 {dimension_numbers = #tpu.dot_dimension_numbers<[2], [2], [1], [1], [0, 0, 0, 1, 1, 1], [0], [0]>} : vector<2x16x4xf32>, vector<2x16x4xf32>, vector<2x16x16xf32> -> vector<2x16x16xf32>
    "tpu.trace_stop"() : () -> ()
    %51 = tpu.iota {dimensions = array<i32: 2>} : vector<1x16x16xi32>
    %52 = tpu.iota {dimensions = array<i32: 1>} : vector<1x16x16xi32>
    %53 = tpu.bitcast %50 : vector<2x16x16xf32> -> vector<2x16x16xi32>
    %c0_i32 = arith.constant 0 : i32
    %54 = vector.broadcast %c0_i32 : i32 to vector<2x16x16xi32>
    %55 = arith.cmpi slt, %53, %54 : vector<2x16x16xi32>
    %c2147483647_i32 = arith.constant 2147483647 : i32
    %56 = vector.broadcast %c2147483647_i32 : i32 to vector<2x16x16xi32>
    %57 = arith.xori %53, %56 : vector<2x16x16xi32>
    %58 = arith.select %55, %57, %53 : vector<2x16x16xi1>, vector<2x16x16xi32>
    %c-16_i32 = arith.constant -16 : i32
    %59 = vector.broadcast %c-16_i32 : i32 to vector<2x16x16xi32>
    %60 = arith.andi %58, %59 : vector<2x16x16xi32>
    %c15_i32 = arith.constant 15 : i32
    %61 = vector.broadcast %c15_i32 : i32 to vector<1x16x16xi32>
    %62 = arith.subi %61, %51 : vector<1x16x16xi32>
    %63 = vector.broadcast %62 : vector<1x16x16xi32> to vector<2x16x16xi32>
    %64 = arith.ori %60, %63 : vector<2x16x16xi32>
    %65 = arith.cmpi eq, %51, %52 : vector<1x16x16xi32>
    %c-2147483648_i32 = arith.constant -2147483648 : i32
    %66 = vector.shape_cast %65 : vector<1x16x16xi1> to vector<1x16x16xi1>
    %67 = vector.broadcast %66 : vector<1x16x16xi1> to vector<2x16x16xi1>
    %68 = vector.broadcast %c-2147483648_i32 : i32 to vector<2x16x16xi32>
    %69 = arith.select %67, %68, %64 : vector<2x16x16xi1>, vector<2x16x16xi32>
    %cst_30 = arith.constant dense<-2147483648> : vector<2x16xi32>
    %70 = vector.multi_reduction <maxsi>, %69, %cst_30 [2] : vector<2x16x16xi32> to vector<2x16xi32>
    %71 = vector.shape_cast %70 : vector<2x16xi32> to vector<2x16x1xi32>
    %c15_i32_31 = arith.constant 15 : i32
    %72 = vector.broadcast %c15_i32_31 : i32 to vector<2x16x1xi32>
    %73 = arith.andi %71, %72 : vector<2x16x1xi32>
    %c15_i32_32 = arith.constant 15 : i32
    %74 = vector.broadcast %c15_i32_32 : i32 to vector<2x16x1xi32>
    %75 = arith.subi %74, %73 : vector<2x16x1xi32>
    %76 = vector.broadcast %51 : vector<1x16x16xi32> to vector<2x16x16xi32>
    %77 = vector.broadcast %75 : vector<2x16x1xi32> to vector<2x16x16xi32>
    %78 = arith.cmpi eq, %76, %77 : vector<2x16x16xi32>
    %c-2147483648_i32_33 = arith.constant -2147483648 : i32
    %79 = vector.broadcast %c-2147483648_i32_33 : i32 to vector<2x16x16xi32>
    %80 = arith.select %78, %79, %69 : vector<2x16x16xi1>, vector<2x16x16xi32>
    %cst_34 = arith.constant dense<-2147483648> : vector<2x16xi32>
    %81 = vector.multi_reduction <maxsi>, %80, %cst_34 [2] : vector<2x16x16xi32> to vector<2x16xi32>
    %82 = vector.shape_cast %81 : vector<2x16xi32> to vector<2x16x1xi32>
    %c15_i32_35 = arith.constant 15 : i32
    %83 = vector.broadcast %c15_i32_35 : i32 to vector<2x16x1xi32>
    %84 = arith.andi %82, %83 : vector<2x16x1xi32>
    %c15_i32_36 = arith.constant 15 : i32
    %85 = vector.broadcast %c15_i32_36 : i32 to vector<2x16x1xi32>
    %86 = arith.subi %85, %84 : vector<2x16x1xi32>
    %87 = vector.broadcast %51 : vector<1x16x16xi32> to vector<2x16x16xi32>
    %88 = vector.broadcast %86 : vector<2x16x1xi32> to vector<2x16x16xi32>
    %89 = arith.cmpi eq, %87, %88 : vector<2x16x16xi32>
    %c-2147483648_i32_37 = arith.constant -2147483648 : i32
    %90 = vector.broadcast %c-2147483648_i32_37 : i32 to vector<2x16x16xi32>
    %91 = arith.select %89, %90, %80 : vector<2x16x16xi1>, vector<2x16x16xi32>
    %cst_38 = arith.constant dense<-2147483648> : vector<2x16xi32>
    %92 = vector.multi_reduction <maxsi>, %91, %cst_38 [2] : vector<2x16x16xi32> to vector<2x16xi32>
    %93 = vector.shape_cast %92 : vector<2x16xi32> to vector<2x16x1xi32>
    %c15_i32_39 = arith.constant 15 : i32
    %94 = vector.broadcast %c15_i32_39 : i32 to vector<2x16x1xi32>
    %95 = arith.andi %93, %94 : vector<2x16x1xi32>
    %c15_i32_40 = arith.constant 15 : i32
    %96 = vector.broadcast %c15_i32_40 : i32 to vector<2x16x1xi32>
    %97 = arith.subi %96, %95 : vector<2x16x1xi32>
    %98 = vector.broadcast %51 : vector<1x16x16xi32> to vector<2x16x16xi32>
    %99 = vector.broadcast %97 : vector<2x16x1xi32> to vector<2x16x16xi32>
    %100 = arith.cmpi eq, %98, %99 : vector<2x16x16xi32>
    %c-2147483648_i32_41 = arith.constant -2147483648 : i32
    %101 = vector.broadcast %c-2147483648_i32_41 : i32 to vector<2x16x16xi32>
    %102 = arith.select %100, %101, %91 : vector<2x16x16xi1>, vector<2x16x16xi32>
    %cst_42 = arith.constant dense<-2147483648> : vector<2x16xi32>
    %103 = vector.multi_reduction <maxsi>, %102, %cst_42 [2] : vector<2x16x16xi32> to vector<2x16xi32>
    %104 = vector.shape_cast %103 : vector<2x16xi32> to vector<2x16x1xi32>
    %c15_i32_43 = arith.constant 15 : i32
    %105 = vector.broadcast %c15_i32_43 : i32 to vector<2x16x1xi32>
    %106 = arith.andi %104, %105 : vector<2x16x1xi32>
    %c15_i32_44 = arith.constant 15 : i32
    %107 = vector.broadcast %c15_i32_44 : i32 to vector<2x16x1xi32>
    %108 = arith.subi %107, %106 : vector<2x16x1xi32>
    %109 = vector.broadcast %51 : vector<1x16x16xi32> to vector<2x16x16xi32>
    %110 = vector.broadcast %108 : vector<2x16x1xi32> to vector<2x16x16xi32>
    %111 = arith.cmpi eq, %109, %110 : vector<2x16x16xi32>
    %c-2147483648_i32_45 = arith.constant -2147483648 : i32
    %112 = vector.broadcast %c-2147483648_i32_45 : i32 to vector<2x16x16xi32>
    %113 = arith.select %111, %112, %102 : vector<2x16x16xi1>, vector<2x16x16xi32>
    %cst_46 = arith.constant dense<-2147483648> : vector<2x16xi32>
    %114 = vector.multi_reduction <maxsi>, %113, %cst_46 [2] : vector<2x16x16xi32> to vector<2x16xi32>
    %115 = vector.shape_cast %114 : vector<2x16xi32> to vector<2x16x1xi32>
    %c15_i32_47 = arith.constant 15 : i32
    %116 = vector.broadcast %c15_i32_47 : i32 to vector<2x16x1xi32>
    %117 = arith.andi %115, %116 : vector<2x16x1xi32>
    %c15_i32_48 = arith.constant 15 : i32
    %118 = vector.broadcast %c15_i32_48 : i32 to vector<2x16x1xi32>
    %119 = arith.subi %118, %117 : vector<2x16x1xi32>
    %120 = vector.broadcast %51 : vector<1x16x16xi32> to vector<2x16x16xi32>
    %121 = vector.broadcast %119 : vector<2x16x1xi32> to vector<2x16x16xi32>
    %122 = arith.cmpi eq, %120, %121 : vector<2x16x16xi32>
    %c-2147483648_i32_49 = arith.constant -2147483648 : i32
    %123 = vector.broadcast %c-2147483648_i32_49 : i32 to vector<2x16x16xi32>
    %124 = arith.select %122, %123, %113 : vector<2x16x16xi1>, vector<2x16x16xi32>
    %cst_50 = arith.constant dense<-2147483648> : vector<2x16xi32>
    %125 = vector.multi_reduction <maxsi>, %124, %cst_50 [2] : vector<2x16x16xi32> to vector<2x16xi32>
    %126 = vector.shape_cast %125 : vector<2x16xi32> to vector<2x16x1xi32>
    %c15_i32_51 = arith.constant 15 : i32
    %127 = vector.broadcast %c15_i32_51 : i32 to vector<2x16x1xi32>
    %128 = arith.andi %126, %127 : vector<2x16x1xi32>
    %c15_i32_52 = arith.constant 15 : i32
    %129 = vector.broadcast %c15_i32_52 : i32 to vector<2x16x1xi32>
    %130 = arith.subi %129, %128 : vector<2x16x1xi32>
    %131 = vector.broadcast %51 : vector<1x16x16xi32> to vector<2x16x16xi32>
    %132 = vector.broadcast %130 : vector<2x16x1xi32> to vector<2x16x16xi32>
    %133 = arith.cmpi eq, %131, %132 : vector<2x16x16xi32>
    %c-2147483648_i32_53 = arith.constant -2147483648 : i32
    %134 = vector.broadcast %c-2147483648_i32_53 : i32 to vector<2x16x16xi32>
    %135 = arith.select %133, %134, %124 : vector<2x16x16xi1>, vector<2x16x16xi32>
    %cst_54 = arith.constant dense<-2147483648> : vector<2x16xi32>
    %136 = vector.multi_reduction <maxsi>, %135, %cst_54 [2] : vector<2x16x16xi32> to vector<2x16xi32>
    %137 = vector.shape_cast %136 : vector<2x16xi32> to vector<2x16x1xi32>
    %c15_i32_55 = arith.constant 15 : i32
    %138 = vector.broadcast %c15_i32_55 : i32 to vector<2x16x1xi32>
    %139 = arith.andi %137, %138 : vector<2x16x1xi32>
    %c15_i32_56 = arith.constant 15 : i32
    %140 = vector.broadcast %c15_i32_56 : i32 to vector<2x16x1xi32>
    %141 = arith.subi %140, %139 : vector<2x16x1xi32>
    %142 = vector.broadcast %51 : vector<1x16x16xi32> to vector<2x16x16xi32>
    %143 = vector.broadcast %141 : vector<2x16x1xi32> to vector<2x16x16xi32>
    %144 = arith.cmpi eq, %142, %143 : vector<2x16x16xi32>
    %145 = tpu.concatenate %78, %89, %100, %111, %122, %133, %144 in 1 : vector<2x16x16xi1>, vector<2x16x16xi1>, vector<2x16x16xi1>, vector<2x16x16xi1>, vector<2x16x16xi1>, vector<2x16x16xi1>, vector<2x16x16xi1> -> vector<2x112x16xi1>
    %146 = arith.extui %145 : vector<2x112x16xi1> to vector<2x112x16xi32>
    %147 = arith.sitofp %146 : vector<2x112x16xi32> to vector<2x112x16xf32>
    %148 = arith.truncf %147 : vector<2x112x16xf32> to vector<2x112x16xbf16>
    %149 = arith.truncf %30 : vector<32x3xf32> to vector<32x3xbf16>
    %cst_57 = arith.constant dense<0.000000e+00> : vector<32x96xf32>
    %150 = tpu.matmul %149, %33, %cst_57 {dimension_numbers = #tpu.dot_dimension_numbers<[1], [0], [0], [1], [0, 0, 1, 1], [], []>} : vector<32x3xbf16>, vector<3x96xbf16>, vector<32x96xf32> -> vector<32x96xf32>
    %151 = vector.extract_strided_slice %150 {offsets = [0, 0], sizes = [32, 32], strides = [1, 1]} : vector<32x96xf32> to vector<32x32xf32>
    %152 = vector.broadcast %34 : vector<1x32xf32> to vector<32x32xf32>
    %153 = arith.addf %151, %152 : vector<32x32xf32>
    %154 = vector.extract_strided_slice %150 {offsets = [0, 32], sizes = [32, 32], strides = [1, 1]} : vector<32x96xf32> to vector<32x32xf32>
    %155 = vector.shape_cast %154 : vector<32x32xf32> to vector<2x16x32xf32>
    %156 = arith.truncf %155 : vector<2x16x32xf32> to vector<2x16x32xbf16>
    %157 = vector.extract_strided_slice %150 {offsets = [0, 64], sizes = [32, 32], strides = [1, 1]} : vector<32x96xf32> to vector<32x32xf32>
    %158 = vector.broadcast %39 : vector<1x32xf32> to vector<32x32xf32>
    %159 = arith.addf %157, %158 : vector<32x32xf32>
    "tpu.trace_start"() <{level = 10 : i32, message = "bqp,bpc->bqc"}> : () -> ()
    %cst_58 = arith.constant dense<0.000000e+00> : vector<2x112x32xf32>
    %160 = tpu.matmul %148, %156, %cst_58 {dimension_numbers = #tpu.dot_dimension_numbers<[2], [1], [1], [2], [0, 0, 0, 1, 1, 2], [0], [0]>} : vector<2x112x16xbf16>, vector<2x16x32xbf16>, vector<2x112x32xf32> -> vector<2x112x32xf32>
    "tpu.trace_stop"() : () -> ()
    %161 = vector.shape_cast %160 : vector<2x112x32xf32> to vector<2x7x16x32xf32>
    %162 = vector.shape_cast %153 : vector<32x32xf32> to vector<2x1x16x32xf32>
    %163 = vector.broadcast %162 : vector<2x1x16x32xf32> to vector<2x7x16x32xf32>
    %164 = arith.addf %161, %163 : vector<2x7x16x32xf32>
    %cst_59 = arith.constant 0.000000e+00 : f32
    %165 = vector.broadcast %cst_59 : f32 to vector<2x7x16x32xf32>
    %166 = arith.maximumf %164, %165 : vector<2x7x16x32xf32>
    %167 = vector.shape_cast %166 : vector<2x7x16x32xf32> to vector<224x32xf32>
    %168 = arith.truncf %167 : vector<224x32xf32> to vector<224x32xbf16>
    %cst_60 = arith.constant dense<0.000000e+00> : vector<224x32xf32>
    %169 = tpu.matmul %168, %35, %cst_60 {dimension_numbers = #tpu.dot_dimension_numbers<[1], [0], [0], [1], [0, 0, 1, 1], [], []>} : vector<224x32xbf16>, vector<32x32xbf16>, vector<224x32xf32> -> vector<224x32xf32>
    %170 = vector.broadcast %36 : vector<1x32xf32> to vector<224x32xf32>
    %171 = arith.addf %169, %170 : vector<224x32xf32>
    %cst_61 = arith.constant 0.000000e+00 : f32
    %172 = vector.broadcast %cst_61 : f32 to vector<224x32xf32>
    %173 = arith.maximumf %171, %172 : vector<224x32xf32>
    %174 = arith.truncf %173 : vector<224x32xf32> to vector<224x32xbf16>
    %cst_62 = arith.constant dense<0.000000e+00> : vector<224x32xf32>
    %175 = tpu.matmul %174, %37, %cst_62 {dimension_numbers = #tpu.dot_dimension_numbers<[1], [0], [0], [1], [0, 0, 1, 1], [], []>} : vector<224x32xbf16>, vector<32x32xbf16>, vector<224x32xf32> -> vector<224x32xf32>
    %176 = vector.broadcast %38 : vector<1x32xf32> to vector<224x32xf32>
    %177 = arith.addf %175, %176 : vector<224x32xf32>
    %cst_63 = arith.constant 0.000000e+00 : f32
    %178 = vector.broadcast %cst_63 : f32 to vector<224x32xf32>
    %179 = arith.maximumf %177, %178 : vector<224x32xf32>
    %180 = vector.shape_cast %179 : vector<224x32xf32> to vector<2x7x16x32xf32>
    %181 = vector.extract_strided_slice %180 {offsets = [0, 0, 0, 0], sizes = [2, 1, 16, 32], strides = [1, 1, 1, 1]} : vector<2x7x16x32xf32> to vector<2x1x16x32xf32>
    %182 = vector.shape_cast %181 : vector<2x1x16x32xf32> to vector<2x16x32xf32>
    %183 = vector.extract_strided_slice %180 {offsets = [0, 1, 0, 0], sizes = [2, 1, 16, 32], strides = [1, 1, 1, 1]} : vector<2x7x16x32xf32> to vector<2x1x16x32xf32>
    %184 = vector.shape_cast %183 : vector<2x1x16x32xf32> to vector<2x16x32xf32>
    %185 = arith.addf %182, %184 : vector<2x16x32xf32>
    %186 = vector.extract_strided_slice %180 {offsets = [0, 2, 0, 0], sizes = [2, 1, 16, 32], strides = [1, 1, 1, 1]} : vector<2x7x16x32xf32> to vector<2x1x16x32xf32>
    %187 = vector.shape_cast %186 : vector<2x1x16x32xf32> to vector<2x16x32xf32>
    %188 = arith.addf %185, %187 : vector<2x16x32xf32>
    %189 = vector.extract_strided_slice %180 {offsets = [0, 3, 0, 0], sizes = [2, 1, 16, 32], strides = [1, 1, 1, 1]} : vector<2x7x16x32xf32> to vector<2x1x16x32xf32>
    %190 = vector.shape_cast %189 : vector<2x1x16x32xf32> to vector<2x16x32xf32>
    %191 = arith.addf %188, %190 : vector<2x16x32xf32>
    %192 = vector.extract_strided_slice %180 {offsets = [0, 4, 0, 0], sizes = [2, 1, 16, 32], strides = [1, 1, 1, 1]} : vector<2x7x16x32xf32> to vector<2x1x16x32xf32>
    %193 = vector.shape_cast %192 : vector<2x1x16x32xf32> to vector<2x16x32xf32>
    %194 = arith.addf %191, %193 : vector<2x16x32xf32>
    %195 = vector.extract_strided_slice %180 {offsets = [0, 5, 0, 0], sizes = [2, 1, 16, 32], strides = [1, 1, 1, 1]} : vector<2x7x16x32xf32> to vector<2x1x16x32xf32>
    %196 = vector.shape_cast %195 : vector<2x1x16x32xf32> to vector<2x16x32xf32>
    %197 = arith.addf %194, %196 : vector<2x16x32xf32>
    %198 = vector.extract_strided_slice %180 {offsets = [0, 6, 0, 0], sizes = [2, 1, 16, 32], strides = [1, 1, 1, 1]} : vector<2x7x16x32xf32> to vector<2x1x16x32xf32>
    %199 = vector.shape_cast %198 : vector<2x1x16x32xf32> to vector<2x16x32xf32>
    %200 = arith.addf %197, %199 : vector<2x16x32xf32>
    %201 = vector.shape_cast %200 : vector<2x16x32xf32> to vector<32x32xf32>
    %cst_64 = arith.constant 0.142857149 : f32
    %202 = vector.broadcast %cst_64 : f32 to vector<32x32xf32>
    %203 = arith.mulf %201, %202 : vector<32x32xf32>
    %204 = arith.addf %159, %203 : vector<32x32xf32>
    %cst_65 = arith.constant 0.000000e+00 : f32
    %205 = vector.broadcast %cst_65 : f32 to vector<32x32xf32>
    %206 = arith.maximumf %204, %205 : vector<32x32xf32>
    %207 = vector.broadcast %21 : vector<32x1xf32> to vector<32x32xf32>
    %208 = arith.mulf %206, %207 : vector<32x32xf32>
    %209 = vector.shape_cast %208 : vector<32x32xf32> to vector<2x16x32xf32>
    %210 = vector.broadcast %17 : vector<2x16x1xf32> to vector<2x16x32xf32>
    %211 = arith.addf %209, %210 : vector<2x16x32xf32>
    %c0_66 = arith.constant 0 : index
    %c0_67 = arith.constant 0 : index
    %212 = vector.load %arg11[%c0_66, %c0_67] : memref<32x192xbf16, #tpu.memory_space<vmem>>, vector<32x192xbf16>
    %c0_68 = arith.constant 0 : index
    %c0_69 = arith.constant 0 : index
    %213 = vector.load %arg12[%c0_68, %c0_69] : memref<1x64xf32, #tpu.memory_space<vmem>>, vector<1x64xf32>
    %c0_70 = arith.constant 0 : index
    %c0_71 = arith.constant 0 : index
    %214 = vector.load %arg13[%c0_70, %c0_71] : memref<64x64xbf16, #tpu.memory_space<vmem>>, vector<64x64xbf16>
    %c0_72 = arith.constant 0 : index
    %c0_73 = arith.constant 0 : index
    %215 = vector.load %arg14[%c0_72, %c0_73] : memref<1x64xf32, #tpu.memory_space<vmem>>, vector<1x64xf32>
    %c0_74 = arith.constant 0 : index
    %c0_75 = arith.constant 0 : index
    %216 = vector.load %arg15[%c0_74, %c0_75] : memref<64x64xbf16, #tpu.memory_space<vmem>>, vector<64x64xbf16>
    %c0_76 = arith.constant 0 : index
    %c0_77 = arith.constant 0 : index
    %217 = vector.load %arg16[%c0_76, %c0_77] : memref<1x64xf32, #tpu.memory_space<vmem>>, vector<1x64xf32>
    %c0_78 = arith.constant 0 : index
    %c0_79 = arith.constant 0 : index
    %218 = vector.load %arg17[%c0_78, %c0_79] : memref<1x64xf32, #tpu.memory_space<vmem>>, vector<1x64xf32>
    %219 = arith.mulf %211, %211 : vector<2x16x32xf32>
    %cst_80 = arith.constant dense<0.000000e+00> : vector<2x16xf32>
    %220 = vector.multi_reduction <add>, %219, %cst_80 [2] : vector<2x16x32xf32> to vector<2x16xf32>
    %221 = vector.shape_cast %220 : vector<2x16xf32> to vector<2x16x1xf32>
    %cst_81 = arith.constant 1.000000e+00 : f32
    %222 = vector.broadcast %cst_81 : f32 to vector<2x16x1xf32>
    %cst_82 = arith.constant 2.000000e+00 : f32
    %223 = vector.broadcast %cst_82 : f32 to vector<2x16x32xf32>
    %224 = arith.mulf %223, %211 : vector<2x16x32xf32>
    %cst_83 = arith.constant 0.000000e+00 : f32
    %225 = vector.broadcast %cst_83 : f32 to vector<2x16x1xf32>
    %226 = arith.subf %225, %222 : vector<2x16x1xf32>
    %227 = tpu.concatenate %224, %226 in 2 : vector<2x16x32xf32>, vector<2x16x1xf32> -> vector<2x16x33xf32>
    %228 = tpu.concatenate %211, %221 in 2 : vector<2x16x32xf32>, vector<2x16x1xf32> -> vector<2x16x33xf32>
    "tpu.trace_start"() <{level = 10 : i32, message = "bic,bjc->bij"}> : () -> ()
    %cst_84 = arith.constant dense<0.000000e+00> : vector<2x16x16xf32>
    %229 = tpu.matmul %227, %228, %cst_84 {dimension_numbers = #tpu.dot_dimension_numbers<[2], [2], [1], [1], [0, 0, 0, 1, 1, 1], [0], [0]>} : vector<2x16x33xf32>, vector<2x16x33xf32>, vector<2x16x16xf32> -> vector<2x16x16xf32>
    "tpu.trace_stop"() : () -> ()
    %230 = tpu.iota {dimensions = array<i32: 2>} : vector<1x16x16xi32>
    %231 = tpu.iota {dimensions = array<i32: 1>} : vector<1x16x16xi32>
    %232 = tpu.bitcast %229 : vector<2x16x16xf32> -> vector<2x16x16xi32>
    %c0_i32_85 = arith.constant 0 : i32
    %233 = vector.broadcast %c0_i32_85 : i32 to vector<2x16x16xi32>
    %234 = arith.cmpi slt, %232, %233 : vector<2x16x16xi32>
    %c2147483647_i32_86 = arith.constant 2147483647 : i32
    %235 = vector.broadcast %c2147483647_i32_86 : i32 to vector<2x16x16xi32>
    %236 = arith.xori %232, %235 : vector<2x16x16xi32>
    %237 = arith.select %234, %236, %232 : vector<2x16x16xi1>, vector<2x16x16xi32>
    %c-16_i32_87 = arith.constant -16 : i32
    %238 = vector.broadcast %c-16_i32_87 : i32 to vector<2x16x16xi32>
    %239 = arith.andi %237, %238 : vector<2x16x16xi32>
    %c15_i32_88 = arith.constant 15 : i32
    %240 = vector.broadcast %c15_i32_88 : i32 to vector<1x16x16xi32>
    %241 = arith.subi %240, %230 : vector<1x16x16xi32>
    %242 = vector.broadcast %241 : vector<1x16x16xi32> to vector<2x16x16xi32>
    %243 = arith.ori %239, %242 : vector<2x16x16xi32>
    %244 = arith.cmpi eq, %230, %231 : vector<1x16x16xi32>
    %c-2147483648_i32_89 = arith.constant -2147483648 : i32
    %245 = vector.shape_cast %244 : vector<1x16x16xi1> to vector<1x16x16xi1>
    %246 = vector.broadcast %245 : vector<1x16x16xi1> to vector<2x16x16xi1>
    %247 = vector.broadcast %c-2147483648_i32_89 : i32 to vector<2x16x16xi32>
    %248 = arith.select %246, %247, %243 : vector<2x16x16xi1>, vector<2x16x16xi32>
    %cst_90 = arith.constant dense<-2147483648> : vector<2x16xi32>
    %249 = vector.multi_reduction <maxsi>, %248, %cst_90 [2] : vector<2x16x16xi32> to vector<2x16xi32>
    %250 = vector.shape_cast %249 : vector<2x16xi32> to vector<2x16x1xi32>
    %c15_i32_91 = arith.constant 15 : i32
    %251 = vector.broadcast %c15_i32_91 : i32 to vector<2x16x1xi32>
    %252 = arith.andi %250, %251 : vector<2x16x1xi32>
    %c15_i32_92 = arith.constant 15 : i32
    %253 = vector.broadcast %c15_i32_92 : i32 to vector<2x16x1xi32>
    %254 = arith.subi %253, %252 : vector<2x16x1xi32>
    %255 = vector.broadcast %230 : vector<1x16x16xi32> to vector<2x16x16xi32>
    %256 = vector.broadcast %254 : vector<2x16x1xi32> to vector<2x16x16xi32>
    %257 = arith.cmpi eq, %255, %256 : vector<2x16x16xi32>
    %c-2147483648_i32_93 = arith.constant -2147483648 : i32
    %258 = vector.broadcast %c-2147483648_i32_93 : i32 to vector<2x16x16xi32>
    %259 = arith.select %257, %258, %248 : vector<2x16x16xi1>, vector<2x16x16xi32>
    %cst_94 = arith.constant dense<-2147483648> : vector<2x16xi32>
    %260 = vector.multi_reduction <maxsi>, %259, %cst_94 [2] : vector<2x16x16xi32> to vector<2x16xi32>
    %261 = vector.shape_cast %260 : vector<2x16xi32> to vector<2x16x1xi32>
    %c15_i32_95 = arith.constant 15 : i32
    %262 = vector.broadcast %c15_i32_95 : i32 to vector<2x16x1xi32>
    %263 = arith.andi %261, %262 : vector<2x16x1xi32>
    %c15_i32_96 = arith.constant 15 : i32
    %264 = vector.broadcast %c15_i32_96 : i32 to vector<2x16x1xi32>
    %265 = arith.subi %264, %263 : vector<2x16x1xi32>
    %266 = vector.broadcast %230 : vector<1x16x16xi32> to vector<2x16x16xi32>
    %267 = vector.broadcast %265 : vector<2x16x1xi32> to vector<2x16x16xi32>
    %268 = arith.cmpi eq, %266, %267 : vector<2x16x16xi32>
    %c-2147483648_i32_97 = arith.constant -2147483648 : i32
    %269 = vector.broadcast %c-2147483648_i32_97 : i32 to vector<2x16x16xi32>
    %270 = arith.select %268, %269, %259 : vector<2x16x16xi1>, vector<2x16x16xi32>
    %cst_98 = arith.constant dense<-2147483648> : vector<2x16xi32>
    %271 = vector.multi_reduction <maxsi>, %270, %cst_98 [2] : vector<2x16x16xi32> to vector<2x16xi32>
    %272 = vector.shape_cast %271 : vector<2x16xi32> to vector<2x16x1xi32>
    %c15_i32_99 = arith.constant 15 : i32
    %273 = vector.broadcast %c15_i32_99 : i32 to vector<2x16x1xi32>
    %274 = arith.andi %272, %273 : vector<2x16x1xi32>
    %c15_i32_100 = arith.constant 15 : i32
    %275 = vector.broadcast %c15_i32_100 : i32 to vector<2x16x1xi32>
    %276 = arith.subi %275, %274 : vector<2x16x1xi32>
    %277 = vector.broadcast %230 : vector<1x16x16xi32> to vector<2x16x16xi32>
    %278 = vector.broadcast %276 : vector<2x16x1xi32> to vector<2x16x16xi32>
    %279 = arith.cmpi eq, %277, %278 : vector<2x16x16xi32>
    %c-2147483648_i32_101 = arith.constant -2147483648 : i32
    %280 = vector.broadcast %c-2147483648_i32_101 : i32 to vector<2x16x16xi32>
    %281 = arith.select %279, %280, %270 : vector<2x16x16xi1>, vector<2x16x16xi32>
    %cst_102 = arith.constant dense<-2147483648> : vector<2x16xi32>
    %282 = vector.multi_reduction <maxsi>, %281, %cst_102 [2] : vector<2x16x16xi32> to vector<2x16xi32>
    %283 = vector.shape_cast %282 : vector<2x16xi32> to vector<2x16x1xi32>
    %c15_i32_103 = arith.constant 15 : i32
    %284 = vector.broadcast %c15_i32_103 : i32 to vector<2x16x1xi32>
    %285 = arith.andi %283, %284 : vector<2x16x1xi32>
    %c15_i32_104 = arith.constant 15 : i32
    %286 = vector.broadcast %c15_i32_104 : i32 to vector<2x16x1xi32>
    %287 = arith.subi %286, %285 : vector<2x16x1xi32>
    %288 = vector.broadcast %230 : vector<1x16x16xi32> to vector<2x16x16xi32>
    %289 = vector.broadcast %287 : vector<2x16x1xi32> to vector<2x16x16xi32>
    %290 = arith.cmpi eq, %288, %289 : vector<2x16x16xi32>
    %c-2147483648_i32_105 = arith.constant -2147483648 : i32
    %291 = vector.broadcast %c-2147483648_i32_105 : i32 to vector<2x16x16xi32>
    %292 = arith.select %290, %291, %281 : vector<2x16x16xi1>, vector<2x16x16xi32>
    %cst_106 = arith.constant dense<-2147483648> : vector<2x16xi32>
    %293 = vector.multi_reduction <maxsi>, %292, %cst_106 [2] : vector<2x16x16xi32> to vector<2x16xi32>
    %294 = vector.shape_cast %293 : vector<2x16xi32> to vector<2x16x1xi32>
    %c15_i32_107 = arith.constant 15 : i32
    %295 = vector.broadcast %c15_i32_107 : i32 to vector<2x16x1xi32>
    %296 = arith.andi %294, %295 : vector<2x16x1xi32>
    %c15_i32_108 = arith.constant 15 : i32
    %297 = vector.broadcast %c15_i32_108 : i32 to vector<2x16x1xi32>
    %298 = arith.subi %297, %296 : vector<2x16x1xi32>
    %299 = vector.broadcast %230 : vector<1x16x16xi32> to vector<2x16x16xi32>
    %300 = vector.broadcast %298 : vector<2x16x1xi32> to vector<2x16x16xi32>
    %301 = arith.cmpi eq, %299, %300 : vector<2x16x16xi32>
    %c-2147483648_i32_109 = arith.constant -2147483648 : i32
    %302 = vector.broadcast %c-2147483648_i32_109 : i32 to vector<2x16x16xi32>
    %303 = arith.select %301, %302, %292 : vector<2x16x16xi1>, vector<2x16x16xi32>
    %cst_110 = arith.constant dense<-2147483648> : vector<2x16xi32>
    %304 = vector.multi_reduction <maxsi>, %303, %cst_110 [2] : vector<2x16x16xi32> to vector<2x16xi32>
    %305 = vector.shape_cast %304 : vector<2x16xi32> to vector<2x16x1xi32>
    %c15_i32_111 = arith.constant 15 : i32
    %306 = vector.broadcast %c15_i32_111 : i32 to vector<2x16x1xi32>
    %307 = arith.andi %305, %306 : vector<2x16x1xi32>
    %c15_i32_112 = arith.constant 15 : i32
    %308 = vector.broadcast %c15_i32_112 : i32 to vector<2x16x1xi32>
    %309 = arith.subi %308, %307 : vector<2x16x1xi32>
    %310 = vector.broadcast %230 : vector<1x16x16xi32> to vector<2x16x16xi32>
    %311 = vector.broadcast %309 : vector<2x16x1xi32> to vector<2x16x16xi32>
    %312 = arith.cmpi eq, %310, %311 : vector<2x16x16xi32>
    %c-2147483648_i32_113 = arith.constant -2147483648 : i32
    %313 = vector.broadcast %c-2147483648_i32_113 : i32 to vector<2x16x16xi32>
    %314 = arith.select %312, %313, %303 : vector<2x16x16xi1>, vector<2x16x16xi32>
    %cst_114 = arith.constant dense<-2147483648> : vector<2x16xi32>
    %315 = vector.multi_reduction <maxsi>, %314, %cst_114 [2] : vector<2x16x16xi32> to vector<2x16xi32>
    %316 = vector.shape_cast %315 : vector<2x16xi32> to vector<2x16x1xi32>
    %c15_i32_115 = arith.constant 15 : i32
    %317 = vector.broadcast %c15_i32_115 : i32 to vector<2x16x1xi32>
    %318 = arith.andi %316, %317 : vector<2x16x1xi32>
    %c15_i32_116 = arith.constant 15 : i32
    %319 = vector.broadcast %c15_i32_116 : i32 to vector<2x16x1xi32>
    %320 = arith.subi %319, %318 : vector<2x16x1xi32>
    %321 = vector.broadcast %230 : vector<1x16x16xi32> to vector<2x16x16xi32>
    %322 = vector.broadcast %320 : vector<2x16x1xi32> to vector<2x16x16xi32>
    %323 = arith.cmpi eq, %321, %322 : vector<2x16x16xi32>
    %324 = tpu.concatenate %257, %268, %279, %290, %301, %312, %323 in 1 : vector<2x16x16xi1>, vector<2x16x16xi1>, vector<2x16x16xi1>, vector<2x16x16xi1>, vector<2x16x16xi1>, vector<2x16x16xi1>, vector<2x16x16xi1> -> vector<2x112x16xi1>
    %325 = arith.extui %324 : vector<2x112x16xi1> to vector<2x112x16xi32>
    %326 = arith.sitofp %325 : vector<2x112x16xi32> to vector<2x112x16xf32>
    %327 = arith.truncf %326 : vector<2x112x16xf32> to vector<2x112x16xbf16>
    %328 = arith.truncf %208 : vector<32x32xf32> to vector<32x32xbf16>
    %cst_117 = arith.constant dense<0.000000e+00> : vector<32x192xf32>
    %329 = tpu.matmul %328, %212, %cst_117 {dimension_numbers = #tpu.dot_dimension_numbers<[1], [0], [0], [1], [0, 0, 1, 1], [], []>} : vector<32x32xbf16>, vector<32x192xbf16>, vector<32x192xf32> -> vector<32x192xf32>
    %330 = vector.extract_strided_slice %329 {offsets = [0, 0], sizes = [32, 64], strides = [1, 1]} : vector<32x192xf32> to vector<32x64xf32>
    %331 = vector.broadcast %213 : vector<1x64xf32> to vector<32x64xf32>
    %332 = arith.addf %330, %331 : vector<32x64xf32>
    %333 = vector.extract_strided_slice %329 {offsets = [0, 64], sizes = [32, 64], strides = [1, 1]} : vector<32x192xf32> to vector<32x64xf32>
    %334 = vector.shape_cast %333 : vector<32x64xf32> to vector<2x16x64xf32>
    %335 = arith.truncf %334 : vector<2x16x64xf32> to vector<2x16x64xbf16>
    %336 = vector.extract_strided_slice %329 {offsets = [0, 128], sizes = [32, 64], strides = [1, 1]} : vector<32x192xf32> to vector<32x64xf32>
    %337 = vector.broadcast %218 : vector<1x64xf32> to vector<32x64xf32>
    %338 = arith.addf %336, %337 : vector<32x64xf32>
    "tpu.trace_start"() <{level = 10 : i32, message = "bqp,bpc->bqc"}> : () -> ()
    %cst_118 = arith.constant dense<0.000000e+00> : vector<2x112x64xf32>
    %339 = tpu.matmul %327, %335, %cst_118 {dimension_numbers = #tpu.dot_dimension_numbers<[2], [1], [1], [2], [0, 0, 0, 1, 1, 2], [0], [0]>} : vector<2x112x16xbf16>, vector<2x16x64xbf16>, vector<2x112x64xf32> -> vector<2x112x64xf32>
    "tpu.trace_stop"() : () -> ()
    %340 = vector.shape_cast %339 : vector<2x112x64xf32> to vector<2x7x16x64xf32>
    %341 = vector.shape_cast %332 : vector<32x64xf32> to vector<2x1x16x64xf32>
    %342 = vector.broadcast %341 : vector<2x1x16x64xf32> to vector<2x7x16x64xf32>
    %343 = arith.addf %340, %342 : vector<2x7x16x64xf32>
    %cst_119 = arith.constant 0.000000e+00 : f32
    %344 = vector.broadcast %cst_119 : f32 to vector<2x7x16x64xf32>
    %345 = arith.maximumf %343, %344 : vector<2x7x16x64xf32>
    %346 = vector.shape_cast %345 : vector<2x7x16x64xf32> to vector<224x64xf32>
    %347 = arith.truncf %346 : vector<224x64xf32> to vector<224x64xbf16>
    %cst_120 = arith.constant dense<0.000000e+00> : vector<224x64xf32>
    %348 = tpu.matmul %347, %214, %cst_120 {dimension_numbers = #tpu.dot_dimension_numbers<[1], [0], [0], [1], [0, 0, 1, 1], [], []>} : vector<224x64xbf16>, vector<64x64xbf16>, vector<224x64xf32> -> vector<224x64xf32>
    %349 = vector.broadcast %215 : vector<1x64xf32> to vector<224x64xf32>
    %350 = arith.addf %348, %349 : vector<224x64xf32>
    %cst_121 = arith.constant 0.000000e+00 : f32
    %351 = vector.broadcast %cst_121 : f32 to vector<224x64xf32>
    %352 = arith.maximumf %350, %351 : vector<224x64xf32>
    %353 = arith.truncf %352 : vector<224x64xf32> to vector<224x64xbf16>
    %cst_122 = arith.constant dense<0.000000e+00> : vector<224x64xf32>
    %354 = tpu.matmul %353, %216, %cst_122 {dimension_numbers = #tpu.dot_dimension_numbers<[1], [0], [0], [1], [0, 0, 1, 1], [], []>} : vector<224x64xbf16>, vector<64x64xbf16>, vector<224x64xf32> -> vector<224x64xf32>
    %355 = vector.broadcast %217 : vector<1x64xf32> to vector<224x64xf32>
    %356 = arith.addf %354, %355 : vector<224x64xf32>
    %cst_123 = arith.constant 0.000000e+00 : f32
    %357 = vector.broadcast %cst_123 : f32 to vector<224x64xf32>
    %358 = arith.maximumf %356, %357 : vector<224x64xf32>
    %359 = vector.shape_cast %358 : vector<224x64xf32> to vector<2x7x16x64xf32>
    %360 = vector.extract_strided_slice %359 {offsets = [0, 0, 0, 0], sizes = [2, 1, 16, 64], strides = [1, 1, 1, 1]} : vector<2x7x16x64xf32> to vector<2x1x16x64xf32>
    %361 = vector.shape_cast %360 : vector<2x1x16x64xf32> to vector<2x16x64xf32>
    %362 = vector.extract_strided_slice %359 {offsets = [0, 1, 0, 0], sizes = [2, 1, 16, 64], strides = [1, 1, 1, 1]} : vector<2x7x16x64xf32> to vector<2x1x16x64xf32>
    %363 = vector.shape_cast %362 : vector<2x1x16x64xf32> to vector<2x16x64xf32>
    %364 = arith.addf %361, %363 : vector<2x16x64xf32>
    %365 = vector.extract_strided_slice %359 {offsets = [0, 2, 0, 0], sizes = [2, 1, 16, 64], strides = [1, 1, 1, 1]} : vector<2x7x16x64xf32> to vector<2x1x16x64xf32>
    %366 = vector.shape_cast %365 : vector<2x1x16x64xf32> to vector<2x16x64xf32>
    %367 = arith.addf %364, %366 : vector<2x16x64xf32>
    %368 = vector.extract_strided_slice %359 {offsets = [0, 3, 0, 0], sizes = [2, 1, 16, 64], strides = [1, 1, 1, 1]} : vector<2x7x16x64xf32> to vector<2x1x16x64xf32>
    %369 = vector.shape_cast %368 : vector<2x1x16x64xf32> to vector<2x16x64xf32>
    %370 = arith.addf %367, %369 : vector<2x16x64xf32>
    %371 = vector.extract_strided_slice %359 {offsets = [0, 4, 0, 0], sizes = [2, 1, 16, 64], strides = [1, 1, 1, 1]} : vector<2x7x16x64xf32> to vector<2x1x16x64xf32>
    %372 = vector.shape_cast %371 : vector<2x1x16x64xf32> to vector<2x16x64xf32>
    %373 = arith.addf %370, %372 : vector<2x16x64xf32>
    %374 = vector.extract_strided_slice %359 {offsets = [0, 5, 0, 0], sizes = [2, 1, 16, 64], strides = [1, 1, 1, 1]} : vector<2x7x16x64xf32> to vector<2x1x16x64xf32>
    %375 = vector.shape_cast %374 : vector<2x1x16x64xf32> to vector<2x16x64xf32>
    %376 = arith.addf %373, %375 : vector<2x16x64xf32>
    %377 = vector.extract_strided_slice %359 {offsets = [0, 6, 0, 0], sizes = [2, 1, 16, 64], strides = [1, 1, 1, 1]} : vector<2x7x16x64xf32> to vector<2x1x16x64xf32>
    %378 = vector.shape_cast %377 : vector<2x1x16x64xf32> to vector<2x16x64xf32>
    %379 = arith.addf %376, %378 : vector<2x16x64xf32>
    %380 = vector.shape_cast %379 : vector<2x16x64xf32> to vector<32x64xf32>
    %cst_124 = arith.constant 0.142857149 : f32
    %381 = vector.broadcast %cst_124 : f32 to vector<32x64xf32>
    %382 = arith.mulf %380, %381 : vector<32x64xf32>
    %383 = arith.addf %338, %382 : vector<32x64xf32>
    %cst_125 = arith.constant 0.000000e+00 : f32
    %384 = vector.broadcast %cst_125 : f32 to vector<32x64xf32>
    %385 = arith.maximumf %383, %384 : vector<32x64xf32>
    %386 = vector.broadcast %21 : vector<32x1xf32> to vector<32x64xf32>
    %387 = arith.mulf %385, %386 : vector<32x64xf32>
    %c0_126 = arith.constant 0 : index
    %c0_127 = arith.constant 0 : index
    %388 = vector.load %arg18[%c0_126, %c0_127] : memref<96x128xbf16, #tpu.memory_space<vmem>>, vector<96x128xbf16>
    %389 = arith.truncf %208 : vector<32x32xf32> to vector<32x32xbf16>
    %390 = vector.extract_strided_slice %388 {offsets = [0, 0], sizes = [32, 128], strides = [1, 1]} : vector<96x128xbf16> to vector<32x128xbf16>
    %cst_128 = arith.constant dense<0.000000e+00> : vector<32x128xf32>
    %391 = tpu.matmul %389, %390, %cst_128 {dimension_numbers = #tpu.dot_dimension_numbers<[1], [0], [0], [1], [0, 0, 1, 1], [], []>} : vector<32x32xbf16>, vector<32x128xbf16>, vector<32x128xf32> -> vector<32x128xf32>
    %392 = arith.truncf %387 : vector<32x64xf32> to vector<32x64xbf16>
    %393 = vector.extract_strided_slice %388 {offsets = [32, 0], sizes = [64, 128], strides = [1, 1]} : vector<96x128xbf16> to vector<64x128xbf16>
    %cst_129 = arith.constant dense<0.000000e+00> : vector<32x128xf32>
    %394 = tpu.matmul %392, %393, %cst_129 {dimension_numbers = #tpu.dot_dimension_numbers<[1], [0], [0], [1], [0, 0, 1, 1], [], []>} : vector<32x64xbf16>, vector<64x128xbf16>, vector<32x128xf32> -> vector<32x128xf32>
    %395 = arith.addf %391, %394 : vector<32x128xf32>
    %c0_130 = arith.constant 0 : index
    %c0_131 = arith.constant 0 : index
    %396 = vector.load %arg19[%c0_130, %c0_131] : memref<1x128xf32, #tpu.memory_space<vmem>>, vector<1x128xf32>
    %397 = vector.broadcast %396 : vector<1x128xf32> to vector<32x128xf32>
    %398 = arith.addf %395, %397 : vector<32x128xf32>
    %cst_132 = arith.constant 0.000000e+00 : f32
    %399 = vector.broadcast %cst_132 : f32 to vector<32x128xf32>
    %400 = arith.maximumf %398, %399 : vector<32x128xf32>
    %401 = vector.broadcast %21 : vector<32x1xf32> to vector<32x128xf32>
    %402 = arith.mulf %400, %401 : vector<32x128xf32>
    %403 = vector.shape_cast %402 : vector<32x128xf32> to vector<2x16x128xf32>
    %cst_133 = arith.constant dense<0.000000e+00> : vector<2x128xf32>
    %404 = vector.multi_reduction <add>, %403, %cst_133 [1] : vector<2x16x128xf32> to vector<2x128xf32>
    %405 = vector.broadcast %20 : vector<2x1xf32> to vector<2x128xf32>
    %406 = arith.divf %404, %405 : vector<2x128xf32>
    %407 = vector.shape_cast %406 : vector<2x128xf32> to vector<1x2x128xf32>
    %c0_134 = arith.constant 0 : index
    %c0_135 = arith.constant 0 : index
    %c0_136 = arith.constant 0 : index
    %408 = vector.load %arg20[%c0_134, %c0_135, %c0_136] : memref<1x2x128xf32, #tpu.memory_space<vmem>>, vector<1x2x128xf32>
    tpu.vector_store %arg20[%c0_134, %c0_135, %c0_136], %407 {strides = array<i32>} : memref<1x2x128xf32, #tpu.memory_space<vmem>>, vector<1x2x128xf32>,
    return
  }
  func.func @transform_0(%arg0: i32) -> (i32, i32, i32) {
    %c0_i32 = arith.constant 0 : i32
    %c0_i32_0 = arith.constant 0 : i32
    %c0_i32_1 = arith.constant 0 : i32
    return %arg0, %c0_i32, %c0_i32_0 : i32, i32, i32
  }
  func.func @transform_1(%arg0: i32) -> (i32, i32) {
    %c0_i32 = arith.constant 0 : i32
    %c0_i32_0 = arith.constant 0 : i32
    %c0_i32_1 = arith.constant 0 : i32
    return %c0_i32, %c0_i32_0 : i32, i32
  }
  func.func @transform_2(%arg0: i32) -> (i32, i32) {
    %c0_i32 = arith.constant 0 : i32
    %c0_i32_0 = arith.constant 0 : i32
    %c0_i32_1 = arith.constant 0 : i32
    return %c0_i32, %c0_i32_0 : i32, i32
  }
  func.func @transform_3(%arg0: i32) -> (i32, i32) {
    %c0_i32 = arith.constant 0 : i32
    %c0_i32_0 = arith.constant 0 : i32
    %c0_i32_1 = arith.constant 0 : i32
    return %c0_i32, %c0_i32_0 : i32, i32
  }
  func.func @transform_4(%arg0: i32) -> (i32, i32) {
    %c0_i32 = arith.constant 0 : i32
    %c0_i32_0 = arith.constant 0 : i32
    %c0_i32_1 = arith.constant 0 : i32
    return %c0_i32, %c0_i32_0 : i32, i32
  }
  func.func @transform_5(%arg0: i32) -> (i32, i32) {
    %c0_i32 = arith.constant 0 : i32
    %c0_i32_0 = arith.constant 0 : i32
    %c0_i32_1 = arith.constant 0 : i32
    return %c0_i32, %c0_i32_0 : i32, i32
  }
  func.func @transform_6(%arg0: i32) -> (i32, i32) {
    %c0_i32 = arith.constant 0 : i32
    %c0_i32_0 = arith.constant 0 : i32
    %c0_i32_1 = arith.constant 0 : i32
    return %c0_i32, %c0_i32_0 : i32, i32
  }
  func.func @transform_7(%arg0: i32) -> (i32, i32) {
    %c0_i32 = arith.constant 0 : i32
    %c0_i32_0 = arith.constant 0 : i32
    %c0_i32_1 = arith.constant 0 : i32
    return %c0_i32, %c0_i32_0 : i32, i32
  }
  func.func @transform_8(%arg0: i32) -> (i32, i32) {
    %c0_i32 = arith.constant 0 : i32
    %c0_i32_0 = arith.constant 0 : i32
    %c0_i32_1 = arith.constant 0 : i32
    return %c0_i32, %c0_i32_0 : i32, i32
  }
  func.func @transform_9(%arg0: i32) -> (i32, i32) {
    %c0_i32 = arith.constant 0 : i32
    %c0_i32_0 = arith.constant 0 : i32
    %c0_i32_1 = arith.constant 0 : i32
    return %c0_i32, %c0_i32_0 : i32, i32
  }
  func.func @transform_10(%arg0: i32) -> (i32, i32) {
    %c0_i32 = arith.constant 0 : i32
    %c0_i32_0 = arith.constant 0 : i32
    %c0_i32_1 = arith.constant 0 : i32
    return %c0_i32, %c0_i32_0 : i32, i32
  }
  func.func @transform_11(%arg0: i32) -> (i32, i32) {
    %c0_i32 = arith.constant 0 : i32
    %c0_i32_0 = arith.constant 0 : i32
    %c0_i32_1 = arith.constant 0 : i32
    return %c0_i32, %c0_i32_0 : i32, i32
  }
  func.func @transform_12(%arg0: i32) -> (i32, i32) {
    %c0_i32 = arith.constant 0 : i32
    %c0_i32_0 = arith.constant 0 : i32
    %c0_i32_1 = arith.constant 0 : i32
    return %c0_i32, %c0_i32_0 : i32, i32
  }
  func.func @transform_13(%arg0: i32) -> (i32, i32) {
    %c0_i32 = arith.constant 0 : i32
    %c0_i32_0 = arith.constant 0 : i32
    %c0_i32_1 = arith.constant 0 : i32
    return %c0_i32, %c0_i32_0 : i32, i32
  }
  func.func @transform_14(%arg0: i32) -> (i32, i32) {
    %c0_i32 = arith.constant 0 : i32
    %c0_i32_0 = arith.constant 0 : i32
    %c0_i32_1 = arith.constant 0 : i32
    return %c0_i32, %c0_i32_0 : i32, i32
  }
  func.func @transform_15(%arg0: i32) -> (i32, i32) {
    %c0_i32 = arith.constant 0 : i32
    %c0_i32_0 = arith.constant 0 : i32
    %c0_i32_1 = arith.constant 0 : i32
    return %c0_i32, %c0_i32_0 : i32, i32
  }
  func.func @transform_16(%arg0: i32) -> (i32, i32) {
    %c0_i32 = arith.constant 0 : i32
    %c0_i32_0 = arith.constant 0 : i32
    %c0_i32_1 = arith.constant 0 : i32
    return %c0_i32, %c0_i32_0 : i32, i32
  }
  func.func @transform_17(%arg0: i32) -> (i32, i32) {
    %c0_i32 = arith.constant 0 : i32
    %c0_i32_0 = arith.constant 0 : i32
    %c0_i32_1 = arith.constant 0 : i32
    return %c0_i32, %c0_i32_0 : i32, i32
  }
  func.func @transform_18(%arg0: i32) -> (i32, i32) {
    %c0_i32 = arith.constant 0 : i32
    %c0_i32_0 = arith.constant 0 : i32
    %c0_i32_1 = arith.constant 0 : i32
    return %c0_i32, %c0_i32_0 : i32, i32
  }
  func.func @transform_19(%arg0: i32) -> (i32, i32, i32) {
    %c0_i32 = arith.constant 0 : i32
    %c0_i32_0 = arith.constant 0 : i32
    %c0_i32_1 = arith.constant 0 : i32
    return %arg0, %c0_i32, %c0_i32_0 : i32, i32, i32
  }
}

</mosaic_0001>

<llo_original>
// kernel: tpu_custom_call.1
$region0: #{tpu_custom_call.1}
  #allocation0 [shape = 'u32[]', space=smem, size = 0x4, offset = 0x4, fixed_abs, tag = 'smem constant byte address 0x4 - core index']
  #allocation1 [shape = 'u32[144,128]{1,0:T(1,128)}', space=vmem, size = 0x12000, scoped, tag = 'internal scratch']
  %s0 = inlined_call_operand.vmem [shape: f32[2,16,6], index: 0, kind: input, shape index: {}]
  %s1 = inlined_call_operand.hbm [shape: f32[1,3], index: 1, kind: input, shape index: {}]
  %s2 = inlined_call_operand.hbm [shape: f32[1,3], index: 2, kind: input, shape index: {}]
  %s3 = inlined_call_operand.hbm [shape: bf16[3,96], index: 3, kind: input, shape index: {}]
  %s4 = inlined_call_operand.hbm [shape: f32[1,32], index: 4, kind: input, shape index: {}]
  %s5 = inlined_call_operand.vmem [shape: bf16[32,32], index: 5, kind: input, shape index: {}]
  %s6 = inlined_call_operand.hbm [shape: f32[1,32], index: 6, kind: input, shape index: {}]
  %s7 = inlined_call_operand.hbm [shape: bf16[32,32], index: 7, kind: input, shape index: {}]
  %s8 = inlined_call_operand.hbm [shape: f32[1,32], index: 8, kind: input, shape index: {}]
  %s9 = inlined_call_operand.hbm [shape: f32[1,32], index: 9, kind: input, shape index: {}]
  %s10 = inlined_call_operand.vmem [shape: bf16[32,192], index: 10, kind: input, shape index: {}]
  %s11 = inlined_call_operand.hbm [shape: f32[1,64], index: 11, kind: input, shape index: {}]
  %s12 = inlined_call_operand.hbm [shape: bf16[64,64], index: 12, kind: input, shape index: {}]
  %s13 = inlined_call_operand.hbm [shape: f32[1,64], index: 13, kind: input, shape index: {}]
  %s14 = inlined_call_operand.hbm [shape: bf16[64,64], index: 14, kind: input, shape index: {}]
  %s15 = inlined_call_operand.vmem [shape: f32[1,64], index: 15, kind: input, shape index: {}]
  %s16 = inlined_call_operand.vmem [shape: f32[1,64], index: 16, kind: input, shape index: {}]
  %s17 = inlined_call_operand.vmem [shape: bf16[96,128], index: 17, kind: input, shape index: {}]
  %s18 = inlined_call_operand.vmem [shape: f32[1,128], index: 18, kind: input, shape index: {}]
  %s19 = inlined_call_operand.hbm [shape: f32[1,2,128], index: 19, kind: output, shape index: {}]
  %s20 = sld [smem:[#allocation0]]
  $region134: #{tpu_custom_call.1} parent=0
    _
  %s22 = ssub.s32 1, %s20
  %s23 = scalar_select 0, %s22, %s20
  $region1: #{tpu_custom_call.1} parent=0
    #allocation2 [shape = 'u8[512]{0}', space=vmem, size = 0x400, scoped, tag = 'input window, operand 1, single buffered']
    #allocation3 [shape = 's32[1]{0}', space=sflag, size = 0x4, scoped, tag = 'scoped memory for tpu_custom_call.1']
    #allocation4 [shape = 's32[1]{0}', space=sflag, size = 0x4, scoped, tag = 'scoped memory for tpu_custom_call.1']
    #allocation5 [shape = 'u8[512]{0}', space=vmem, size = 0x400, scoped, tag = 'input window, operand 2, single buffered']
    #allocation6 [shape = 's32[1]{0}', space=sflag, size = 0x4, scoped, tag = 'scoped memory for tpu_custom_call.1']
    #allocation7 [shape = 'u8[1024]{0}', space=vmem, size = 0x400, scoped, tag = 'input window, operand 3, single buffered']
    #allocation8 [shape = 'u8[512]{0}', space=vmem, size = 0x400, scoped, tag = 'input window, operand 4, single buffered']
    #allocation9 [shape = 's32[1]{0}', space=sflag, size = 0x4, scoped, tag = 'scoped memory for tpu_custom_call.1']
    #allocation10 [shape = 'u8[512]{0}', space=vmem, size = 0x400, scoped, tag = 'input window, operand 6, single buffered']
    #allocation11 [shape = 'u8[8192]{0}', space=vmem, size = 0x2000, scoped, tag = 'input window, operand 7, single buffered']
    #allocation12 [shape = 's32[1]{0}', space=sflag, size = 0x4, scoped, tag = 'scoped memory for tpu_custom_call.1']
    #allocation13 [shape = 'u8[512]{0}', space=vmem, size = 0x400, scoped, tag = 'input window, operand 8, single buffered']
    #allocation14 [shape = 'u8[512]{0}', space=vmem, size = 0x400, scoped, tag = 'input window, operand 9, single buffered']
    #allocation15 [shape = 's32[1]{0}', space=sflag, size = 0x4, scoped, tag = 'scoped memory for tpu_custom_call.1']
    #allocation16 [shape = 'u8[512]{0}', space=vmem, size = 0x400, scoped, tag = 'input window, operand 11, single buffered']
    #allocation17 [shape = 'u8[16384]{0}', space=vmem, size = 0x4000, scoped, tag = 'input window, operand 12, single buffered']
    #allocation18 [shape = 's32[1]{0}', space=sflag, size = 0x4, scoped, tag = 'scoped memory for tpu_custom_call.1']
    #allocation19 [shape = 'u8[512]{0}', space=vmem, size = 0x400, scoped, tag = 'input window, operand 13, single buffered']
    #allocation20 [shape = 'u8[16384]{0}', space=vmem, size = 0x4000, scoped, tag = 'input window, operand 14, single buffered']
    #allocation21 [shape = 's32[1]{0}', space=sflag, size = 0x4, scoped, tag = 'scoped memory for tpu_custom_call.1']
    #allocation22 [shape = 'u8[1024]{0}', space=vmem, size = 0x400, scoped, tag = 'output window, operand 0, single buffered']
    %24 = vsyncpa [#allocation3], 0
    %25 = vsyncpa [#allocation6], 0
    %26 = vsyncpa [#allocation9], 0
    %27 = vsyncpa [#allocation12], 0
    %28 = vsyncpa [#allocation15], 0
    %29 = vsyncpa [#allocation18], 0
    %30 = vsyncpa [#allocation21], 0
    %31 = vsyncpa [#allocation4], 0
    // Predicated region
    $region2: #{tpu_custom_call.1} parent=1 // pred_check
      _
    $region3: #{tpu_custom_call.1} parent=1 // pred_check_branch
      %33 = sbr.rel (0) target = $region5
    $region4: #{tpu_custom_call.1} parent=1 // pred_region
      _
    $region5: #{tpu_custom_call.1} parent=1 // pred_fallthru
      _
    // Predicated region
    $region6: #{tpu_custom_call.1} parent=1 // pred_check
      _
    $region7: #{tpu_custom_call.1} parent=1 // pred_check_branch
      %35 = sbr.rel (0) target = $region9
    $region8: #{tpu_custom_call.1} parent=1 // pred_region
      %s37 = ssub.s32 16, 16
      %38 = vsyncadd [#allocation3], %s37
      %s40 = sshll.u32 [#allocation2], 4
      %s41 = int_to_ptr.vmem [resolvable:$true] %s40
      %43 = dma.hbm_to_vmem [thread:$0]  %s1, 16, %s41, [#allocation3]
    $region9: #{tpu_custom_call.1} parent=1 // pred_fallthru
      _
    // Predicated region
    $region10: #{tpu_custom_call.1} parent=1 // pred_check
      _
    $region11: #{tpu_custom_call.1} parent=1 // pred_check_branch
      %45 = sbr.rel (0) target = $region13
    $region12: #{tpu_custom_call.1} parent=1 // pred_region
      %s47 = ssub.s32 16, 16
      %48 = vsyncadd [#allocation6], %s47
      %s50 = sshll.u32 [#allocation5], 4
      %s51 = int_to_ptr.vmem [resolvable:$true] %s50
      %53 = dma.hbm_to_vmem [thread:$0]  %s2, 16, %s51, [#allocation6]
    $region13: #{tpu_custom_call.1} parent=1 // pred_fallthru
      _
    // Predicated region
    $region14: #{tpu_custom_call.1} parent=1 // pred_check
      _
    $region15: #{tpu_custom_call.1} parent=1 // pred_check_branch
      %55 = sbr.rel (0) target = $region17
    $region16: #{tpu_custom_call.1} parent=1 // pred_region
      %s57 = ssub.s32 32, 32
      %58 = vsyncadd [#allocation6], %s57
      %s60 = sshll.u32 [#allocation7], 4
      %s61 = int_to_ptr.vmem [resolvable:$true] %s60
      %63 = dma.hbm_to_vmem [thread:$0]  %s3, 32, %s61, [#allocation6]
    $region17: #{tpu_custom_call.1} parent=1 // pred_fallthru
      _
    // Predicated region
    $region18: #{tpu_custom_call.1} parent=1 // pred_check
      _
    $region19: #{tpu_custom_call.1} parent=1 // pred_check_branch
      %65 = sbr.rel (0) target = $region21
    $region20: #{tpu_custom_call.1} parent=1 // pred_region
      %s67 = ssub.s32 16, 16
      %68 = vsyncadd [#allocation9], %s67
      %s70 = sshll.u32 [#allocation8], 4
      %s71 = int_to_ptr.vmem [resolvable:$true] %s70
      %73 = dma.hbm_to_vmem [thread:$0]  %s4, 16, %s71, [#allocation9]
    $region21: #{tpu_custom_call.1} parent=1 // pred_fallthru
      _
    // Predicated region
    $region22: #{tpu_custom_call.1} parent=1 // pred_check
      _
    $region23: #{tpu_custom_call.1} parent=1 // pred_check_branch
      %75 = sbr.rel (0) target = $region25
    $region24: #{tpu_custom_call.1} parent=1 // pred_region
      _
    $region25: #{tpu_custom_call.1} parent=1 // pred_fallthru
      _
    // Predicated region
    $region26: #{tpu_custom_call.1} parent=1 // pred_check
      _
    $region27: #{tpu_custom_call.1} parent=1 // pred_check_branch
      %77 = sbr.rel (0) target = $region29
    $region28: #{tpu_custom_call.1} parent=1 // pred_region
      %s79 = ssub.s32 16, 16
      %80 = vsyncadd [#allocation9], %s79
      %s82 = sshll.u32 [#allocation10], 4
      %s83 = int_to_ptr.vmem [resolvable:$true] %s82
      %85 = dma.hbm_to_vmem [thread:$0]  %s6, 16, %s83, [#allocation9]
    $region29: #{tpu_custom_call.1} parent=1 // pred_fallthru
      _
    // Predicated region
    $region30: #{tpu_custom_call.1} parent=1 // pred_check
      _
    $region31: #{tpu_custom_call.1} parent=1 // pred_check_branch
      %87 = sbr.rel (0) target = $region33
    $region32: #{tpu_custom_call.1} parent=1 // pred_region
      %s89 = ssub.s32 256, 256
      %90 = vsyncadd [#allocation12], %s89
      %s91 = sshll.u32 [#allocation11], 4
      %s92 = int_to_ptr.vmem [resolvable:$true] %s91
      %97 = dma.hbm_to_vmem [thread:$0]  %s7, 256, %s92, [#allocation12], 64, 64, 4
    $region33: #{tpu_custom_call.1} parent=1 // pred_fallthru
      _
    // Predicated region
    $region34: #{tpu_custom_call.1} parent=1 // pred_check
      _
    $region35: #{tpu_custom_call.1} parent=1 // pred_check_branch
      %99 = sbr.rel (0) target = $region37
    $region36: #{tpu_custom_call.1} parent=1 // pred_region
      %s101 = ssub.s32 16, 16
      %102 = vsyncadd [#allocation12], %s101
      %s104 = sshll.u32 [#allocation13], 4
      %s105 = int_to_ptr.vmem [resolvable:$true] %s104
      %107 = dma.hbm_to_vmem [thread:$0]  %s8, 16, %s105, [#allocation12]
    $region37: #{tpu_custom_call.1} parent=1 // pred_fallthru
      _
    // Predicated region
    $region38: #{tpu_custom_call.1} parent=1 // pred_check
      _
    $region39: #{tpu_custom_call.1} parent=1 // pred_check_branch
      %109 = sbr.rel (0) target = $region41
    $region40: #{tpu_custom_call.1} parent=1 // pred_region
      %s111 = ssub.s32 16, 16
      %112 = vsyncadd [#allocation15], %s111
      %s114 = sshll.u32 [#allocation14], 4
      %s115 = int_to_ptr.vmem [resolvable:$true] %s114
      %117 = dma.hbm_to_vmem [thread:$0]  %s9, 16, %s115, [#allocation15]
    $region41: #{tpu_custom_call.1} parent=1 // pred_fallthru
      _
    // Predicated region
    $region42: #{tpu_custom_call.1} parent=1 // pred_check
      _
    $region43: #{tpu_custom_call.1} parent=1 // pred_check_branch
      %119 = sbr.rel (0) target = $region45
    $region44: #{tpu_custom_call.1} parent=1 // pred_region
      _
    $region45: #{tpu_custom_call.1} parent=1 // pred_fallthru
      _
    // Predicated region
    $region46: #{tpu_custom_call.1} parent=1 // pred_check
      _
    $region47: #{tpu_custom_call.1} parent=1 // pred_check_branch
      %121 = sbr.rel (0) target = $region49
    $region48: #{tpu_custom_call.1} parent=1 // pred_region
      %s123 = ssub.s32 16, 16
      %124 = vsyncadd [#allocation15], %s123
      %s126 = sshll.u32 [#allocation16], 4
      %s127 = int_to_ptr.vmem [resolvable:$true] %s126
      %129 = dma.hbm_to_vmem [thread:$0]  %s11, 16, %s127, [#allocation15]
    $region49: #{tpu_custom_call.1} parent=1 // pred_fallthru
      _
    // Predicated region
    $region50: #{tpu_custom_call.1} parent=1 // pred_check
      _
    $region51: #{tpu_custom_call.1} parent=1 // pred_check_branch
      %131 = sbr.rel (0) target = $region53
    $region52: #{tpu_custom_call.1} parent=1 // pred_region
      %s133 = ssub.s32 512, 512
      %134 = vsyncadd [#allocation18], %s133
      %s135 = sshll.u32 [#allocation17], 4
      %s136 = int_to_ptr.vmem [resolvable:$true] %s135
      %141 = dma.hbm_to_vmem [thread:$0]  %s12, 512, %s136, [#allocation18], 64, 64, 4
    $region53: #{tpu_custom_call.1} parent=1 // pred_fallthru
      _
    // Predicated region
    $region54: #{tpu_custom_call.1} parent=1 // pred_check
      _
    $region55: #{tpu_custom_call.1} parent=1 // pred_check_branch
      %143 = sbr.rel (0) target = $region57
    $region56: #{tpu_custom_call.1} parent=1 // pred_region
      %s145 = ssub.s32 16, 16
      %146 = vsyncadd [#allocation18], %s145
      %s148 = sshll.u32 [#allocation19], 4
      %s149 = int_to_ptr.vmem [resolvable:$true] %s148
      %151 = dma.hbm_to_vmem [thread:$0]  %s13, 16, %s149, [#allocation18]
    $region57: #{tpu_custom_call.1} parent=1 // pred_fallthru
      _
    // Predicated region
    $region58: #{tpu_custom_call.1} parent=1 // pred_check
      _
    $region59: #{tpu_custom_call.1} parent=1 // pred_check_branch
      %153 = sbr.rel (0) target = $region61
    $region60: #{tpu_custom_call.1} parent=1 // pred_region
      %s155 = ssub.s32 512, 512
      %156 = vsyncadd [#allocation21], %s155
      %s157 = sshll.u32 [#allocation20], 4
      %s158 = int_to_ptr.vmem [resolvable:$true] %s157
      %163 = dma.hbm_to_vmem [thread:$0]  %s14, 512, %s158, [#allocation21], 64, 64, 4
    $region61: #{tpu_custom_call.1} parent=1 // pred_fallthru
      _
    // Predicated region
    $region62: #{tpu_custom_call.1} parent=1 // pred_check
      _
    $region63: #{tpu_custom_call.1} parent=1 // pred_check_branch
      %165 = sbr.rel (0) target = $region65
    $region64: #{tpu_custom_call.1} parent=1 // pred_region
      _
    $region65: #{tpu_custom_call.1} parent=1 // pred_fallthru
      _
    // Predicated region
    $region66: #{tpu_custom_call.1} parent=1 // pred_check
      _
    $region67: #{tpu_custom_call.1} parent=1 // pred_check_branch
      %167 = sbr.rel (0) target = $region69
    $region68: #{tpu_custom_call.1} parent=1 // pred_region
      _
    $region69: #{tpu_custom_call.1} parent=1 // pred_fallthru
      _
    // Predicated region
    $region70: #{tpu_custom_call.1} parent=1 // pred_check
      _
    $region71: #{tpu_custom_call.1} parent=1 // pred_check_branch
      %169 = sbr.rel (0) target = $region73
    $region72: #{tpu_custom_call.1} parent=1 // pred_region
      _
    $region73: #{tpu_custom_call.1} parent=1 // pred_fallthru
      _
    // Predicated region
    $region74: #{tpu_custom_call.1} parent=1 // pred_check
      _
    $region75: #{tpu_custom_call.1} parent=1 // pred_check_branch
      %171 = sbr.rel (0) target = $region77
    $region76: #{tpu_custom_call.1} parent=1 // pred_region
      _
    $region77: #{tpu_custom_call.1} parent=1 // pred_fallthru
      _
    // Predicated region
    $region78: #{tpu_custom_call.1} parent=1 // pred_check
      _
    $region79: #{tpu_custom_call.1} parent=1 // pred_check_branch
      %173 = sbr.rel (0) target = $region81
    $region80: #{tpu_custom_call.1} parent=1 // pred_region
      %174 = dma.done [#allocation3], 16
    $region81: #{tpu_custom_call.1} parent=1 // pred_fallthru
      _
    // Predicated region
    $region82: #{tpu_custom_call.1} parent=1 // pred_check
      _
    $region83: #{tpu_custom_call.1} parent=1 // pred_check_branch
      %176 = sbr.rel (0) target = $region85
    $region84: #{tpu_custom_call.1} parent=1 // pred_region
      %177 = dma.done [#allocation6], 16
    $region85: #{tpu_custom_call.1} parent=1 // pred_fallthru
      _
    // Predicated region
    $region86: #{tpu_custom_call.1} parent=1 // pred_check
      _
    $region87: #{tpu_custom_call.1} parent=1 // pred_check_branch
      %179 = sbr.rel (0) target = $region89
    $region88: #{tpu_custom_call.1} parent=1 // pred_region
      %180 = dma.done [#allocation6], 32
    $region89: #{tpu_custom_call.1} parent=1 // pred_fallthru
      _
    // Predicated region
    $region90: #{tpu_custom_call.1} parent=1 // pred_check
      _
    $region91: #{tpu_custom_call.1} parent=1 // pred_check_branch
      %182 = sbr.rel (0) target = $region93
    $region92: #{tpu_custom_call.1} parent=1 // pred_region
      %183 = dma.done [#allocation9], 16
    $region93: #{tpu_custom_call.1} parent=1 // pred_fallthru
      _
    // Predicated region
    $region94: #{tpu_custom_call.1} parent=1 // pred_check
      _
    $region95: #{tpu_custom_call.1} parent=1 // pred_check_branch
      %185 = sbr.rel (0) target = $region97
    $region96: #{tpu_custom_call.1} parent=1 // pred_region
      %186 = dma.done [#allocation9], 16
    $region97: #{tpu_custom_call.1} parent=1 // pred_fallthru
      _
    // Predicated region
    $region98: #{tpu_custom_call.1} parent=1 // pred_check
      _
    $region99: #{tpu_custom_call.1} parent=1 // pred_check_branch
      %188 = sbr.rel (0) target = $region101
    $region100: #{tpu_custom_call.1} parent=1 // pred_region
      %189 = dma.done [#allocation12], 256
    $region101: #{tpu_custom_call.1} parent=1 // pred_fallthru
      _
    // Predicated region
    $region102: #{tpu_custom_call.1} parent=1 // pred_check
      _
    $region103: #{tpu_custom_call.1} parent=1 // pred_check_branch
      %191 = sbr.rel (0) target = $region105
    $region104: #{tpu_custom_call.1} parent=1 // pred_region
      %192 = dma.done [#allocation12], 16
    $region105: #{tpu_custom_call.1} parent=1 // pred_fallthru
      _
    // Predicated region
    $region106: #{tpu_custom_call.1} parent=1 // pred_check
      _
    $region107: #{tpu_custom_call.1} parent=1 // pred_check_branch
      %194 = sbr.rel (0) target = $region109
    $region108: #{tpu_custom_call.1} parent=1 // pred_region
      %195 = dma.done [#allocation15], 16
    $region109: #{tpu_custom_call.1} parent=1 // pred_fallthru
      _
    // Predicated region
    $region110: #{tpu_custom_call.1} parent=1 // pred_check
      _
    $region111: #{tpu_custom_call.1} parent=1 // pred_check_branch
      %197 = sbr.rel (0) target = $region113
    $region112: #{tpu_custom_call.1} parent=1 // pred_region
      %198 = dma.done [#allocation15], 16
    $region113: #{tpu_custom_call.1} parent=1 // pred_fallthru
      _
    // Predicated region
    $region114: #{tpu_custom_call.1} parent=1 // pred_check
      _
    $region115: #{tpu_custom_call.1} parent=1 // pred_check_branch
      %200 = sbr.rel (0) target = $region117
    $region116: #{tpu_custom_call.1} parent=1 // pred_region
      %201 = dma.done [#allocation18], 512
    $region117: #{tpu_custom_call.1} parent=1 // pred_fallthru
      _
    // Predicated region
    $region118: #{tpu_custom_call.1} parent=1 // pred_check
      _
    $region119: #{tpu_custom_call.1} parent=1 // pred_check_branch
      %203 = sbr.rel (0) target = $region121
    $region120: #{tpu_custom_call.1} parent=1 // pred_region
      %204 = dma.done [#allocation18], 16
    $region121: #{tpu_custom_call.1} parent=1 // pred_fallthru
      _
    // Predicated region
    $region122: #{tpu_custom_call.1} parent=1 // pred_check
      _
    $region123: #{tpu_custom_call.1} parent=1 // pred_check_branch
      %206 = sbr.rel (0) target = $region125
    $region124: #{tpu_custom_call.1} parent=1 // pred_region
      %207 = dma.done [#allocation21], 512
    $region125: #{tpu_custom_call.1} parent=1 // pred_fallthru
      _
    %v209 = vld [vmem:[%s0] sm:$0xff]
    %v210 = vld [vmem:[%s0 + $0x8] sm:$0xff]
    %v211 = vld [vmem:[%s0 + $0x10] sm:$0xff]
    %v212 = vld [vmem:[%s0 + $0x18] sm:$0xff]
    %v213 = vand.u32 2147483647, %v209
    %v214 = vand.u32 2147483647, %v210
    %v215 = vand.u32 2147483647, %v211
    %v216 = vand.u32 2147483647, %v212
    %221 = vrot.lane.b32.xlu0 %v213, 125
    %v222 = vpop.permute.xlu0 %221
    %223 = vrot.lane.b32.xlu0 %v214, 125
    %v224 = vpop.permute.xlu0 %223
    %225 = vrot.lane.b32.xlu0 %v215, 125
    %v226 = vpop.permute.xlu0 %225
    %227 = vrot.lane.b32.xlu0 %v216, 125
    %v228 = vpop.permute.xlu0 %227
    %vm233 = vcmask 23552
    %v234 = vsel %vm233, %v222, 0.0
    %235 = vadd.xlane.f32.xlu0 %v234
    %v236 = vpop.xlane.xlu0 %235
    %v237 = vsel %vm233, %v224, 0.0
    %238 = vadd.xlane.f32.xlu0 %v237
    %v239 = vpop.xlane.xlu0 %238
    %v240 = vsel %vm233, %v226, 0.0
    %241 = vadd.xlane.f32.xlu0 %v240
    %v242 = vpop.xlane.xlu0 %241
    %v243 = vsel %vm233, %v228, 0.0
    %244 = vadd.xlane.f32.xlu0 %v243
    %v245 = vpop.xlane.xlu0 %244
    %vm246 = vcmp.ne.f32.partialorder %v236, 0.0
    %vm247 = vcmp.ne.f32.partialorder %v239, 0.0
    %vm248 = vcmp.ne.f32.partialorder %v242, 0.0
    %vm249 = vcmp.ne.f32.partialorder %v245, 0.0
    %v250 = vsel %vm246, 1, 0
    %v251 = vsel %vm247, 1, 0
    %v252 = vsel %vm248, 1, 0
    %v253 = vsel %vm249, 1, 0
    %v254 = vcvt.s32.f32 %v250
    %v255 = vcvt.s32.f32 %v251
    %v256 = vcvt.s32.f32 %v252
    %v257 = vcvt.s32.f32 %v253
    %v258 = vmul.f32 %v209, %v254
    %v259 = vmul.f32 %v210, %v255
    %v260 = vmul.f32 %v211, %v256
    %v261 = vmul.f32 %v212, %v257
    %v262 = vsub.f32 1.0, %v254
    %v263 = vsub.f32 1.0, %v255
    %v264 = vsub.f32 1.0, %v256
    %v265 = vsub.f32 1.0, %v257
    %v266 = vmul.f32 %v262, 1e+09
    %v267 = vmul.f32 %v263, 1e+09
    %v268 = vmul.f32 %v264, 1e+09
    %v269 = vmul.f32 %v265, 1e+09
    %v270 = vadd.f32 %v254, %v255
    %v271 = vrot.slane %v270, 4
    %v272 = vadd.f32 %v270, %v271
    %v273 = vrot.slane %v272, 2
    %v274 = vadd.f32 %v272, %v273
    %v275 = vrot.slane %v274, 1
    %v276 = vadd.f32 %v274, %v275
    %v277 = vadd.f32 %v256, %v257
    %v278 = vrot.slane %v277, 4
    %v279 = vadd.f32 %v277, %v278
    %v280 = vrot.slane %v279, 2
    %v281 = vadd.f32 %v279, %v280
    %v282 = vrot.slane %v281, 1
    %v283 = vadd.f32 %v281, %v282
    %v284 = vmax.f32 %v276, 1.0
    %v285 = vmax.f32 %v283, 1.0
    %v286 = vld [vmem:[#allocation2] sm:$0x1]
    %v288 = vlaneseq
    %v289 = vshrl.u32 %v288, 7
    %v290 = vsub.s32 0, %v289
    %v291 = vrot.slane %v286, %v290
    %292 = vrot.lane.b32.xlu0 %v291, 3
    %v293 = vpop.permute.xlu0 %292
    %v295 = vmul.f32 %v258, %v293
    %v296 = vmul.f32 %v259, %v293
    %v297 = vmul.f32 %v260, %v293
    %v298 = vmul.f32 %v261, %v293
    %v299 = vld [vmem:[#allocation5] sm:$0x1]
    %v301 = vlaneseq
    %v302 = vshrl.u32 %v301, 7
    %v303 = vsub.s32 0, %v302
    %v304 = vrot.slane %v299, %v303
    %305 = vrot.lane.b32.xlu0 %v304, 3
    %v306 = vpop.permute.xlu0 %305
    %v308 = vadd.f32 %v295, %v306
    %v309 = vadd.f32 %v296, %v306
    %v310 = vadd.f32 %v297, %v306
    %v311 = vadd.f32 %v298, %v306
    %v312 = vmul.f32 %v308, %v254
    %v313 = vmul.f32 %v309, %v255
    %v314 = vmul.f32 %v310, %v256
    %v315 = vmul.f32 %v311, %v257
    %v316 = vadd.f32 %v258, %v266
    %v317 = vadd.f32 %v259, %v267
    %v318 = vadd.f32 %v260, %v268
    %v319 = vadd.f32 %v261, %v269
    %v320 = vld [vmem:[#allocation7] sm:$0x3]
    %v321 = vld [vmem:[#allocation8] sm:$0x1]
    %v322 = vld [vmem:[%s5] sm:$0xf]
    %v323 = vld [vmem:[%s5 + $0x4] sm:$0xf]
    %v324 = vld [vmem:[%s5 + $0x8] sm:$0xf]
    %v325 = vld [vmem:[%s5 + $0xc] sm:$0xf]
    %v326 = vld [vmem:[#allocation10] sm:$0x1]
    %v327 = vld [vmem:[#allocation11] sm:$0xf]
    %v328 = vld [vmem:[#allocation11 + $0x4] sm:$0xf]
    %v329 = vld [vmem:[#allocation11 + $0x8] sm:$0xf]
    %v330 = vld [vmem:[#allocation11 + $0xc] sm:$0xf]
    %v331 = vld [vmem:[#allocation13] sm:$0x1]
    %v332 = vld [vmem:[#allocation14] sm:$0x1]
    %v333 = vmul.f32 %v316, %v316
    %v334 = vmul.f32 %v317, %v317
    %v335 = vmul.f32 %v318, %v318
    %v336 = vmul.f32 %v319, %v319
    %v337 = vsel %vm233, %v333, 0.0
    %338 = vadd.xlane.f32.xlu0 %v337
    %v339 = vpop.xlane.xlu0 %338
    %v340 = vsel %vm233, %v334, 0.0
    %341 = vadd.xlane.f32.xlu0 %v340
    %v342 = vpop.xlane.xlu0 %341
    %v343 = vsel %vm233, %v335, 0.0
    %344 = vadd.xlane.f32.xlu0 %v343
    %v345 = vpop.xlane.xlu0 %344
    %v346 = vsel %vm233, %v336, 0.0
    %347 = vadd.xlane.f32.xlu0 %v346
    %v348 = vpop.xlane.xlu0 %347
    %v349 = vmul.f32 %v316, 2.0
    %v350 = vmul.f32 %v317, 2.0
    %v351 = vmul.f32 %v318, 2.0
    %v352 = vmul.f32 %v319, 2.0
    %v353 = vsel %vm233, %v349, -1.0
    %v354 = vsel %vm233, %v350, -1.0
    %v355 = vsel %vm233, %v351, -1.0
    %v356 = vsel %vm233, %v352, -1.0
    %v357 = vsel %vm233, %v316, %v339
    %v358 = vsel %vm233, %v317, %v342
    %v359 = vsel %vm233, %v318, %v345
    %v360 = vsel %vm233, %v319, %v348
    %vm361 = vcmask 31744
    %v363 = vsel %vm361, %v353, 0
    %v366 = vsel %vm361, %v354, 0
    %v369 = vsel %vm361, %v357, 0
    %v372 = vsel %vm361, %v358, 0
    %374 = vmatprep.subr.mxu0 0.0
    %375 = vmatpush1.xpose.msra.mxu0 %v369
    %376 = vmatprep.subr.mxu0 0.0
    %377 = vmatpush1.xpose.msra.mxu0 %v372
    %378 = vmatprep.subr.mxu0 0.0
    %379 = vmatpush1.xpose.msra.mxu0 0.0
    %380 = vmatprep.subr.mxu0 0.0
    %381 = vmatpush1.xpose.msra.mxu0 0.0
    %382 = vmatprep.subr.mxu0 0.0
    %383 = vmatpush1.xpose.msra.mxu0 0.0
    %384 = vmatprep.subr.mxu0 0.0
    %385 = vmatpush1.xpose.msra.mxu0 0.0
    %386 = vmatprep.subr.mxu0 0.0
    %387 = vmatpush1.xpose.msra.mxu0 0.0
    %388 = vmatprep.subr.mxu0 0.0
    %389 = vmatpush1.xpose.msra.mxu0 0.0
    %390 = vmatprep.subr.mxu0 0.0
    %391 = vmatpush1.xpose.msra.mxu0 0.0
    %392 = vmatprep.subr.mxu0 0.0
    %393 = vmatpush1.xpose.msra.mxu0 0.0
    %394 = vmatprep.subr.mxu0 0.0
    %395 = vmatpush1.xpose.msra.mxu0 0.0
    %396 = vmatprep.subr.mxu0 0.0
    %397 = vmatpush1.xpose.msra.mxu0 0.0
    %398 = vmatprep.subr.mxu0 0.0
    %399 = vmatpush1.xpose.msra.mxu0 0.0
    %400 = vmatprep.subr.mxu0 0.0
    %401 = vmatpush1.xpose.msra.mxu0 0.0
    %402 = vmatprep.subr.mxu0 0.0
    %403 = vmatpush1.xpose.msra.mxu0 0.0
    %404 = vmatprep.subr.mxu0 0.0
    %405 = vmatpush1.xpose.msra.mxu0 0.0
    %406 = vmatprep.subr.mxu0 0.0
    %407 = vmatpush1.xpose.msra.mxu0 0.0
    %408 = vmatprep.subr.mxu0 0.0
    %409 = vmatpush1.xpose.msra.mxu0 0.0
    %410 = vmatprep.subr.mxu0 0.0
    %411 = vmatpush1.xpose.msra.mxu0 0.0
    %412 = vmatprep.subr.mxu0 0.0
    %413 = vmatpush1.xpose.msra.mxu0 0.0
    %414 = vmatprep.subr.mxu0 0.0
    %415 = vmatpush1.xpose.msra.mxu0 0.0
    %416 = vmatprep.subr.mxu0 0.0
    %417 = vmatpush1.xpose.msra.mxu0 0.0
    %418 = vmatprep.subr.mxu0 0.0
    %419 = vmatpush1.xpose.msra.mxu0 0.0
    %420 = vmatprep.subr.mxu0 0.0
    %421 = vmatpush1.xpose.msra.mxu0 0.0
    %422 = vmatprep.subr.mxu0 0.0
    %423 = vmatpush1.xpose.msra.mxu0 0.0
    %424 = vmatprep.subr.mxu0 0.0
    %425 = vmatpush1.xpose.msra.mxu0 0.0
    %426 = vmatprep.subr.mxu0 0.0
    %427 = vmatpush1.xpose.msra.mxu0 0.0
    %428 = vmatprep.subr.mxu0 0.0
    %429 = vmatpush1.xpose.msra.mxu0 0.0
    %430 = vmatprep.subr.mxu0 0.0
    %431 = vmatpush1.xpose.msra.mxu0 0.0
    %432 = vmatprep.subr.mxu0 0.0
    %433 = vmatpush1.xpose.msra.mxu0 0.0
    %434 = vmatprep.subr.mxu0 0.0
    %435 = vmatpush1.xpose.msra.mxu0 0.0
    %436 = vmatprep.subr.mxu0 0.0
    %437 = vmatpush1.xpose.msra.mxu0 0.0
    %438 = vmatprep.mubr.f32.mxu0 0.0
    %439 = vmatmul.mubr.f32.gmra.mrb[0].mxu0 %v363
    %v440 = vpop.f32.mrb[0].mxu0
    %v441 = vadd.f32 0.0, %v440
    %v442 = vpop.f32.mrb[0].mxu0
    %443 = vmatprep.mubr.f32.mxu0 0.0
    %444 = vmatmul.mubr.f32.gmra.mrb[0].mxu0 %v366
    %v445 = vpop.f32.mrb[0].mxu0
    %v446 = vadd.f32 0.0, %v445
    %v447 = vpop.f32.mrb[0].mxu0
    %448 = vdwg.mxu0
    %v450 = vsel %vm361, %v355, 0
    %v453 = vsel %vm361, %v356, 0
    %v456 = vsel %vm361, %v359, 0
    %v459 = vsel %vm361, %v360, 0
    %461 = vmatprep.subr.mxu0 0.0
    %462 = vmatpush1.xpose.msra.mxu0 %v456
    %463 = vmatprep.subr.mxu0 0.0
    %464 = vmatpush1.xpose.msra.mxu0 %v459
    %465 = vmatprep.subr.mxu0 0.0
    %466 = vmatpush1.xpose.msra.mxu0 0.0
    %467 = vmatprep.subr.mxu0 0.0
    %468 = vmatpush1.xpose.msra.mxu0 0.0
    %469 = vmatprep.subr.mxu0 0.0
    %470 = vmatpush1.xpose.msra.mxu0 0.0
    %471 = vmatprep.subr.mxu0 0.0
    %472 = vmatpush1.xpose.msra.mxu0 0.0
    %473 = vmatprep.subr.mxu0 0.0
    %474 = vmatpush1.xpose.msra.mxu0 0.0
    %475 = vmatprep.subr.mxu0 0.0
    %476 = vmatpush1.xpose.msra.mxu0 0.0
    %477 = vmatprep.subr.mxu0 0.0
    %478 = vmatpush1.xpose.msra.mxu0 0.0
    %479 = vmatprep.subr.mxu0 0.0
    %480 = vmatpush1.xpose.msra.mxu0 0.0
    %481 = vmatprep.subr.mxu0 0.0
    %482 = vmatpush1.xpose.msra.mxu0 0.0
    %483 = vmatprep.subr.mxu0 0.0
    %484 = vmatpush1.xpose.msra.mxu0 0.0
    %485 = vmatprep.subr.mxu0 0.0
    %486 = vmatpush1.xpose.msra.mxu0 0.0
    %487 = vmatprep.subr.mxu0 0.0
    %488 = vmatpush1.xpose.msra.mxu0 0.0
    %489 = vmatprep.subr.mxu0 0.0
    %490 = vmatpush1.xpose.msra.mxu0 0.0
    %491 = vmatprep.subr.mxu0 0.0
    %492 = vmatpush1.xpose.msra.mxu0 0.0
    %493 = vmatprep.subr.mxu0 0.0
    %494 = vmatpush1.xpose.msra.mxu0 0.0
    %495 = vmatprep.subr.mxu0 0.0
    %496 = vmatpush1.xpose.msra.mxu0 0.0
    %497 = vmatprep.subr.mxu0 0.0
    %498 = vmatpush1.xpose.msra.mxu0 0.0
    %499 = vmatprep.subr.mxu0 0.0
    %500 = vmatpush1.xpose.msra.mxu0 0.0
    %501 = vmatprep.subr.mxu0 0.0
    %502 = vmatpush1.xpose.msra.mxu0 0.0
    %503 = vmatprep.subr.mxu0 0.0
    %504 = vmatpush1.xpose.msra.mxu0 0.0
    %505 = vmatprep.subr.mxu0 0.0
    %506 = vmatpush1.xpose.msra.mxu0 0.0
    %507 = vmatprep.subr.mxu0 0.0
    %508 = vmatpush1.xpose.msra.mxu0 0.0
    %509 = vmatprep.subr.mxu0 0.0
    %510 = vmatpush1.xpose.msra.mxu0 0.0
    %511 = vmatprep.subr.mxu0 0.0
    %512 = vmatpush1.xpose.msra.mxu0 0.0
    %513 = vmatprep.subr.mxu0 0.0
    %514 = vmatpush1.xpose.msra.mxu0 0.0
    %515 = vmatprep.subr.mxu0 0.0
    %516 = vmatpush1.xpose.msra.mxu0 0.0
    %517 = vmatprep.subr.mxu0 0.0
    %518 = vmatpush1.xpose.msra.mxu0 0.0
    %519 = vmatprep.subr.mxu0 0.0
    %520 = vmatpush1.xpose.msra.mxu0 0.0
    %521 = vmatprep.subr.mxu0 0.0
    %522 = vmatpush1.xpose.msra.mxu0 0.0
    %523 = vmatprep.subr.mxu0 0.0
    %524 = vmatpush1.xpose.msra.mxu0 0.0
    %525 = vmatprep.mubr.f32.mxu0 0.0
    %526 = vmatmul.mubr.f32.gmra.mrb[0].mxu0 %v450
    %v527 = vpop.f32.mrb[0].mxu0
    %v528 = vadd.f32 0.0, %v527
    %v529 = vpop.f32.mrb[0].mxu0
    %530 = vmatprep.mubr.f32.mxu0 0.0
    %531 = vmatmul.mubr.f32.gmra.mrb[0].mxu0 %v453
    %v532 = vpop.f32.mrb[0].mxu0
    %v533 = vadd.f32 0.0, %v532
    %v534 = vpop.f32.mrb[0].mxu0
    %535 = vdwg.mxu0
    %v536 = vlaneseq
    %v537 = vand.u32 %v536, 127
    %v538 = vlaneseq
    %v539 = vshrl.u32 %v538, 7
    %v540 = vadd.s32 %v539, 8
    %vm545 = vcmp.lt.s32.totalorder %v441, 0
    %vm546 = vcmp.lt.s32.totalorder %v446, 0
    %vm547 = vcmp.lt.s32.totalorder %v528, 0
    %vm548 = vcmp.lt.s32.totalorder %v533, 0
    %v549 = vxor.u32 %v441, 2147483647
    %v550 = vxor.u32 %v446, 2147483647
    %v551 = vxor.u32 %v528, 2147483647
    %v552 = vxor.u32 %v533, 2147483647
    %v553 = vsel %vm545, %v549, %v441
    %v554 = vsel %vm546, %v550, %v446
    %v555 = vsel %vm547, %v551, %v528
    %v556 = vsel %vm548, %v552, %v533
    %v557 = vand.u32 %v553, 4294967280
    %v558 = vand.u32 %v554, 4294967280
    %v559 = vand.u32 %v555, 4294967280
    %v560 = vand.u32 %v556, 4294967280
    %v561 = vsub.s32 15, %v537
    %v562 = vor.u32 %v557, %v561
    %v563 = vor.u32 %v558, %v561
    %v564 = vor.u32 %v559, %v561
    %v565 = vor.u32 %v560, %v561
    %vm566 = vcmp.eq.s32.totalorder %v537, %v539
    %vm567 = vcmp.eq.s32.totalorder %v537, %v540
    %v568 = vsel %vm566, 1, 0
    %v569 = vsel %vm567, 1, 0
    %vm570 = vcmp.eq.s32.totalorder %v568, 1
    %vm571 = vcmp.eq.s32.totalorder %v569, 1
    %v572 = vsel %vm570, 2147483648, %v562
    %v573 = vsel %vm571, 2147483648, %v563
    %v574 = vsel %vm570, 2147483648, %v564
    %v575 = vsel %vm571, 2147483648, %v565
    %vm576 = vcmask 130048
    %v577 = vsel %vm576, %v572, 2147483648
    %v578 = vand.u32 %v577, 65535
    %v579 = vshra.s32 %v577, 16
    %v580 = vcvt.s32.f32 %v578
    %v581 = vcvt.s32.f32 %v579
    %582 = vmax.xlane.f32.xlu0 %v581
    %v583 = vpop.xlane.xlu0 %582
    %vm584 = vcmp.eq.f32.partialorder %v581, %v583
    %v585 = vsel %vm584, %v580, -inf
    %586 = vmax.xlane.f32.xlu0 %v585
    %v587 = vpop.xlane.xlu0 %586
    %v588 = vcvt.f32.s32 %v587
    %v589 = vcvt.f32.s32 %v583
    %v590 = vshll.u32 %v589, 16
    %v591 = vadd.s32 %v590, %v588
    %v592 = vsel %vm576, %v573, 2147483648
    %v593 = vand.u32 %v592, 65535
    %v594 = vshra.s32 %v592, 16
    %v595 = vcvt.s32.f32 %v593
    %v596 = vcvt.s32.f32 %v594
    %597 = vmax.xlane.f32.xlu0 %v596
    %v598 = vpop.xlane.xlu0 %597
    %vm599 = vcmp.eq.f32.partialorder %v596, %v598
    %v600 = vsel %vm599, %v595, -inf
    %601 = vmax.xlane.f32.xlu0 %v600
    %v602 = vpop.xlane.xlu0 %601
    %v603 = vcvt.f32.s32 %v602
    %v604 = vcvt.f32.s32 %v598
    %v605 = vshll.u32 %v604, 16
    %v606 = vadd.s32 %v605, %v603
    %v607 = vsel %vm576, %v574, 2147483648
    %v608 = vand.u32 %v607, 65535
    %v609 = vshra.s32 %v607, 16
    %v610 = vcvt.s32.f32 %v608
    %v611 = vcvt.s32.f32 %v609
    %612 = vmax.xlane.f32.xlu0 %v611
    %v613 = vpop.xlane.xlu0 %612
    %vm614 = vcmp.eq.f32.partialorder %v611, %v613
    %v615 = vsel %vm614, %v610, -inf
    %616 = vmax.xlane.f32.xlu0 %v615
    %v617 = vpop.xlane.xlu0 %616
    %v618 = vcvt.f32.s32 %v617
    %v619 = vcvt.f32.s32 %v613
    %v620 = vshll.u32 %v619, 16
    %v621 = vadd.s32 %v620, %v618
    %v622 = vsel %vm576, %v575, 2147483648
    %v623 = vand.u32 %v622, 65535
    %v624 = vshra.s32 %v622, 16
    %v625 = vcvt.s32.f32 %v623
    %v626 = vcvt.s32.f32 %v624
    %627 = vmax.xlane.f32.xlu0 %v626
    %v628 = vpop.xlane.xlu0 %627
    %vm629 = vcmp.eq.f32.partialorder %v626, %v628
    %v630 = vsel %vm629, %v625, -inf
    %631 = vmax.xlane.f32.xlu0 %v630
    %v632 = vpop.xlane.xlu0 %631
    %v633 = vcvt.f32.s32 %v632
    %v634 = vcvt.f32.s32 %v628
    %v635 = vshll.u32 %v634, 16
    %v636 = vadd.s32 %v635, %v633
    %v637 = vand.u32 %v591, 15
    %v638 = vand.u32 %v606, 15
    %v639 = vand.u32 %v621, 15
    %v640 = vand.u32 %v636, 15
    %v641 = vsub.s32 15, %v637
    %v642 = vsub.s32 15, %v638
    %v643 = vsub.s32 15, %v639
    %v644 = vsub.s32 15, %v640
    %vm645 = vcmp.eq.s32.totalorder %v537, %v641
    %vm646 = vcmp.eq.s32.totalorder %v537, %v642
    %vm647 = vcmp.eq.s32.totalorder %v537, %v643
    %vm648 = vcmp.eq.s32.totalorder %v537, %v644
    %v649 = vsel %vm645, 2147483648, %v572
    %v650 = vsel %vm646, 2147483648, %v573
    %v651 = vsel %vm647, 2147483648, %v574
    %v652 = vsel %vm648, 2147483648, %v575
    %v653 = vsel %vm576, %v649, 2147483648
    %v654 = vand.u32 %v653, 65535
    %v655 = vshra.s32 %v653, 16
    %v656 = vcvt.s32.f32 %v654
    %v657 = vcvt.s32.f32 %v655
    %658 = vmax.xlane.f32.xlu0 %v657
    %v659 = vpop.xlane.xlu0 %658
    %vm660 = vcmp.eq.f32.partialorder %v657, %v659
    %v661 = vsel %vm660, %v656, -inf
    %662 = vmax.xlane.f32.xlu0 %v661
    %v663 = vpop.xlane.xlu0 %662
    %v664 = vcvt.f32.s32 %v663
    %v665 = vcvt.f32.s32 %v659
    %v666 = vshll.u32 %v665, 16
    %v667 = vadd.s32 %v666, %v664
    %v668 = vsel %vm576, %v650, 2147483648
    %v669 = vand.u32 %v668, 65535
    %v670 = vshra.s32 %v668, 16
    %v671 = vcvt.s32.f32 %v669
    %v672 = vcvt.s32.f32 %v670
    %673 = vmax.xlane.f32.xlu0 %v672
    %v674 = vpop.xlane.xlu0 %673
    %vm675 = vcmp.eq.f32.partialorder %v672, %v674
    %v676 = vsel %vm675, %v671, -inf
    %677 = vmax.xlane.f32.xlu0 %v676
    %v678 = vpop.xlane.xlu0 %677
    %v679 = vcvt.f32.s32 %v678
    %v680 = vcvt.f32.s32 %v674
    %v681 = vshll.u32 %v680, 16
    %v682 = vadd.s32 %v681, %v679
    %v683 = vsel %vm576, %v651, 2147483648
    %v684 = vand.u32 %v683, 65535
    %v685 = vshra.s32 %v683, 16
    %v686 = vcvt.s32.f32 %v684
    %v687 = vcvt.s32.f32 %v685
    %688 = vmax.xlane.f32.xlu0 %v687
    %v689 = vpop.xlane.xlu0 %688
    %vm690 = vcmp.eq.f32.partialorder %v687, %v689
    %v691 = vsel %vm690, %v686, -inf
    %692 = vmax.xlane.f32.xlu0 %v691
    %v693 = vpop.xlane.xlu0 %692
    %v694 = vcvt.f32.s32 %v693
    %v695 = vcvt.f32.s32 %v689
    %v696 = vshll.u32 %v695, 16
    %v697 = vadd.s32 %v696, %v694
    %v698 = vsel %vm576, %v652, 2147483648
    %v699 = vand.u32 %v698, 65535
    %v700 = vshra.s32 %v698, 16
    %v701 = vcvt.s32.f32 %v699
    %v702 = vcvt.s32.f32 %v700
    %703 = vmax.xlane.f32.xlu0 %v702
    %v704 = vpop.xlane.xlu0 %703
    %vm705 = vcmp.eq.f32.partialorder %v702, %v704
    %v706 = vsel %vm705, %v701, -inf
    %707 = vmax.xlane.f32.xlu0 %v706
    %v708 = vpop.xlane.xlu0 %707
    %v709 = vcvt.f32.s32 %v708
    %v710 = vcvt.f32.s32 %v704
    %v711 = vshll.u32 %v710, 16
    %v712 = vadd.s32 %v711, %v709
    %v713 = vand.u32 %v667, 15
    %v714 = vand.u32 %v682, 15
    %v715 = vand.u32 %v697, 15
    %v716 = vand.u32 %v712, 15
    %v717 = vsub.s32 15, %v713
    %v718 = vsub.s32 15, %v714
    %v719 = vsub.s32 15, %v715
    %v720 = vsub.s32 15, %v716
    %vm721 = vcmp.eq.s32.totalorder %v537, %v717
    %vm722 = vcmp.eq.s32.totalorder %v537, %v718
    %vm723 = vcmp.eq.s32.totalorder %v537, %v719
    %vm724 = vcmp.eq.s32.totalorder %v537, %v720
    %v725 = vsel %vm721, 2147483648, %v649
    %v726 = vsel %vm722, 2147483648, %v650
    %v727 = vsel %vm723, 2147483648, %v651
    %v728 = vsel %vm724, 2147483648, %v652
    %v729 = vsel %vm576, %v725, 2147483648
    %v730 = vand.u32 %v729, 65535
    %v731 = vshra.s32 %v729, 16
    %v732 = vcvt.s32.f32 %v730
    %v733 = vcvt.s32.f32 %v731
    %734 = vmax.xlane.f32.xlu0 %v733
    %v735 = vpop.xlane.xlu0 %734
    %vm736 = vcmp.eq.f32.partialorder %v733, %v735
    %v737 = vsel %vm736, %v732, -inf
    %738 = vmax.xlane.f32.xlu0 %v737
    %v739 = vpop.xlane.xlu0 %738
    %v740 = vcvt.f32.s32 %v739
    %v741 = vcvt.f32.s32 %v735
    %v742 = vshll.u32 %v741, 16
    %v743 = vadd.s32 %v742, %v740
    %v744 = vsel %vm576, %v726, 2147483648
    %v745 = vand.u32 %v744, 65535
    %v746 = vshra.s32 %v744, 16
    %v747 = vcvt.s32.f32 %v745
    %v748 = vcvt.s32.f32 %v746
    %749 = vmax.xlane.f32.xlu0 %v748
    %v750 = vpop.xlane.xlu0 %749
    %vm751 = vcmp.eq.f32.partialorder %v748, %v750
    %v752 = vsel %vm751, %v747, -inf
    %753 = vmax.xlane.f32.xlu0 %v752
    %v754 = vpop.xlane.xlu0 %753
    %v755 = vcvt.f32.s32 %v754
    %v756 = vcvt.f32.s32 %v750
    %v757 = vshll.u32 %v756, 16
    %v758 = vadd.s32 %v757, %v755
    %v759 = vsel %vm576, %v727, 2147483648
    %v760 = vand.u32 %v759, 65535
    %v761 = vshra.s32 %v759, 16
    %v762 = vcvt.s32.f32 %v760
    %v763 = vcvt.s32.f32 %v761
    %764 = vmax.xlane.f32.xlu0 %v763
    %v765 = vpop.xlane.xlu0 %764
    %vm766 = vcmp.eq.f32.partialorder %v763, %v765
    %v767 = vsel %vm766, %v762, -inf
    %768 = vmax.xlane.f32.xlu0 %v767
    %v769 = vpop.xlane.xlu0 %768
    %v770 = vcvt.f32.s32 %v769
    %v771 = vcvt.f32.s32 %v765
    %v772 = vshll.u32 %v771, 16
    %v773 = vadd.s32 %v772, %v770
    %v774 = vsel %vm576, %v728, 2147483648
    %v775 = vand.u32 %v774, 65535
    %v776 = vshra.s32 %v774, 16
    %v777 = vcvt.s32.f32 %v775
    %v778 = vcvt.s32.f32 %v776
    %779 = vmax.xlane.f32.xlu0 %v778
    %v780 = vpop.xlane.xlu0 %779
    %vm781 = vcmp.eq.f32.partialorder %v778, %v780
    %v782 = vsel %vm781, %v777, -inf
    %783 = vmax.xlane.f32.xlu0 %v782
    %v784 = vpop.xlane.xlu0 %783
    %v785 = vcvt.f32.s32 %v784
    %v786 = vcvt.f32.s32 %v780
    %v787 = vshll.u32 %v786, 16
    %v788 = vadd.s32 %v787, %v785
    %v789 = vand.u32 %v743, 15
    %v790 = vand.u32 %v758, 15
    %v791 = vand.u32 %v773, 15
    %v792 = vand.u32 %v788, 15
    %v793 = vsub.s32 15, %v789
    %v794 = vsub.s32 15, %v790
    %v795 = vsub.s32 15, %v791
    %v796 = vsub.s32 15, %v792
    %vm797 = vcmp.eq.s32.totalorder %v537, %v793
    %vm798 = vcmp.eq.s32.totalorder %v537, %v794
    %vm799 = vcmp.eq.s32.totalorder %v537, %v795
    %vm800 = vcmp.eq.s32.totalorder %v537, %v796
    %v801 = vsel %vm797, 2147483648, %v725
    %v802 = vsel %vm798, 2147483648, %v726
    %v803 = vsel %vm799, 2147483648, %v727
    %v804 = vsel %vm800, 2147483648, %v728
    %v805 = vsel %vm576, %v801, 2147483648
    %v806 = vand.u32 %v805, 65535
    %v807 = vshra.s32 %v805, 16
    %v808 = vcvt.s32.f32 %v806
    %v809 = vcvt.s32.f32 %v807
    %810 = vmax.xlane.f32.xlu0 %v809
    %v811 = vpop.xlane.xlu0 %810
    %vm812 = vcmp.eq.f32.partialorder %v809, %v811
    %v813 = vsel %vm812, %v808, -inf
    %814 = vmax.xlane.f32.xlu0 %v813
    %v815 = vpop.xlane.xlu0 %814
    %v816 = vcvt.f32.s32 %v815
    %v817 = vcvt.f32.s32 %v811
    %v818 = vshll.u32 %v817, 16
    %v819 = vadd.s32 %v818, %v816
    %v820 = vsel %vm576, %v802, 2147483648
    %v821 = vand.u32 %v820, 65535
    %v822 = vshra.s32 %v820, 16
    %v823 = vcvt.s32.f32 %v821
    %v824 = vcvt.s32.f32 %v822
    %825 = vmax.xlane.f32.xlu0 %v824
    %v826 = vpop.xlane.xlu0 %825
    %vm827 = vcmp.eq.f32.partialorder %v824, %v826
    %v828 = vsel %vm827, %v823, -inf
    %829 = vmax.xlane.f32.xlu0 %v828
    %v830 = vpop.xlane.xlu0 %829
    %v831 = vcvt.f32.s32 %v830
    %v832 = vcvt.f32.s32 %v826
    %v833 = vshll.u32 %v832, 16
    %v834 = vadd.s32 %v833, %v831
    %v835 = vsel %vm576, %v803, 2147483648
    %v836 = vand.u32 %v835, 65535
    %v837 = vshra.s32 %v835, 16
    %v838 = vcvt.s32.f32 %v836
    %v839 = vcvt.s32.f32 %v837
    %840 = vmax.xlane.f32.xlu0 %v839
    %v841 = vpop.xlane.xlu0 %840
    %vm842 = vcmp.eq.f32.partialorder %v839, %v841
    %v843 = vsel %vm842, %v838, -inf
    %844 = vmax.xlane.f32.xlu0 %v843
    %v845 = vpop.xlane.xlu0 %844
    %v846 = vcvt.f32.s32 %v845
    %v847 = vcvt.f32.s32 %v841
    %v848 = vshll.u32 %v847, 16
    %v849 = vadd.s32 %v848, %v846
    %v850 = vsel %vm576, %v804, 2147483648
    %v851 = vand.u32 %v850, 65535
    %v852 = vshra.s32 %v850, 16
    %v853 = vcvt.s32.f32 %v851
    %v854 = vcvt.s32.f32 %v852
    %855 = vmax.xlane.f32.xlu0 %v854
    %v856 = vpop.xlane.xlu0 %855
    %vm857 = vcmp.eq.f32.partialorder %v854, %v856
    %v858 = vsel %vm857, %v853, -inf
    %859 = vmax.xlane.f32.xlu0 %v858
    %v860 = vpop.xlane.xlu0 %859
    %v861 = vcvt.f32.s32 %v860
    %v862 = vcvt.f32.s32 %v856
    %v863 = vshll.u32 %v862, 16
    %v864 = vadd.s32 %v863, %v861
    %v865 = vand.u32 %v819, 15
    %v866 = vand.u32 %v834, 15
    %v867 = vand.u32 %v849, 15
    %v868 = vand.u32 %v864, 15
    %v869 = vsub.s32 15, %v865
    %v870 = vsub.s32 15, %v866
    %v871 = vsub.s32 15, %v867
    %v872 = vsub.s32 15, %v868
    %vm873 = vcmp.eq.s32.totalorder %v537, %v869
    %vm874 = vcmp.eq.s32.totalorder %v537, %v870
    %vm875 = vcmp.eq.s32.totalorder %v537, %v871
    %vm876 = vcmp.eq.s32.totalorder %v537, %v872
    %v877 = vsel %vm873, 2147483648, %v801
    %v878 = vsel %vm874, 2147483648, %v802
    %v879 = vsel %vm875, 2147483648, %v803
    %v880 = vsel %vm876, 2147483648, %v804
    %v881 = vsel %vm576, %v877, 2147483648
    %v882 = vand.u32 %v881, 65535
    %v883 = vshra.s32 %v881, 16
    %v884 = vcvt.s32.f32 %v882
    %v885 = vcvt.s32.f32 %v883
    %886 = vmax.xlane.f32.xlu0 %v885
    %v887 = vpop.xlane.xlu0 %886
    %vm888 = vcmp.eq.f32.partialorder %v885, %v887
    %v889 = vsel %vm888, %v884, -inf
    %890 = vmax.xlane.f32.xlu0 %v889
    %v891 = vpop.xlane.xlu0 %890
    %v892 = vcvt.f32.s32 %v891
    %v893 = vcvt.f32.s32 %v887
    %v894 = vshll.u32 %v893, 16
    %v895 = vadd.s32 %v894, %v892
    %v896 = vsel %vm576, %v878, 2147483648
    %v897 = vand.u32 %v896, 65535
    %v898 = vshra.s32 %v896, 16
    %v899 = vcvt.s32.f32 %v897
    %v900 = vcvt.s32.f32 %v898
    %901 = vmax.xlane.f32.xlu0 %v900
    %v902 = vpop.xlane.xlu0 %901
    %vm903 = vcmp.eq.f32.partialorder %v900, %v902
    %v904 = vsel %vm903, %v899, -inf
    %905 = vmax.xlane.f32.xlu0 %v904
    %v906 = vpop.xlane.xlu0 %905
    %v907 = vcvt.f32.s32 %v906
    %v908 = vcvt.f32.s32 %v902
    %v909 = vshll.u32 %v908, 16
    %v910 = vadd.s32 %v909, %v907
    %v911 = vsel %vm576, %v879, 2147483648
    %v912 = vand.u32 %v911, 65535
    %v913 = vshra.s32 %v911, 16
    %v914 = vcvt.s32.f32 %v912
    %v915 = vcvt.s32.f32 %v913
    %916 = vmax.xlane.f32.xlu0 %v915
    %v917 = vpop.xlane.xlu0 %916
    %vm918 = vcmp.eq.f32.partialorder %v915, %v917
    %v919 = vsel %vm918, %v914, -inf
    %920 = vmax.xlane.f32.xlu0 %v919
    %v921 = vpop.xlane.xlu0 %920
    %v922 = vcvt.f32.s32 %v921
    %v923 = vcvt.f32.s32 %v917
    %v924 = vshll.u32 %v923, 16
    %v925 = vadd.s32 %v924, %v922
    %v926 = vsel %vm576, %v880, 2147483648
    %v927 = vand.u32 %v926, 65535
    %v928 = vshra.s32 %v926, 16
    %v929 = vcvt.s32.f32 %v927
    %v930 = vcvt.s32.f32 %v928
    %931 = vmax.xlane.f32.xlu0 %v930
    %v932 = vpop.xlane.xlu0 %931
    %vm933 = vcmp.eq.f32.partialorder %v930, %v932
    %v934 = vsel %vm933, %v929, -inf
    %935 = vmax.xlane.f32.xlu0 %v934
    %v936 = vpop.xlane.xlu0 %935
    %v937 = vcvt.f32.s32 %v936
    %v938 = vcvt.f32.s32 %v932
    %v939 = vshll.u32 %v938, 16
    %v940 = vadd.s32 %v939, %v937
    %v941 = vand.u32 %v895, 15
    %v942 = vand.u32 %v910, 15
    %v943 = vand.u32 %v925, 15
    %v944 = vand.u32 %v940, 15
    %v945 = vsub.s32 15, %v941
    %v946 = vsub.s32 15, %v942
    %v947 = vsub.s32 15, %v943
    %v948 = vsub.s32 15, %v944
    %vm949 = vcmp.eq.s32.totalorder %v537, %v945
    %vm950 = vcmp.eq.s32.totalorder %v537, %v946
    %vm951 = vcmp.eq.s32.totalorder %v537, %v947
    %vm952 = vcmp.eq.s32.totalorder %v537, %v948
    %v953 = vsel %vm949, 2147483648, %v877
    %v954 = vsel %vm950, 2147483648, %v878
    %v955 = vsel %vm951, 2147483648, %v879
    %v956 = vsel %vm952, 2147483648, %v880
    %v957 = vsel %vm576, %v953, 2147483648
    %v958 = vand.u32 %v957, 65535
    %v959 = vshra.s32 %v957, 16
    %v960 = vcvt.s32.f32 %v958
    %v961 = vcvt.s32.f32 %v959
    %962 = vmax.xlane.f32.xlu0 %v961
    %v963 = vpop.xlane.xlu0 %962
    %vm964 = vcmp.eq.f32.partialorder %v961, %v963
    %v965 = vsel %vm964, %v960, -inf
    %966 = vmax.xlane.f32.xlu0 %v965
    %v967 = vpop.xlane.xlu0 %966
    %v968 = vcvt.f32.s32 %v967
    %v969 = vcvt.f32.s32 %v963
    %v970 = vshll.u32 %v969, 16
    %v971 = vadd.s32 %v970, %v968
    %v972 = vsel %vm576, %v954, 2147483648
    %v973 = vand.u32 %v972, 65535
    %v974 = vshra.s32 %v972, 16
    %v975 = vcvt.s32.f32 %v973
    %v976 = vcvt.s32.f32 %v974
    %977 = vmax.xlane.f32.xlu0 %v976
    %v978 = vpop.xlane.xlu0 %977
    %vm979 = vcmp.eq.f32.partialorder %v976, %v978
    %v980 = vsel %vm979, %v975, -inf
    %981 = vmax.xlane.f32.xlu0 %v980
    %v982 = vpop.xlane.xlu0 %981
    %v983 = vcvt.f32.s32 %v982
    %v984 = vcvt.f32.s32 %v978
    %v985 = vshll.u32 %v984, 16
    %v986 = vadd.s32 %v985, %v983
    %v987 = vsel %vm576, %v955, 2147483648
    %v988 = vand.u32 %v987, 65535
    %v989 = vshra.s32 %v987, 16
    %v990 = vcvt.s32.f32 %v988
    %v991 = vcvt.s32.f32 %v989
    %992 = vmax.xlane.f32.xlu0 %v991
    %v993 = vpop.xlane.xlu0 %992
    %vm994 = vcmp.eq.f32.partialorder %v991, %v993
    %v995 = vsel %vm994, %v990, -inf
    %996 = vmax.xlane.f32.xlu0 %v995
    %v997 = vpop.xlane.xlu0 %996
    %v998 = vcvt.f32.s32 %v997
    %v999 = vcvt.f32.s32 %v993
    %v1000 = vshll.u32 %v999, 16
    %v1001 = vadd.s32 %v1000, %v998
    %v1002 = vsel %vm576, %v956, 2147483648
    %v1003 = vand.u32 %v1002, 65535
    %v1004 = vshra.s32 %v1002, 16
    %v1005 = vcvt.s32.f32 %v1003
    %v1006 = vcvt.s32.f32 %v1004
    %1007 = vmax.xlane.f32.xlu0 %v1006
    %v1008 = vpop.xlane.xlu0 %1007
    %vm1009 = vcmp.eq.f32.partialorder %v1006, %v1008
    %v1010 = vsel %vm1009, %v1005, -inf
    %1011 = vmax.xlane.f32.xlu0 %v1010
    %v1012 = vpop.xlane.xlu0 %1011
    %v1013 = vcvt.f32.s32 %v1012
    %v1014 = vcvt.f32.s32 %v1008
    %v1015 = vshll.u32 %v1014, 16
    %v1016 = vadd.s32 %v1015, %v1013
    %v1017 = vand.u32 %v971, 15
    %v1018 = vand.u32 %v986, 15
    %v1019 = vand.u32 %v1001, 15
    %v1020 = vand.u32 %v1016, 15
    %v1021 = vsub.s32 15, %v1017
    %v1022 = vsub.s32 15, %v1018
    %v1023 = vsub.s32 15, %v1019
    %v1024 = vsub.s32 15, %v1020
    %vm1025 = vcmp.eq.s32.totalorder %v537, %v1021
    %vm1026 = vcmp.eq.s32.totalorder %v537, %v1022
    %vm1027 = vcmp.eq.s32.totalorder %v537, %v1023
    %vm1028 = vcmp.eq.s32.totalorder %v537, %v1024
    %v1029 = vsel %vm1025, 2147483648, %v953
    %v1030 = vsel %vm1026, 2147483648, %v954
    %v1031 = vsel %vm1027, 2147483648, %v955
    %v1032 = vsel %vm1028, 2147483648, %v956
    %v1033 = vsel %vm576, %v1029, 2147483648
    %v1034 = vand.u32 %v1033, 65535
    %v1035 = vshra.s32 %v1033, 16
    %v1036 = vcvt.s32.f32 %v1034
    %v1037 = vcvt.s32.f32 %v1035
    %1038 = vmax.xlane.f32.xlu0 %v1037
    %v1039 = vpop.xlane.xlu0 %1038
    %vm1040 = vcmp.eq.f32.partialorder %v1037, %v1039
    %v1041 = vsel %vm1040, %v1036, -inf
    %1042 = vmax.xlane.f32.xlu0 %v1041
    %v1043 = vpop.xlane.xlu0 %1042
    %v1044 = vcvt.f32.s32 %v1043
    %v1045 = vcvt.f32.s32 %v1039
    %v1046 = vshll.u32 %v1045, 16
    %v1047 = vadd.s32 %v1046, %v1044
    %v1048 = vsel %vm576, %v1030, 2147483648
    %v1049 = vand.u32 %v1048, 65535
    %v1050 = vshra.s32 %v1048, 16
    %v1051 = vcvt.s32.f32 %v1049
    %v1052 = vcvt.s32.f32 %v1050
    %1053 = vmax.xlane.f32.xlu0 %v1052
    %v1054 = vpop.xlane.xlu0 %1053
    %vm1055 = vcmp.eq.f32.partialorder %v1052, %v1054
    %v1056 = vsel %vm1055, %v1051, -inf
    %1057 = vmax.xlane.f32.xlu0 %v1056
    %v1058 = vpop.xlane.xlu0 %1057
    %v1059 = vcvt.f32.s32 %v1058
    %v1060 = vcvt.f32.s32 %v1054
    %v1061 = vshll.u32 %v1060, 16
    %v1062 = vadd.s32 %v1061, %v1059
    %v1063 = vsel %vm576, %v1031, 2147483648
    %v1064 = vand.u32 %v1063, 65535
    %v1065 = vshra.s32 %v1063, 16
    %v1066 = vcvt.s32.f32 %v1064
    %v1067 = vcvt.s32.f32 %v1065
    %1068 = vmax.xlane.f32.xlu0 %v1067
    %v1069 = vpop.xlane.xlu0 %1068
    %vm1070 = vcmp.eq.f32.partialorder %v1067, %v1069
    %v1071 = vsel %vm1070, %v1066, -inf
    %1072 = vmax.xlane.f32.xlu0 %v1071
    %v1073 = vpop.xlane.xlu0 %1072
    %v1074 = vcvt.f32.s32 %v1073
    %v1075 = vcvt.f32.s32 %v1069
    %v1076 = vshll.u32 %v1075, 16
    %v1077 = vadd.s32 %v1076, %v1074
    %v1078 = vsel %vm576, %v1032, 2147483648
    %v1079 = vand.u32 %v1078, 65535
    %v1080 = vshra.s32 %v1078, 16
    %v1081 = vcvt.s32.f32 %v1079
    %v1082 = vcvt.s32.f32 %v1080
    %1083 = vmax.xlane.f32.xlu0 %v1082
    %v1084 = vpop.xlane.xlu0 %1083
    %vm1085 = vcmp.eq.f32.partialorder %v1082, %v1084
    %v1086 = vsel %vm1085, %v1081, -inf
    %1087 = vmax.xlane.f32.xlu0 %v1086
    %v1088 = vpop.xlane.xlu0 %1087
    %v1089 = vcvt.f32.s32 %v1088
    %v1090 = vcvt.f32.s32 %v1084
    %v1091 = vshll.u32 %v1090, 16
    %v1092 = vadd.s32 %v1091, %v1089
    %v1093 = vand.u32 %v1047, 15
    %v1094 = vand.u32 %v1062, 15
    %v1095 = vand.u32 %v1077, 15
    %v1096 = vand.u32 %v1092, 15
    %v1097 = vsub.s32 15, %v1093
    %v1098 = vsub.s32 15, %v1094
    %v1099 = vsub.s32 15, %v1095
    %v1100 = vsub.s32 15, %v1096
    %vm1101 = vcmp.eq.s32.totalorder %v537, %v1097
    %vm1102 = vcmp.eq.s32.totalorder %v537, %v1098
    %vm1103 = vcmp.eq.s32.totalorder %v537, %v1099
    %vm1104 = vcmp.eq.s32.totalorder %v537, %v1100
    %v1105 = vsel %vm645, 1, 0
    %v1106 = vsel %vm646, 1, 0
    %v1107 = vsel %vm721, 1, 0
    %v1108 = vsel %vm722, 1, 0
    %v1109 = vsel %vm797, 1, 0
    %v1110 = vsel %vm798, 1, 0
    %v1111 = vsel %vm873, 1, 0
    %v1112 = vsel %vm874, 1, 0
    %v1113 = vsel %vm949, 1, 0
    %v1114 = vsel %vm950, 1, 0
    %v1115 = vsel %vm1025, 1, 0
    %v1116 = vsel %vm1026, 1, 0
    %v1117 = vsel %vm1101, 1, 0
    %v1118 = vsel %vm1102, 1, 0
    %v1119 = vsel %vm647, 1, 0
    %v1120 = vsel %vm648, 1, 0
    %v1121 = vsel %vm723, 1, 0
    %v1122 = vsel %vm724, 1, 0
    %v1123 = vsel %vm799, 1, 0
    %v1124 = vsel %vm800, 1, 0
    %v1125 = vsel %vm875, 1, 0
    %v1126 = vsel %vm876, 1, 0
    %v1127 = vsel %vm951, 1, 0
    %v1128 = vsel %vm952, 1, 0
    %v1129 = vsel %vm1027, 1, 0
    %v1130 = vsel %vm1028, 1, 0
    %v1131 = vsel %vm1103, 1, 0
    %v1132 = vsel %vm1104, 1, 0
    %v1133 = vcvt.s32.f32 %v1105
    %v1134 = vcvt.s32.f32 %v1106
    %v1135 = vcvt.s32.f32 %v1107
    %v1136 = vcvt.s32.f32 %v1108
    %v1137 = vcvt.s32.f32 %v1109
    %v1138 = vcvt.s32.f32 %v1110
    %v1139 = vcvt.s32.f32 %v1111
    %v1140 = vcvt.s32.f32 %v1112
    %v1141 = vcvt.s32.f32 %v1113
    %v1142 = vcvt.s32.f32 %v1114
    %v1143 = vcvt.s32.f32 %v1115
    %v1144 = vcvt.s32.f32 %v1116
    %v1145 = vcvt.s32.f32 %v1117
    %v1146 = vcvt.s32.f32 %v1118
    %v1147 = vcvt.s32.f32 %v1119
    %v1148 = vcvt.s32.f32 %v1120
    %v1149 = vcvt.s32.f32 %v1121
    %v1150 = vcvt.s32.f32 %v1122
    %v1151 = vcvt.s32.f32 %v1123
    %v1152 = vcvt.s32.f32 %v1124
    %v1153 = vcvt.s32.f32 %v1125
    %v1154 = vcvt.s32.f32 %v1126
    %v1155 = vcvt.s32.f32 %v1127
    %v1156 = vcvt.s32.f32 %v1128
    %v1157 = vcvt.s32.f32 %v1129
    %v1158 = vcvt.s32.f32 %v1130
    %v1159 = vcvt.s32.f32 %v1131
    %v1160 = vcvt.s32.f32 %v1132
    %v1161 = vpack.c.bf16 %v1134, %v1133
    %v1162 = vpack.c.bf16 %v1136, %v1135
    %v1163 = vpack.c.bf16 %v1138, %v1137
    %v1164 = vpack.c.bf16 %v1140, %v1139
    %v1165 = vpack.c.bf16 %v1142, %v1141
    %v1166 = vpack.c.bf16 %v1144, %v1143
    %v1167 = vpack.c.bf16 %v1146, %v1145
    %v1168 = vpack.c.bf16 %v1148, %v1147
    %v1169 = vpack.c.bf16 %v1150, %v1149
    %v1170 = vpack.c.bf16 %v1152, %v1151
    %v1171 = vpack.c.bf16 %v1154, %v1153
    %v1172 = vpack.c.bf16 %v1156, %v1155
    %v1173 = vpack.c.bf16 %v1158, %v1157
    %v1174 = vpack.c.bf16 %v1160, %v1159
    %v1175 = vpack.c.bf16 %v313, %v312
    %v1176 = vpack.c.bf16 %v315, %v314
    %1179 = vrot.lane.b32.xlu0 %v1175, 125
    %v1180 = vpop.permute.xlu0 %1179
    %1181 = vrot.lane.b32.xlu0 %v1176, 125
    %v1182 = vpop.permute.xlu0 %1181
    %v1184 = vsel %vm233, %v1180, 0
    %v1187 = vsel %vm233, %v1182, 0
    %vm1189 = vcmask 1040384
    %vm1190 = vcmask 1041408
    %v1191 = vsel %vm1189, 4294967295, 65535
    %v1192 = vsel %vm1190, %v1191, 0
    %v1194 = vand.u32 %v320, %v1192
    %1196 = vmatprep.subr.bf16.mxu0 0
    %1197 = vmatpush1.bf16.msra.mxu0 %v1194
    %1198 = vmatprep.subr.bf16.mxu0 0
    %1199 = vmatpush1.bf16.msra.mxu0 0
    %1200 = vmatprep.subr.bf16.mxu0 0
    %1201 = vmatpush1.bf16.msra.mxu0 0
    %1202 = vmatprep.subr.bf16.mxu0 0
    %1203 = vmatpush1.bf16.msra.mxu0 0
    %1204 = vmatprep.subr.bf16.mxu0 0
    %1205 = vmatpush1.bf16.msra.mxu0 0
    %1206 = vmatprep.subr.bf16.mxu0 0
    %1207 = vmatpush1.bf16.msra.mxu0 0
    %1208 = vmatprep.subr.bf16.mxu0 0
    %1209 = vmatpush1.bf16.msra.mxu0 0
    %1210 = vmatprep.subr.bf16.mxu0 0
    %1211 = vmatpush1.bf16.msra.mxu0 0
    %1212 = vmatprep.subr.bf16.mxu0 0
    %1213 = vmatpush1.bf16.msra.mxu0 0
    %1214 = vmatprep.subr.bf16.mxu0 0
    %1215 = vmatpush1.bf16.msra.mxu0 0
    %1216 = vmatprep.subr.bf16.mxu0 0
    %1217 = vmatpush1.bf16.msra.mxu0 0
    %1218 = vmatprep.subr.bf16.mxu0 0
    %1219 = vmatpush1.bf16.msra.mxu0 0
    %1220 = vmatprep.subr.bf16.mxu0 0
    %1221 = vmatpush1.bf16.msra.mxu0 0
    %1222 = vmatprep.subr.bf16.mxu0 0
    %1223 = vmatpush1.bf16.msra.mxu0 0
    %1224 = vmatprep.subr.bf16.mxu0 0
    %1225 = vmatpush1.bf16.msra.mxu0 0
    %1226 = vmatprep.subr.bf16.mxu0 0
    %1227 = vmatpush1.bf16.msra.mxu0 0
    %1228 = vmatprep.mubr.bf16.mxu0 0
    %1229 = vmatmul.mubr.bf16.gmra.mrb[0].mxu0 %v1184
    %v1230 = vpop.f32.mrb[0].mxu0
    %v1231 = vadd.f32 0.0, %v1230
    %v1232 = vpop.f32.mrb[0].mxu0
    %v1233 = vpop.f32.mrb[0].mxu0
    %v1234 = vadd.f32 0.0, %v1233
    %v1235 = vpop.f32.mrb[0].mxu0
    %1236 = vmatprep.mubr.bf16.mxu0 0
    %1237 = vmatmul.mubr.bf16.gmra.mrb[0].mxu0 %v1187
    %v1238 = vpop.f32.mrb[0].mxu0
    %v1239 = vadd.f32 0.0, %v1238
    %v1240 = vpop.f32.mrb[0].mxu0
    %v1241 = vpop.f32.mrb[0].mxu0
    %v1242 = vadd.f32 0.0, %v1241
    %v1243 = vpop.f32.mrb[0].mxu0
    %1244 = vdwg.mxu0
    %v1246 = vlaneseq
    %v1247 = vshrl.u32 %v1246, 7
    %v1248 = vsub.s32 0, %v1247
    %v1249 = vrot.slane %v321, %v1248
    %v1251 = vadd.f32 %v1231, %v1249
    %v1252 = vadd.f32 %v1234, %v1249
    %v1253 = vadd.f32 %v1239, %v1249
    %v1254 = vadd.f32 %v1242, %v1249
    %v1255 = vpack.c.bf16 %v1234, %v1231
    %v1256 = vpack.c.bf16 %v1242, %v1239
    %v1258 = vlaneseq
    %v1259 = vshrl.u32 %v1258, 7
    %v1260 = vsub.s32 0, %v1259
    %v1261 = vrot.slane %v332, %v1260
    %1262 = vrot.lane.b32.xlu0 %v1261, 64
    %v1263 = vpop.permute.xlu0 %1262
    %v1265 = vadd.f32 %v1231, %v1263
    %v1266 = vadd.f32 %v1234, %v1263
    %v1267 = vadd.f32 %v1239, %v1263
    %v1268 = vadd.f32 %v1242, %v1263
    %1270 = vrot.lane.b32.xlu0 %v1255, 96
    %v1271 = vpop.permute.xlu0 %1270
    %v1274 = vsel %vm576, %v1161, 0
    %v1277 = vsel %vm576, %v1162, 0
    %v1280 = vsel %vm576, %v1163, 0
    %v1283 = vsel %vm576, %v1164, 0
    %v1286 = vsel %vm576, %v1165, 0
    %v1289 = vsel %vm576, %v1166, 0
    %v1292 = vsel %vm576, %v1167, 0
    %1294 = vmatprep.subr.bf16.mxu0 0
    %1295 = vmatpush1.bf16.msra.mxu0 %v1271
    %1296 = vmatprep.subr.bf16.mxu0 0
    %1297 = vmatpush1.bf16.msra.mxu0 0
    %1298 = vmatprep.subr.bf16.mxu0 0
    %1299 = vmatpush1.bf16.msra.mxu0 0
    %1300 = vmatprep.subr.bf16.mxu0 0
    %1301 = vmatpush1.bf16.msra.mxu0 0
    %1302 = vmatprep.subr.bf16.mxu0 0
    %1303 = vmatpush1.bf16.msra.mxu0 0
    %1304 = vmatprep.subr.bf16.mxu0 0
    %1305 = vmatpush1.bf16.msra.mxu0 0
    %1306 = vmatprep.subr.bf16.mxu0 0
    %1307 = vmatpush1.bf16.msra.mxu0 0
    %1308 = vmatprep.subr.bf16.mxu0 0
    %1309 = vmatpush1.bf16.msra.mxu0 0
    %1310 = vmatprep.subr.bf16.mxu0 0
    %1311 = vmatpush1.bf16.msra.mxu0 0
    %1312 = vmatprep.subr.bf16.mxu0 0
    %1313 = vmatpush1.bf16.msra.mxu0 0
    %1314 = vmatprep.subr.bf16.mxu0 0
    %1315 = vmatpush1.bf16.msra.mxu0 0
    %1316 = vmatprep.subr.bf16.mxu0 0
    %1317 = vmatpush1.bf16.msra.mxu0 0
    %1318 = vmatprep.subr.bf16.mxu0 0
    %1319 = vmatpush1.bf16.msra.mxu0 0
    %1320 = vmatprep.subr.bf16.mxu0 0
    %1321 = vmatpush1.bf16.msra.mxu0 0
    %1322 = vmatprep.subr.bf16.mxu0 0
    %1323 = vmatpush1.bf16.msra.mxu0 0
    %1324 = vmatprep.subr.bf16.mxu0 0
    %1325 = vmatpush1.bf16.msra.mxu0 0
    %1326 = vmatprep.mubr.bf16.mxu0 0
    %1327 = vmatmul.mubr.bf16.gmra.mrb[0].mxu0 %v1274
    %v1328 = vpop.f32.mrb[0].mxu0
    %v1329 = vadd.f32 0.0, %v1328
    %v1330 = vpop.f32.mrb[0].mxu0
    %v1331 = vpop.f32.mrb[0].mxu0
    %v1332 = vadd.f32 0.0, %v1331
    %v1333 = vpop.f32.mrb[0].mxu0
    %1334 = vmatprep.mubr.bf16.mxu0 0
    %1335 = vmatmul.mubr.bf16.gmra.mrb[0].mxu0 %v1277
    %v1336 = vpop.f32.mrb[0].mxu0
    %v1337 = vadd.f32 0.0, %v1336
    %v1338 = vpop.f32.mrb[0].mxu0
    %v1339 = vpop.f32.mrb[0].mxu0
    %v1340 = vadd.f32 0.0, %v1339
    %v1341 = vpop.f32.mrb[0].mxu0
    %1342 = vmatprep.mubr.bf16.mxu0 0
    %1343 = vmatmul.mubr.bf16.gmra.mrb[0].mxu0 %v1280
    %v1344 = vpop.f32.mrb[0].mxu0
    %v1345 = vadd.f32 0.0, %v1344
    %v1346 = vpop.f32.mrb[0].mxu0
    %v1347 = vpop.f32.mrb[0].mxu0
    %v1348 = vadd.f32 0.0, %v1347
    %v1349 = vpop.f32.mrb[0].mxu0
    %1350 = vmatprep.mubr.bf16.mxu0 0
    %1351 = vmatmul.mubr.bf16.gmra.mrb[0].mxu0 %v1283
    %v1352 = vpop.f32.mrb[0].mxu0
    %v1353 = vadd.f32 0.0, %v1352
    %v1354 = vpop.f32.mrb[0].mxu0
    %v1355 = vpop.f32.mrb[0].mxu0
    %v1356 = vadd.f32 0.0, %v1355
    %v1357 = vpop.f32.mrb[0].mxu0
    %1358 = vmatprep.mubr.bf16.mxu0 0
    %1359 = vmatmul.mubr.bf16.gmra.mrb[0].mxu0 %v1286
    %v1360 = vpop.f32.mrb[0].mxu0
    %v1361 = vadd.f32 0.0, %v1360
    %v1362 = vpop.f32.mrb[0].mxu0
    %v1363 = vpop.f32.mrb[0].mxu0
    %v1364 = vadd.f32 0.0, %v1363
    %v1365 = vpop.f32.mrb[0].mxu0
    %1366 = vmatprep.mubr.bf16.mxu0 0
    %1367 = vmatmul.mubr.bf16.gmra.mrb[0].mxu0 %v1289
    %v1368 = vpop.f32.mrb[0].mxu0
    %v1369 = vadd.f32 0.0, %v1368
    %v1370 = vpop.f32.mrb[0].mxu0
    %v1371 = vpop.f32.mrb[0].mxu0
    %v1372 = vadd.f32 0.0, %v1371
    %v1373 = vpop.f32.mrb[0].mxu0
    %1374 = vmatprep.mubr.bf16.mxu0 0
    %1375 = vmatmul.mubr.bf16.gmra.mrb[0].mxu0 %v1292
    %v1376 = vpop.f32.mrb[0].mxu0
    %v1377 = vadd.f32 0.0, %v1376
    %v1378 = vpop.f32.mrb[0].mxu0
    %v1379 = vpop.f32.mrb[0].mxu0
    %v1380 = vadd.f32 0.0, %v1379
    %v1381 = vpop.f32.mrb[0].mxu0
    %1382 = vdwg.mxu0
    %1384 = vrot.lane.b32.xlu0 %v1256, 96
    %v1385 = vpop.permute.xlu0 %1384
    %v1388 = vsel %vm576, %v1168, 0
    %v1391 = vsel %vm576, %v1169, 0
    %v1394 = vsel %vm576, %v1170, 0
    %v1397 = vsel %vm576, %v1171, 0
    %v1400 = vsel %vm576, %v1172, 0
    %v1403 = vsel %vm576, %v1173, 0
    %v1406 = vsel %vm576, %v1174, 0
    %1408 = vmatprep.subr.bf16.mxu0 0
    %1409 = vmatpush1.bf16.msra.mxu0 %v1385
    %1410 = vmatprep.subr.bf16.mxu0 0
    %1411 = vmatpush1.bf16.msra.mxu0 0
    %1412 = vmatprep.subr.bf16.mxu0 0
    %1413 = vmatpush1.bf16.msra.mxu0 0
    %1414 = vmatprep.subr.bf16.mxu0 0
    %1415 = vmatpush1.bf16.msra.mxu0 0
    %1416 = vmatprep.subr.bf16.mxu0 0
    %1417 = vmatpush1.bf16.msra.mxu0 0
    %1418 = vmatprep.subr.bf16.mxu0 0
    %1419 = vmatpush1.bf16.msra.mxu0 0
    %1420 = vmatprep.subr.bf16.mxu0 0
    %1421 = vmatpush1.bf16.msra.mxu0 0
    %1422 = vmatprep.subr.bf16.mxu0 0
    %1423 = vmatpush1.bf16.msra.mxu0 0
    %1424 = vmatprep.subr.bf16.mxu0 0
    %1425 = vmatpush1.bf16.msra.mxu0 0
    %1426 = vmatprep.subr.bf16.mxu0 0
    %1427 = vmatpush1.bf16.msra.mxu0 0
    %1428 = vmatprep.subr.bf16.mxu0 0
    %1429 = vmatpush1.bf16.msra.mxu0 0
    %1430 = vmatprep.subr.bf16.mxu0 0
    %1431 = vmatpush1.bf16.msra.mxu0 0
    %1432 = vmatprep.subr.bf16.mxu0 0
    %1433 = vmatpush1.bf16.msra.mxu0 0
    %1434 = vmatprep.subr.bf16.mxu0 0
    %1435 = vmatpush1.bf16.msra.mxu0 0
    %1436 = vmatprep.subr.bf16.mxu0 0
    %1437 = vmatpush1.bf16.msra.mxu0 0
    %1438 = vmatprep.subr.bf16.mxu0 0
    %1439 = vmatpush1.bf16.msra.mxu0 0
    %1440 = vmatprep.mubr.bf16.mxu0 0
    %1441 = vmatmul.mubr.bf16.gmra.mrb[0].mxu0 %v1388
    %v1442 = vpop.f32.mrb[0].mxu0
    %v1443 = vadd.f32 0.0, %v1442
    %v1444 = vpop.f32.mrb[0].mxu0
    %v1445 = vpop.f32.mrb[0].mxu0
    %v1446 = vadd.f32 0.0, %v1445
    %v1447 = vpop.f32.mrb[0].mxu0
    %1448 = vmatprep.mubr.bf16.mxu0 0
    %1449 = vmatmul.mubr.bf16.gmra.mrb[0].mxu0 %v1391
    %v1450 = vpop.f32.mrb[0].mxu0
    %v1451 = vadd.f32 0.0, %v1450
    %v1452 = vpop.f32.mrb[0].mxu0
    %v1453 = vpop.f32.mrb[0].mxu0
    %v1454 = vadd.f32 0.0, %v1453
    %v1455 = vpop.f32.mrb[0].mxu0
    %1456 = vmatprep.mubr.bf16.mxu0 0
    %1457 = vmatmul.mubr.bf16.gmra.mrb[0].mxu0 %v1394
    %v1458 = vpop.f32.mrb[0].mxu0
    %v1459 = vadd.f32 0.0, %v1458
    %v1460 = vpop.f32.mrb[0].mxu0
    %v1461 = vpop.f32.mrb[0].mxu0
    %v1462 = vadd.f32 0.0, %v1461
    %v1463 = vpop.f32.mrb[0].mxu0
    %1464 = vmatprep.mubr.bf16.mxu0 0
    %1465 = vmatmul.mubr.bf16.gmra.mrb[0].mxu0 %v1397
    %v1466 = vpop.f32.mrb[0].mxu0
    %v1467 = vadd.f32 0.0, %v1466
    %v1468 = vpop.f32.mrb[0].mxu0
    %v1469 = vpop.f32.mrb[0].mxu0
    %v1470 = vadd.f32 0.0, %v1469
    %v1471 = vpop.f32.mrb[0].mxu0
    %1472 = vmatprep.mubr.bf16.mxu0 0
    %1473 = vmatmul.mubr.bf16.gmra.mrb[0].mxu0 %v1400
    %v1474 = vpop.f32.mrb[0].mxu0
    %v1475 = vadd.f32 0.0, %v1474
    %v1476 = vpop.f32.mrb[0].mxu0
    %v1477 = vpop.f32.mrb[0].mxu0
    %v1478 = vadd.f32 0.0, %v1477
    %v1479 = vpop.f32.mrb[0].mxu0
    %1480 = vmatprep.mubr.bf16.mxu0 0
    %1481 = vmatmul.mubr.bf16.gmra.mrb[0].mxu0 %v1403
    %v1482 = vpop.f32.mrb[0].mxu0
    %v1483 = vadd.f32 0.0, %v1482
    %v1484 = vpop.f32.mrb[0].mxu0
    %v1485 = vpop.f32.mrb[0].mxu0
    %v1486 = vadd.f32 0.0, %v1485
    %v1487 = vpop.f32.mrb[0].mxu0
    %1488 = vmatprep.mubr.bf16.mxu0 0
    %1489 = vmatmul.mubr.bf16.gmra.mrb[0].mxu0 %v1406
    %v1490 = vpop.f32.mrb[0].mxu0
    %v1491 = vadd.f32 0.0, %v1490
    %v1492 = vpop.f32.mrb[0].mxu0
    %v1493 = vpop.f32.mrb[0].mxu0
    %v1494 = vadd.f32 0.0, %v1493
    %v1495 = vpop.f32.mrb[0].mxu0
    %1496 = vdwg.mxu0
    %v1497 = vadd.f32 %v1329, %v1251
    %v1498 = vadd.f32 %v1332, %v1252
    %v1499 = vadd.f32 %v1337, %v1251
    %v1500 = vadd.f32 %v1340, %v1252
    %v1501 = vadd.f32 %v1345, %v1251
    %v1502 = vadd.f32 %v1348, %v1252
    %v1503 = vadd.f32 %v1353, %v1251
    %v1504 = vadd.f32 %v1356, %v1252
    %v1505 = vadd.f32 %v1361, %v1251
    %v1506 = vadd.f32 %v1364, %v1252
    %v1507 = vadd.f32 %v1369, %v1251
    %v1508 = vadd.f32 %v1372, %v1252
    %v1509 = vadd.f32 %v1377, %v1251
    %v1510 = vadd.f32 %v1380, %v1252
    %v1511 = vadd.f32 %v1443, %v1253
    %v1512 = vadd.f32 %v1446, %v1254
    %v1513 = vadd.f32 %v1451, %v1253
    %v1514 = vadd.f32 %v1454, %v1254
    %v1515 = vadd.f32 %v1459, %v1253
    %v1516 = vadd.f32 %v1462, %v1254
    %v1517 = vadd.f32 %v1467, %v1253
    %v1518 = vadd.f32 %v1470, %v1254
    %v1519 = vadd.f32 %v1475, %v1253
    %v1520 = vadd.f32 %v1478, %v1254
    %v1521 = vadd.f32 %v1483, %v1253
    %v1522 = vadd.f32 %v1486, %v1254
    %v1523 = vadd.f32 %v1491, %v1253
    %v1524 = vadd.f32 %v1494, %v1254
    %v1525 = vmax.f32 %v1497, 0.0
    %v1526 = vmax.f32 %v1498, 0.0
    %v1527 = vmax.f32 %v1499, 0.0
    %v1528 = vmax.f32 %v1500, 0.0
    %v1529 = vmax.f32 %v1501, 0.0
    %v1530 = vmax.f32 %v1502, 0.0
    %v1531 = vmax.f32 %v1503, 0.0
    %v1532 = vmax.f32 %v1504, 0.0
    %v1533 = vmax.f32 %v1505, 0.0
    %v1534 = vmax.f32 %v1506, 0.0
    %v1535 = vmax.f32 %v1507, 0.0
    %v1536 = vmax.f32 %v1508, 0.0
    %v1537 = vmax.f32 %v1509, 0.0
    %v1538 = vmax.f32 %v1510, 0.0
    %v1539 = vmax.f32 %v1511, 0.0
    %v1540 = vmax.f32 %v1512, 0.0
    %v1541 = vmax.f32 %v1513, 0.0
    %v1542 = vmax.f32 %v1514, 0.0
    %v1543 = vmax.f32 %v1515, 0.0
    %v1544 = vmax.f32 %v1516, 0.0
    %v1545 = vmax.f32 %v1517, 0.0
    %v1546 = vmax.f32 %v1518, 0.0
    %v1547 = vmax.f32 %v1519, 0.0
    %v1548 = vmax.f32 %v1520, 0.0
    %v1549 = vmax.f32 %v1521, 0.0
    %v1550 = vmax.f32 %v1522, 0.0
    %v1551 = vmax.f32 %v1523, 0.0
    %v1552 = vmax.f32 %v1524, 0.0
    %v1553 = vpack.c.bf16 %v1526, %v1525
    %v1554 = vpack.c.bf16 %v1528, %v1527
    %v1555 = vpack.c.bf16 %v1530, %v1529
    %v1556 = vpack.c.bf16 %v1532, %v1531
    %v1557 = vpack.c.bf16 %v1534, %v1533
    %v1558 = vpack.c.bf16 %v1536, %v1535
    %v1559 = vpack.c.bf16 %v1538, %v1537
    %v1560 = vpack.c.bf16 %v1540, %v1539
    %v1561 = vpack.c.bf16 %v1542, %v1541
    %v1562 = vpack.c.bf16 %v1544, %v1543
    %v1563 = vpack.c.bf16 %v1546, %v1545
    %v1564 = vpack.c.bf16 %v1548, %v1547
    %v1565 = vpack.c.bf16 %v1550, %v1549
    %v1566 = vpack.c.bf16 %v1552, %v1551
    %v1568 = vlaneseq
    %v1569 = vshrl.u32 %v1568, 7
    %v1570 = vsub.s32 0, %v1569
    %v1571 = vrot.slane %v326, %v1570
    %v1577 = vunpack.c.l.b16 %v322
    %v1578 = vunpack.c.l.b16 %v323
    %v1579 = vunpack.c.l.b16 %v324
    %v1580 = vunpack.c.l.b16 %v325
    %v1581 = vpack.c.b16 %v1578, %v1577
    %v1582 = vpack.c.b16 %v1580, %v1579
    %vm1585 = vcmask 261120
    %v1587 = vsel %vm1585, %v1553, 0
    %v1590 = vsel %vm1585, %v1554, 0
    %v1593 = vsel %vm1585, %v1555, 0
    %v1596 = vsel %vm1585, %v1556, 0
    %v1599 = vsel %vm1585, %v1557, 0
    %v1602 = vsel %vm1585, %v1558, 0
    %v1605 = vsel %vm1585, %v1559, 0
    %v1608 = vsel %vm1585, %v1560, 0
    %v1611 = vsel %vm1585, %v1561, 0
    %v1614 = vsel %vm1585, %v1562, 0
    %v1617 = vsel %vm1585, %v1563, 0
    %v1620 = vsel %vm1585, %v1564, 0
    %v1623 = vsel %vm1585, %v1565, 0
    %v1626 = vsel %vm1585, %v1566, 0
    %1628 = vmatprep.subr.bf16.mxu0 0
    %1629 = vmatpush1.bf16.msra.mxu0 %v1581
    %1630 = vmatprep.subr.bf16.mxu0 0
    %1631 = vmatpush1.bf16.msra.mxu0 %v1582
    %1632 = vmatprep.subr.bf16.mxu0 0
    %1633 = vmatpush1.bf16.msra.mxu0 0
    %1634 = vmatprep.subr.bf16.mxu0 0
    %1635 = vmatpush1.bf16.msra.mxu0 0
    %1636 = vmatprep.subr.bf16.mxu0 0
    %1637 = vmatpush1.bf16.msra.mxu0 0
    %1638 = vmatprep.subr.bf16.mxu0 0
    %1639 = vmatpush1.bf16.msra.mxu0 0
    %1640 = vmatprep.subr.bf16.mxu0 0
    %1641 = vmatpush1.bf16.msra.mxu0 0
    %1642 = vmatprep.subr.bf16.mxu0 0
    %1643 = vmatpush1.bf16.msra.mxu0 0
    %1644 = vmatprep.subr.bf16.mxu0 0
    %1645 = vmatpush1.bf16.msra.mxu0 0
    %1646 = vmatprep.subr.bf16.mxu0 0
    %1647 = vmatpush1.bf16.msra.mxu0 0
    %1648 = vmatprep.subr.bf16.mxu0 0
    %1649 = vmatpush1.bf16.msra.mxu0 0
    %1650 = vmatprep.subr.bf16.mxu0 0
    %1651 = vmatpush1.bf16.msra.mxu0 0
    %1652 = vmatprep.subr.bf16.mxu0 0
    %1653 = vmatpush1.bf16.msra.mxu0 0
    %1654 = vmatprep.subr.bf16.mxu0 0
    %1655 = vmatpush1.bf16.msra.mxu0 0
    %1656 = vmatprep.subr.bf16.mxu0 0
    %1657 = vmatpush1.bf16.msra.mxu0 0
    %1658 = vmatprep.subr.bf16.mxu0 0
    %1659 = vmatpush1.bf16.msra.mxu0 0
    %1660 = vmatprep.mubr.bf16.mxu0 0
    %1661 = vmatmul.mubr.bf16.gmra.mrb[0].mxu0 %v1587
    %v1662 = vpop.f32.mrb[0].mxu0
    %v1663 = vadd.f32 %v1571, %v1662
    %v1664 = vpop.f32.mrb[0].mxu0
    %v1665 = vpop.f32.mrb[0].mxu0
    %v1666 = vadd.f32 %v1571, %v1665
    %v1667 = vpop.f32.mrb[0].mxu0
    %1668 = vmatprep.mubr.bf16.mxu0 0
    %1669 = vmatmul.mubr.bf16.gmra.mrb[0].mxu0 %v1590
    %v1670 = vpop.f32.mrb[0].mxu0
    %v1671 = vadd.f32 %v1571, %v1670
    %v1672 = vpop.f32.mrb[0].mxu0
    %v1673 = vpop.f32.mrb[0].mxu0
    %v1674 = vadd.f32 %v1571, %v1673
    %v1675 = vpop.f32.mrb[0].mxu0
    %1676 = vmatprep.mubr.bf16.mxu0 0
    %1677 = vmatmul.mubr.bf16.gmra.mrb[0].mxu0 %v1593
    %v1678 = vpop.f32.mrb[0].mxu0
    %v1679 = vadd.f32 %v1571, %v1678
    %v1680 = vpop.f32.mrb[0].mxu0
    %v1681 = vpop.f32.mrb[0].mxu0
    %v1682 = vadd.f32 %v1571, %v1681
    %v1683 = vpop.f32.mrb[0].mxu0
    %1684 = vmatprep.mubr.bf16.mxu0 0
    %1685 = vmatmul.mubr.bf16.gmra.mrb[0].mxu0 %v1596
    %v1686 = vpop.f32.mrb[0].mxu0
    %v1687 = vadd.f32 %v1571, %v1686
    %v1688 = vpop.f32.mrb[0].mxu0
    %v1689 = vpop.f32.mrb[0].mxu0
    %v1690 = vadd.f32 %v1571, %v1689
    %v1691 = vpop.f32.mrb[0].mxu0
    %1692 = vmatprep.mubr.bf16.mxu0 0
    %1693 = vmatmul.mubr.bf16.gmra.mrb[0].mxu0 %v1599
    %v1694 = vpop.f32.mrb[0].mxu0
    %v1695 = vadd.f32 %v1571, %v1694
    %v1696 = vpop.f32.mrb[0].mxu0
    %v1697 = vpop.f32.mrb[0].mxu0
    %v1698 = vadd.f32 %v1571, %v1697
    %v1699 = vpop.f32.mrb[0].mxu0
    %1700 = vmatprep.mubr.bf16.mxu0 0
    %1701 = vmatmul.mubr.bf16.gmra.mrb[0].mxu0 %v1602
    %v1702 = vpop.f32.mrb[0].mxu0
    %v1703 = vadd.f32 %v1571, %v1702
    %v1704 = vpop.f32.mrb[0].mxu0
    %v1705 = vpop.f32.mrb[0].mxu0
    %v1706 = vadd.f32 %v1571, %v1705
    %v1707 = vpop.f32.mrb[0].mxu0
    %1708 = vmatprep.mubr.bf16.mxu0 0
    %1709 = vmatmul.mubr.bf16.gmra.mrb[0].mxu0 %v1605
    %v1710 = vpop.f32.mrb[0].mxu0
    %v1711 = vadd.f32 %v1571, %v1710
    %v1712 = vpop.f32.mrb[0].mxu0
    %v1713 = vpop.f32.mrb[0].mxu0
    %v1714 = vadd.f32 %v1571, %v1713
    %v1715 = vpop.f32.mrb[0].mxu0
    %1716 = vmatprep.mubr.bf16.mxu0 0
    %1717 = vmatmul.mubr.bf16.gmra.mrb[0].mxu0 %v1608
    %v1718 = vpop.f32.mrb[0].mxu0
    %v1719 = vadd.f32 %v1571, %v1718
    %v1720 = vpop.f32.mrb[0].mxu0
    %v1721 = vpop.f32.mrb[0].mxu0
    %v1722 = vadd.f32 %v1571, %v1721
    %v1723 = vpop.f32.mrb[0].mxu0
    %1724 = vmatprep.mubr.bf16.mxu0 0
    %1725 = vmatmul.mubr.bf16.gmra.mrb[0].mxu0 %v1611
    %v1726 = vpop.f32.mrb[0].mxu0
    %v1727 = vadd.f32 %v1571, %v1726
    %v1728 = vpop.f32.mrb[0].mxu0
    %v1729 = vpop.f32.mrb[0].mxu0
    %v1730 = vadd.f32 %v1571, %v1729
    %v1731 = vpop.f32.mrb[0].mxu0
    %1732 = vmatprep.mubr.bf16.mxu0 0
    %1733 = vmatmul.mubr.bf16.gmra.mrb[0].mxu0 %v1614
    %v1734 = vpop.f32.mrb[0].mxu0
    %v1735 = vadd.f32 %v1571, %v1734
    %v1736 = vpop.f32.mrb[0].mxu0
    %v1737 = vpop.f32.mrb[0].mxu0
    %v1738 = vadd.f32 %v1571, %v1737
    %v1739 = vpop.f32.mrb[0].mxu0
    %1740 = vmatprep.mubr.bf16.mxu0 0
    %1741 = vmatmul.mubr.bf16.gmra.mrb[0].mxu0 %v1617
    %v1742 = vpop.f32.mrb[0].mxu0
    %v1743 = vadd.f32 %v1571, %v1742
    %v1744 = vpop.f32.mrb[0].mxu0
    %v1745 = vpop.f32.mrb[0].mxu0
    %v1746 = vadd.f32 %v1571, %v1745
    %v1747 = vpop.f32.mrb[0].mxu0
    %1748 = vmatprep.mubr.bf16.mxu0 0
    %1749 = vmatmul.mubr.bf16.gmra.mrb[0].mxu0 %v1620
    %v1750 = vpop.f32.mrb[0].mxu0
    %v1751 = vadd.f32 %v1571, %v1750
    %v1752 = vpop.f32.mrb[0].mxu0
    %v1753 = vpop.f32.mrb[0].mxu0
    %v1754 = vadd.f32 %v1571, %v1753
    %v1755 = vpop.f32.mrb[0].mxu0
    %1756 = vmatprep.mubr.bf16.mxu0 0
    %1757 = vmatmul.mubr.bf16.gmra.mrb[0].mxu0 %v1623
    %v1758 = vpop.f32.mrb[0].mxu0
    %v1759 = vadd.f32 %v1571, %v1758
    %v1760 = vpop.f32.mrb[0].mxu0
    %v1761 = vpop.f32.mrb[0].mxu0
    %v1762 = vadd.f32 %v1571, %v1761
    %v1763 = vpop.f32.mrb[0].mxu0
    %1764 = vmatprep.mubr.bf16.mxu0 0
    %1765 = vmatmul.mubr.bf16.gmra.mrb[0].mxu0 %v1626
    %v1766 = vpop.f32.mrb[0].mxu0
    %v1767 = vadd.f32 %v1571, %v1766
    %v1768 = vpop.f32.mrb[0].mxu0
    %v1769 = vpop.f32.mrb[0].mxu0
    %v1770 = vadd.f32 %v1571, %v1769
    %v1771 = vpop.f32.mrb[0].mxu0
    %1772 = vdwg.mxu0
    %v1773 = vmax.f32 %v1663, 0.0
    %v1774 = vmax.f32 %v1666, 0.0
    %v1775 = vmax.f32 %v1671, 0.0
    %v1776 = vmax.f32 %v1674, 0.0
    %v1777 = vmax.f32 %v1679, 0.0
    %v1778 = vmax.f32 %v1682, 0.0
    %v1779 = vmax.f32 %v1687, 0.0
    %v1780 = vmax.f32 %v1690, 0.0
    %v1781 = vmax.f32 %v1695, 0.0
    %v1782 = vmax.f32 %v1698, 0.0
    %v1783 = vmax.f32 %v1703, 0.0
    %v1784 = vmax.f32 %v1706, 0.0
    %v1785 = vmax.f32 %v1711, 0.0
    %v1786 = vmax.f32 %v1714, 0.0
    %v1787 = vmax.f32 %v1719, 0.0
    %v1788 = vmax.f32 %v1722, 0.0
    %v1789 = vmax.f32 %v1727, 0.0
    %v1790 = vmax.f32 %v1730, 0.0
    %v1791 = vmax.f32 %v1735, 0.0
    %v1792 = vmax.f32 %v1738, 0.0
    %v1793 = vmax.f32 %v1743, 0.0
    %v1794 = vmax.f32 %v1746, 0.0
    %v1795 = vmax.f32 %v1751, 0.0
    %v1796 = vmax.f32 %v1754, 0.0
    %v1797 = vmax.f32 %v1759, 0.0
    %v1798 = vmax.f32 %v1762, 0.0
    %v1799 = vmax.f32 %v1767, 0.0
    %v1800 = vmax.f32 %v1770, 0.0
    %v1801 = vpack.c.bf16 %v1774, %v1773
    %v1802 = vpack.c.bf16 %v1776, %v1775
    %v1803 = vpack.c.bf16 %v1778, %v1777
    %v1804 = vpack.c.bf16 %v1780, %v1779
    %v1805 = vpack.c.bf16 %v1782, %v1781
    %v1806 = vpack.c.bf16 %v1784, %v1783
    %v1807 = vpack.c.bf16 %v1786, %v1785
    %v1808 = vpack.c.bf16 %v1788, %v1787
    %v1809 = vpack.c.bf16 %v1790, %v1789
    %v1810 = vpack.c.bf16 %v1792, %v1791
    %v1811 = vpack.c.bf16 %v1794, %v1793
    %v1812 = vpack.c.bf16 %v1796, %v1795
    %v1813 = vpack.c.bf16 %v1798, %v1797
    %v1814 = vpack.c.bf16 %v1800, %v1799
    %v1816 = vlaneseq
    %v1817 = vshrl.u32 %v1816, 7
    %v1818 = vsub.s32 0, %v1817
    %v1819 = vrot.slane %v331, %v1818
    %v1825 = vunpack.c.l.b16 %v327
    %v1826 = vunpack.c.l.b16 %v328
    %v1827 = vunpack.c.l.b16 %v329
    %v1828 = vunpack.c.l.b16 %v330
    %v1829 = vpack.c.b16 %v1826, %v1825
    %v1830 = vpack.c.b16 %v1828, %v1827
    %v1834 = vsel %vm1585, %v1801, 0
    %v1837 = vsel %vm1585, %v1802, 0
    %v1840 = vsel %vm1585, %v1803, 0
    %v1843 = vsel %vm1585, %v1804, 0
    %v1846 = vsel %vm1585, %v1805, 0
    %v1849 = vsel %vm1585, %v1806, 0
    %v1852 = vsel %vm1585, %v1807, 0
    %v1855 = vsel %vm1585, %v1808, 0
    %v1858 = vsel %vm1585, %v1809, 0
    %v1861 = vsel %vm1585, %v1810, 0
    %v1864 = vsel %vm1585, %v1811, 0
    %v1867 = vsel %vm1585, %v1812, 0
    %v1870 = vsel %vm1585, %v1813, 0
    %v1873 = vsel %vm1585, %v1814, 0
    %1875 = vmatprep.subr.bf16.mxu0 0
    %1876 = vmatpush1.bf16.msra.mxu0 %v1829
    %1877 = vmatprep.subr.bf16.mxu0 0
    %1878 = vmatpush1.bf16.msra.mxu0 %v1830
    %1879 = vmatprep.subr.bf16.mxu0 0
    %1880 = vmatpush1.bf16.msra.mxu0 0
    %1881 = vmatprep.subr.bf16.mxu0 0
    %1882 = vmatpush1.bf16.msra.mxu0 0
    %1883 = vmatprep.subr.bf16.mxu0 0
    %1884 = vmatpush1.bf16.msra.mxu0 0
    %1885 = vmatprep.subr.bf16.mxu0 0
    %1886 = vmatpush1.bf16.msra.mxu0 0
    %1887 = vmatprep.subr.bf16.mxu0 0
    %1888 = vmatpush1.bf16.msra.mxu0 0
    %1889 = vmatprep.subr.bf16.mxu0 0
    %1890 = vmatpush1.bf16.msra.mxu0 0
    %1891 = vmatprep.subr.bf16.mxu0 0
    %1892 = vmatpush1.bf16.msra.mxu0 0
    %1893 = vmatprep.subr.bf16.mxu0 0
    %1894 = vmatpush1.bf16.msra.mxu0 0
    %1895 = vmatprep.subr.bf16.mxu0 0
    %1896 = vmatpush1.bf16.msra.mxu0 0
    %1897 = vmatprep.subr.bf16.mxu0 0
    %1898 = vmatpush1.bf16.msra.mxu0 0
    %1899 = vmatprep.subr.bf16.mxu0 0
    %1900 = vmatpush1.bf16.msra.mxu0 0
    %1901 = vmatprep.subr.bf16.mxu0 0
    %1902 = vmatpush1.bf16.msra.mxu0 0
    %1903 = vmatprep.subr.bf16.mxu0 0
    %1904 = vmatpush1.bf16.msra.mxu0 0
    %1905 = vmatprep.subr.bf16.mxu0 0
    %1906 = vmatpush1.bf16.msra.mxu0 0
    %1907 = vmatprep.mubr.bf16.mxu0 0
    %1908 = vmatmul.mubr.bf16.gmra.mrb[0].mxu0 %v1834
    %v1909 = vpop.f32.mrb[0].mxu0
    %v1910 = vadd.f32 %v1819, %v1909
    %v1911 = vpop.f32.mrb[0].mxu0
    %v1912 = vpop.f32.mrb[0].mxu0
    %v1913 = vadd.f32 %v1819, %v1912
    %v1914 = vpop.f32.mrb[0].mxu0
    %1915 = vmatprep.mubr.bf16.mxu0 0
    %1916 = vmatmul.mubr.bf16.gmra.mrb[0].mxu0 %v1837
    %v1917 = vpop.f32.mrb[0].mxu0
    %v1918 = vadd.f32 %v1819, %v1917
    %v1919 = vpop.f32.mrb[0].mxu0
    %v1920 = vpop.f32.mrb[0].mxu0
    %v1921 = vadd.f32 %v1819, %v1920
    %v1922 = vpop.f32.mrb[0].mxu0
    %1923 = vmatprep.mubr.bf16.mxu0 0
    %1924 = vmatmul.mubr.bf16.gmra.mrb[0].mxu0 %v1840
    %v1925 = vpop.f32.mrb[0].mxu0
    %v1926 = vadd.f32 %v1819, %v1925
    %v1927 = vpop.f32.mrb[0].mxu0
    %v1928 = vpop.f32.mrb[0].mxu0
    %v1929 = vadd.f32 %v1819, %v1928
    %v1930 = vpop.f32.mrb[0].mxu0
    %1931 = vmatprep.mubr.bf16.mxu0 0
    %1932 = vmatmul.mubr.bf16.gmra.mrb[0].mxu0 %v1843
    %v1933 = vpop.f32.mrb[0].mxu0
    %v1934 = vadd.f32 %v1819, %v1933
    %v1935 = vpop.f32.mrb[0].mxu0
    %v1936 = vpop.f32.mrb[0].mxu0
    %v1937 = vadd.f32 %v1819, %v1936
    %v1938 = vpop.f32.mrb[0].mxu0
    %1939 = vmatprep.mubr.bf16.mxu0 0
    %1940 = vmatmul.mubr.bf16.gmra.mrb[0].mxu0 %v1846
    %v1941 = vpop.f32.mrb[0].mxu0
    %v1942 = vadd.f32 %v1819, %v1941
    %v1943 = vpop.f32.mrb[0].mxu0
    %v1944 = vpop.f32.mrb[0].mxu0
    %v1945 = vadd.f32 %v1819, %v1944
    %v1946 = vpop.f32.mrb[0].mxu0
    %1947 = vmatprep.mubr.bf16.mxu0 0
    %1948 = vmatmul.mubr.bf16.gmra.mrb[0].mxu0 %v1849
    %v1949 = vpop.f32.mrb[0].mxu0
    %v1950 = vadd.f32 %v1819, %v1949
    %v1951 = vpop.f32.mrb[0].mxu0
    %v1952 = vpop.f32.mrb[0].mxu0
    %v1953 = vadd.f32 %v1819, %v1952
    %v1954 = vpop.f32.mrb[0].mxu0
    %1955 = vmatprep.mubr.bf16.mxu0 0
    %1956 = vmatmul.mubr.bf16.gmra.mrb[0].mxu0 %v1852
    %v1957 = vpop.f32.mrb[0].mxu0
    %v1958 = vadd.f32 %v1819, %v1957
    %v1959 = vpop.f32.mrb[0].mxu0
    %v1960 = vpop.f32.mrb[0].mxu0
    %v1961 = vadd.f32 %v1819, %v1960
    %v1962 = vpop.f32.mrb[0].mxu0
    %1963 = vmatprep.mubr.bf16.mxu0 0
    %1964 = vmatmul.mubr.bf16.gmra.mrb[0].mxu0 %v1855
    %v1965 = vpop.f32.mrb[0].mxu0
    %v1966 = vadd.f32 %v1819, %v1965
    %v1967 = vpop.f32.mrb[0].mxu0
    %v1968 = vpop.f32.mrb[0].mxu0
    %v1969 = vadd.f32 %v1819, %v1968
    %v1970 = vpop.f32.mrb[0].mxu0
    %1971 = vmatprep.mubr.bf16.mxu0 0
    %1972 = vmatmul.mubr.bf16.gmra.mrb[0].mxu0 %v1858
    %v1973 = vpop.f32.mrb[0].mxu0
    %v1974 = vadd.f32 %v1819, %v1973
    %v1975 = vpop.f32.mrb[0].mxu0
    %v1976 = vpop.f32.mrb[0].mxu0
    %v1977 = vadd.f32 %v1819, %v1976
    %v1978 = vpop.f32.mrb[0].mxu0
    %1979 = vmatprep.mubr.bf16.mxu0 0
    %1980 = vmatmul.mubr.bf16.gmra.mrb[0].mxu0 %v1861
    %v1981 = vpop.f32.mrb[0].mxu0
    %v1982 = vadd.f32 %v1819, %v1981
    %v1983 = vpop.f32.mrb[0].mxu0
    %v1984 = vpop.f32.mrb[0].mxu0
    %v1985 = vadd.f32 %v1819, %v1984
    %v1986 = vpop.f32.mrb[0].mxu0
    %1987 = vmatprep.mubr.bf16.mxu0 0
    %1988 = vmatmul.mubr.bf16.gmra.mrb[0].mxu0 %v1864
    %v1989 = vpop.f32.mrb[0].mxu0
    %v1990 = vadd.f32 %v1819, %v1989
    %v1991 = vpop.f32.mrb[0].mxu0
    %v1992 = vpop.f32.mrb[0].mxu0
    %v1993 = vadd.f32 %v1819, %v1992
    %v1994 = vpop.f32.mrb[0].mxu0
    %1995 = vmatprep.mubr.bf16.mxu0 0
    %1996 = vmatmul.mubr.bf16.gmra.mrb[0].mxu0 %v1867
    %v1997 = vpop.f32.mrb[0].mxu0
    %v1998 = vadd.f32 %v1819, %v1997
    %v1999 = vpop.f32.mrb[0].mxu0
    %v2000 = vpop.f32.mrb[0].mxu0
    %v2001 = vadd.f32 %v1819, %v2000
    %v2002 = vpop.f32.mrb[0].mxu0
    %2003 = vmatprep.mubr.bf16.mxu0 0
    %2004 = vmatmul.mubr.bf16.gmra.mrb[0].mxu0 %v1870
    %v2005 = vpop.f32.mrb[0].mxu0
    %v2006 = vadd.f32 %v1819, %v2005
    %v2007 = vpop.f32.mrb[0].mxu0
    %v2008 = vpop.f32.mrb[0].mxu0
    %v2009 = vadd.f32 %v1819, %v2008
    %v2010 = vpop.f32.mrb[0].mxu0
    %2011 = vmatprep.mubr.bf16.mxu0 0
    %2012 = vmatmul.mubr.bf16.gmra.mrb[0].mxu0 %v1873
    %v2013 = vpop.f32.mrb[0].mxu0
    %v2014 = vadd.f32 %v1819, %v2013
    %v2015 = vpop.f32.mrb[0].mxu0
    %v2016 = vpop.f32.mrb[0].mxu0
    %v2017 = vadd.f32 %v1819, %v2016
    %v2018 = vpop.f32.mrb[0].mxu0
    %2019 = vdwg.mxu0
    %v2020 = vmax.f32 %v1910, 0.0
    %v2021 = vmax.f32 %v1913, 0.0
    %v2022 = vmax.f32 %v1918, 0.0
    %v2023 = vmax.f32 %v1921, 0.0
    %v2024 = vmax.f32 %v1926, 0.0
    %v2025 = vmax.f32 %v1929, 0.0
    %v2026 = vmax.f32 %v1934, 0.0
    %v2027 = vmax.f32 %v1937, 0.0
    %v2028 = vmax.f32 %v1942, 0.0
    %v2029 = vmax.f32 %v1945, 0.0
    %v2030 = vmax.f32 %v1950, 0.0
    %v2031 = vmax.f32 %v1953, 0.0
    %v2032 = vmax.f32 %v1958, 0.0
    %v2033 = vmax.f32 %v1961, 0.0
    %v2034 = vmax.f32 %v1966, 0.0
    %v2035 = vmax.f32 %v1969, 0.0
    %v2036 = vmax.f32 %v1974, 0.0
    %v2037 = vmax.f32 %v1977, 0.0
    %v2038 = vmax.f32 %v1982, 0.0
    %v2039 = vmax.f32 %v1985, 0.0
    %v2040 = vmax.f32 %v1990, 0.0
    %v2041 = vmax.f32 %v1993, 0.0
    %v2042 = vmax.f32 %v1998, 0.0
    %v2043 = vmax.f32 %v2001, 0.0
    %v2044 = vmax.f32 %v2006, 0.0
    %v2045 = vmax.f32 %v2009, 0.0
    %v2046 = vmax.f32 %v2014, 0.0
    %v2047 = vmax.f32 %v2017, 0.0
    %v2048 = vadd.f32 %v2020, %v2022
    %v2049 = vadd.f32 %v2021, %v2023
    %v2050 = vadd.f32 %v2034, %v2036
    %v2051 = vadd.f32 %v2035, %v2037
    %v2052 = vadd.f32 %v2048, %v2024
    %v2053 = vadd.f32 %v2049, %v2025
    %v2054 = vadd.f32 %v2050, %v2038
    %v2055 = vadd.f32 %v2051, %v2039
    %v2056 = vadd.f32 %v2052, %v2026
    %v2057 = vadd.f32 %v2053, %v2027
    %v2058 = vadd.f32 %v2054, %v2040
    %v2059 = vadd.f32 %v2055, %v2041
    %v2060 = vadd.f32 %v2056, %v2028
    %v2061 = vadd.f32 %v2057, %v2029
    %v2062 = vadd.f32 %v2058, %v2042
    %v2063 = vadd.f32 %v2059, %v2043
    %v2064 = vadd.f32 %v2060, %v2030
    %v2065 = vadd.f32 %v2061, %v2031
    %v2066 = vadd.f32 %v2062, %v2044
    %v2067 = vadd.f32 %v2063, %v2045
    %v2068 = vadd.f32 %v2064, %v2032
    %v2069 = vadd.f32 %v2065, %v2033
    %v2070 = vadd.f32 %v2066, %v2046
    %v2071 = vadd.f32 %v2067, %v2047
    %v2072 = vmul.f32 %v2068, 0.14285715
    %v2073 = vmul.f32 %v2069, 0.14285715
    %v2074 = vmul.f32 %v2070, 0.14285715
    %v2075 = vmul.f32 %v2071, 0.14285715
    %2080 = vrot.lane.b32.xlu0 %v2072, 64
    %v2081 = vpop.permute.xlu0 %2080
    %2082 = vrot.lane.b32.xlu0 %v2073, 64
    %v2083 = vpop.permute.xlu0 %2082
    %2084 = vrot.lane.b32.xlu0 %v2074, 64
    %v2085 = vpop.permute.xlu0 %2084
    %2086 = vrot.lane.b32.xlu0 %v2075, 64
    %v2087 = vpop.permute.xlu0 %2086
    %v2092 = vadd.f32 %v1265, %v2081
    %v2093 = vadd.f32 %v1266, %v2083
    %v2094 = vadd.f32 %v1267, %v2085
    %v2095 = vadd.f32 %v1268, %v2087
    %v2096 = vmax.f32 %v2092, 0.0
    %v2097 = vmax.f32 %v2093, 0.0
    %v2098 = vmax.f32 %v2094, 0.0
    %v2099 = vmax.f32 %v2095, 0.0
    %v2100 = vmul.f32 %v2096, %v254
    %v2101 = vmul.f32 %v2097, %v255
    %v2102 = vmul.f32 %v2098, %v256
    %v2103 = vmul.f32 %v2099, %v257
    %v2104 = vadd.f32 %v2100, %v266
    %v2105 = vadd.f32 %v2101, %v267
    %v2106 = vadd.f32 %v2102, %v268
    %v2107 = vadd.f32 %v2103, %v269
    %v2108 = vld [vmem:[%s10] sm:$0xff]
    %v2109 = vld [vmem:[%s10 + $0x8] sm:$0xff]
    %v2110 = vld [vmem:[%s10 + $0x10] sm:$0xff]
    %v2111 = vld [vmem:[%s10 + $0x18] sm:$0xff]
    %v2112 = vld [vmem:[#allocation16] sm:$0x1]
    %v2113 = vld [vmem:[#allocation17] sm:$0xf]
    %v2114 = vld [vmem:[#allocation17 + $0x4] sm:$0xf]
    %v2115 = vld [vmem:[#allocation17 + $0x8] sm:$0xf]
    %v2116 = vld [vmem:[#allocation17 + $0xc] sm:$0xf]
    %v2117 = vld [vmem:[#allocation17 + $0x10] sm:$0xf]
    %v2118 = vld [vmem:[#allocation17 + $0x14] sm:$0xf]
    %v2119 = vld [vmem:[#allocation17 + $0x18] sm:$0xf]
    %v2120 = vld [vmem:[#allocation17 + $0x1c] sm:$0xf]
    %v2121 = vld [vmem:[#allocation19] sm:$0x1]
    %v2122 = vld [vmem:[#allocation20] sm:$0xf]
    %v2123 = vld [vmem:[#allocation20 + $0x4] sm:$0xf]
    %v2124 = vld [vmem:[#allocation20 + $0x8] sm:$0xf]
    %v2125 = vld [vmem:[#allocation20 + $0xc] sm:$0xf]
    %v2126 = vld [vmem:[#allocation20 + $0x10] sm:$0xf]
    %v2127 = vld [vmem:[#allocation20 + $0x14] sm:$0xf]
    %v2128 = vld [vmem:[#allocation20 + $0x18] sm:$0xf]
    %v2129 = vld [vmem:[#allocation20 + $0x1c] sm:$0xf]
    %v2130 = vld [vmem:[%s15] sm:$0x1]
    %v2131 = vld [vmem:[%s16] sm:$0x1]
    %v2132 = vmul.f32 %v2104, %v2104
    %v2133 = vmul.f32 %v2105, %v2105
    %v2134 = vmul.f32 %v2106, %v2106
    %v2135 = vmul.f32 %v2107, %v2107
    %2140 = vrot.lane.b32.xlu0 %v2132, 64
    %v2141 = vpop.permute.xlu0 %2140
    %2142 = vrot.lane.b32.xlu0 %v2133, 64
    %v2143 = vpop.permute.xlu0 %2142
    %2144 = vrot.lane.b32.xlu0 %v2134, 64
    %v2145 = vpop.permute.xlu0 %2144
    %2146 = vrot.lane.b32.xlu0 %v2135, 64
    %v2147 = vpop.permute.xlu0 %2146
    %v2152 = vsel %vm1585, %v2141, 0.0
    %2153 = vadd.xlane.f32.xlu0 %v2152
    %v2154 = vpop.xlane.xlu0 %2153
    %v2155 = vsel %vm1585, %v2143, 0.0
    %2156 = vadd.xlane.f32.xlu0 %v2155
    %v2157 = vpop.xlane.xlu0 %2156
    %v2158 = vsel %vm1585, %v2145, 0.0
    %2159 = vadd.xlane.f32.xlu0 %v2158
    %v2160 = vpop.xlane.xlu0 %2159
    %v2161 = vsel %vm1585, %v2147, 0.0
    %2162 = vadd.xlane.f32.xlu0 %v2161
    %v2163 = vpop.xlane.xlu0 %2162
    %v2164 = vmul.f32 %v2104, 2.0
    %v2165 = vmul.f32 %v2105, 2.0
    %v2166 = vmul.f32 %v2106, 2.0
    %v2167 = vmul.f32 %v2107, 2.0
    %2172 = vrot.lane.b32.xlu0 %v2164, 64
    %v2173 = vpop.permute.xlu0 %2172
    %2174 = vrot.lane.b32.xlu0 %v2165, 64
    %v2175 = vpop.permute.xlu0 %2174
    %2176 = vrot.lane.b32.xlu0 %v2166, 64
    %v2177 = vpop.permute.xlu0 %2176
    %2178 = vrot.lane.b32.xlu0 %v2167, 64
    %v2179 = vpop.permute.xlu0 %2178
    %v2184 = vsel %vm1585, %v2173, -1.0
    %v2185 = vsel %vm1585, %v2175, -1.0
    %v2186 = vsel %vm1585, %v2177, -1.0
    %v2187 = vsel %vm1585, %v2179, -1.0
    %2192 = vrot.lane.b32.xlu0 %v2104, 64
    %v2193 = vpop.permute.xlu0 %2192
    %2194 = vrot.lane.b32.xlu0 %v2105, 64
    %v2195 = vpop.permute.xlu0 %2194
    %2196 = vrot.lane.b32.xlu0 %v2106, 64
    %v2197 = vpop.permute.xlu0 %2196
    %2198 = vrot.lane.b32.xlu0 %v2107, 64
    %v2199 = vpop.permute.xlu0 %2198
    %v2204 = vsel %vm1585, %v2193, %v2154
    %v2205 = vsel %vm1585, %v2195, %v2157
    %v2206 = vsel %vm1585, %v2197, %v2160
    %v2207 = vsel %vm1585, %v2199, %v2163
    %vm2208 = vcmask 269312
    %v2210 = vsel %vm2208, %v2184, 0
    %v2213 = vsel %vm2208, %v2185, 0
    %v2216 = vsel %vm2208, %v2204, 0
    %v2219 = vsel %vm2208, %v2205, 0
    %2221 = vmatprep.subr.mxu0 0.0
    %2222 = vmatpush1.xpose.msra.mxu0 %v2216
    %2223 = vmatprep.subr.mxu0 0.0
    %2224 = vmatpush1.xpose.msra.mxu0 %v2219
    %2225 = vmatprep.subr.mxu0 0.0
    %2226 = vmatpush1.xpose.msra.mxu0 0.0
    %2227 = vmatprep.subr.mxu0 0.0
    %2228 = vmatpush1.xpose.msra.mxu0 0.0
    %2229 = vmatprep.subr.mxu0 0.0
    %2230 = vmatpush1.xpose.msra.mxu0 0.0
    %2231 = vmatprep.subr.mxu0 0.0
    %2232 = vmatpush1.xpose.msra.mxu0 0.0
    %2233 = vmatprep.subr.mxu0 0.0
    %2234 = vmatpush1.xpose.msra.mxu0 0.0
    %2235 = vmatprep.subr.mxu0 0.0
    %2236 = vmatpush1.xpose.msra.mxu0 0.0
    %2237 = vmatprep.subr.mxu0 0.0
    %2238 = vmatpush1.xpose.msra.mxu0 0.0
    %2239 = vmatprep.subr.mxu0 0.0
    %2240 = vmatpush1.xpose.msra.mxu0 0.0
    %2241 = vmatprep.subr.mxu0 0.0
    %2242 = vmatpush1.xpose.msra.mxu0 0.0
    %2243 = vmatprep.subr.mxu0 0.0
    %2244 = vmatpush1.xpose.msra.mxu0 0.0
    %2245 = vmatprep.subr.mxu0 0.0
    %2246 = vmatpush1.xpose.msra.mxu0 0.0
    %2247 = vmatprep.subr.mxu0 0.0
    %2248 = vmatpush1.xpose.msra.mxu0 0.0
    %2249 = vmatprep.subr.mxu0 0.0
    %2250 = vmatpush1.xpose.msra.mxu0 0.0
    %2251 = vmatprep.subr.mxu0 0.0
    %2252 = vmatpush1.xpose.msra.mxu0 0.0
    %2253 = vmatprep.subr.mxu0 0.0
    %2254 = vmatpush1.xpose.msra.mxu0 0.0
    %2255 = vmatprep.subr.mxu0 0.0
    %2256 = vmatpush1.xpose.msra.mxu0 0.0
    %2257 = vmatprep.subr.mxu0 0.0
    %2258 = vmatpush1.xpose.msra.mxu0 0.0
    %2259 = vmatprep.subr.mxu0 0.0
    %2260 = vmatpush1.xpose.msra.mxu0 0.0
    %2261 = vmatprep.subr.mxu0 0.0
    %2262 = vmatpush1.xpose.msra.mxu0 0.0
    %2263 = vmatprep.subr.mxu0 0.0
    %2264 = vmatpush1.xpose.msra.mxu0 0.0
    %2265 = vmatprep.subr.mxu0 0.0
    %2266 = vmatpush1.xpose.msra.mxu0 0.0
    %2267 = vmatprep.subr.mxu0 0.0
    %2268 = vmatpush1.xpose.msra.mxu0 0.0
    %2269 = vmatprep.subr.mxu0 0.0
    %2270 = vmatpush1.xpose.msra.mxu0 0.0
    %2271 = vmatprep.subr.mxu0 0.0
    %2272 = vmatpush1.xpose.msra.mxu0 0.0
    %2273 = vmatprep.subr.mxu0 0.0
    %2274 = vmatpush1.xpose.msra.mxu0 0.0
    %2275 = vmatprep.subr.mxu0 0.0
    %2276 = vmatpush1.xpose.msra.mxu0 0.0
    %2277 = vmatprep.subr.mxu0 0.0
    %2278 = vmatpush1.xpose.msra.mxu0 0.0
    %2279 = vmatprep.subr.mxu0 0.0
    %2280 = vmatpush1.xpose.msra.mxu0 0.0
    %2281 = vmatprep.subr.mxu0 0.0
    %2282 = vmatpush1.xpose.msra.mxu0 0.0
    %2283 = vmatprep.subr.mxu0 0.0
    %2284 = vmatpush1.xpose.msra.mxu0 0.0
    %2285 = vmatprep.mubr.f32.mxu0 0.0
    %2286 = vmatmul.mubr.f32.gmra.mrb[0].mxu0 %v2210
    %v2287 = vpop.f32.mrb[0].mxu0
    %v2288 = vadd.f32 0.0, %v2287
    %v2289 = vpop.f32.mrb[0].mxu0
    %2290 = vmatprep.mubr.f32.mxu0 0.0
    %2291 = vmatmul.mubr.f32.gmra.mrb[0].mxu0 %v2213
    %v2292 = vpop.f32.mrb[0].mxu0
    %v2293 = vadd.f32 0.0, %v2292
    %v2294 = vpop.f32.mrb[0].mxu0
    %2295 = vdwg.mxu0
    %v2297 = vsel %vm2208, %v2186, 0
    %v2300 = vsel %vm2208, %v2187, 0
    %v2303 = vsel %vm2208, %v2206, 0
    %v2306 = vsel %vm2208, %v2207, 0
    %2308 = vmatprep.subr.mxu0 0.0
    %2309 = vmatpush1.xpose.msra.mxu0 %v2303
    %2310 = vmatprep.subr.mxu0 0.0
    %2311 = vmatpush1.xpose.msra.mxu0 %v2306
    %2312 = vmatprep.subr.mxu0 0.0
    %2313 = vmatpush1.xpose.msra.mxu0 0.0
    %2314 = vmatprep.subr.mxu0 0.0
    %2315 = vmatpush1.xpose.msra.mxu0 0.0
    %2316 = vmatprep.subr.mxu0 0.0
    %2317 = vmatpush1.xpose.msra.mxu0 0.0
    %2318 = vmatprep.subr.mxu0 0.0
    %2319 = vmatpush1.xpose.msra.mxu0 0.0
    %2320 = vmatprep.subr.mxu0 0.0
    %2321 = vmatpush1.xpose.msra.mxu0 0.0
    %2322 = vmatprep.subr.mxu0 0.0
    %2323 = vmatpush1.xpose.msra.mxu0 0.0
    %2324 = vmatprep.subr.mxu0 0.0
    %2325 = vmatpush1.xpose.msra.mxu0 0.0
    %2326 = vmatprep.subr.mxu0 0.0
    %2327 = vmatpush1.xpose.msra.mxu0 0.0
    %2328 = vmatprep.subr.mxu0 0.0
    %2329 = vmatpush1.xpose.msra.mxu0 0.0
    %2330 = vmatprep.subr.mxu0 0.0
    %2331 = vmatpush1.xpose.msra.mxu0 0.0
    %2332 = vmatprep.subr.mxu0 0.0
    %2333 = vmatpush1.xpose.msra.mxu0 0.0
    %2334 = vmatprep.subr.mxu0 0.0
    %2335 = vmatpush1.xpose.msra.mxu0 0.0
    %2336 = vmatprep.subr.mxu0 0.0
    %2337 = vmatpush1.xpose.msra.mxu0 0.0
    %2338 = vmatprep.subr.mxu0 0.0
    %2339 = vmatpush1.xpose.msra.mxu0 0.0
    %2340 = vmatprep.subr.mxu0 0.0
    %2341 = vmatpush1.xpose.msra.mxu0 0.0
    %2342 = vmatprep.subr.mxu0 0.0
    %2343 = vmatpush1.xpose.msra.mxu0 0.0
    %2344 = vmatprep.subr.mxu0 0.0
    %2345 = vmatpush1.xpose.msra.mxu0 0.0
    %2346 = vmatprep.subr.mxu0 0.0
    %2347 = vmatpush1.xpose.msra.mxu0 0.0
    %2348 = vmatprep.subr.mxu0 0.0
    %2349 = vmatpush1.xpose.msra.mxu0 0.0
    %2350 = vmatprep.subr.mxu0 0.0
    %2351 = vmatpush1.xpose.msra.mxu0 0.0
    %2352 = vmatprep.subr.mxu0 0.0
    %2353 = vmatpush1.xpose.msra.mxu0 0.0
    %2354 = vmatprep.subr.mxu0 0.0
    %2355 = vmatpush1.xpose.msra.mxu0 0.0
    %2356 = vmatprep.subr.mxu0 0.0
    %2357 = vmatpush1.xpose.msra.mxu0 0.0
    %2358 = vmatprep.subr.mxu0 0.0
    %2359 = vmatpush1.xpose.msra.mxu0 0.0
    %2360 = vmatprep.subr.mxu0 0.0
    %2361 = vmatpush1.xpose.msra.mxu0 0.0
    %2362 = vmatprep.subr.mxu0 0.0
    %2363 = vmatpush1.xpose.msra.mxu0 0.0
    %2364 = vmatprep.subr.mxu0 0.0
    %2365 = vmatpush1.xpose.msra.mxu0 0.0
    %2366 = vmatprep.subr.mxu0 0.0
    %2367 = vmatpush1.xpose.msra.mxu0 0.0
    %2368 = vmatprep.subr.mxu0 0.0
    %2369 = vmatpush1.xpose.msra.mxu0 0.0
    %2370 = vmatprep.subr.mxu0 0.0
    %2371 = vmatpush1.xpose.msra.mxu0 0.0
    %2372 = vmatprep.mubr.f32.mxu0 0.0
    %2373 = vmatmul.mubr.f32.gmra.mrb[0].mxu0 %v2297
    %v2374 = vpop.f32.mrb[0].mxu0
    %v2375 = vadd.f32 0.0, %v2374
    %v2376 = vpop.f32.mrb[0].mxu0
    %2377 = vmatprep.mubr.f32.mxu0 0.0
    %2378 = vmatmul.mubr.f32.gmra.mrb[0].mxu0 %v2300
    %v2379 = vpop.f32.mrb[0].mxu0
    %v2380 = vadd.f32 0.0, %v2379
    %v2381 = vpop.f32.mrb[0].mxu0
    %2382 = vdwg.mxu0
    %vm2387 = vcmp.lt.s32.totalorder %v2288, 0
    %vm2388 = vcmp.lt.s32.totalorder %v2293, 0
    %vm2389 = vcmp.lt.s32.totalorder %v2375, 0
    %vm2390 = vcmp.lt.s32.totalorder %v2380, 0
    %v2391 = vxor.u32 %v2288, 2147483647
    %v2392 = vxor.u32 %v2293, 2147483647
    %v2393 = vxor.u32 %v2375, 2147483647
    %v2394 = vxor.u32 %v2380, 2147483647
    %v2395 = vsel %vm2387, %v2391, %v2288
    %v2396 = vsel %vm2388, %v2392, %v2293
    %v2397 = vsel %vm2389, %v2393, %v2375
    %v2398 = vsel %vm2390, %v2394, %v2380
    %v2399 = vand.u32 %v2395, 4294967280
    %v2400 = vand.u32 %v2396, 4294967280
    %v2401 = vand.u32 %v2397, 4294967280
    %v2402 = vand.u32 %v2398, 4294967280
    %v2403 = vor.u32 %v2399, %v561
    %v2404 = vor.u32 %v2400, %v561
    %v2405 = vor.u32 %v2401, %v561
    %v2406 = vor.u32 %v2402, %v561
    %v2407 = vsel %vm570, 2147483648, %v2403
    %v2408 = vsel %vm571, 2147483648, %v2404
    %v2409 = vsel %vm570, 2147483648, %v2405
    %v2410 = vsel %vm571, 2147483648, %v2406
    %v2411 = vsel %vm576, %v2407, 2147483648
    %v2412 = vand.u32 %v2411, 65535
    %v2413 = vshra.s32 %v2411, 16
    %v2414 = vcvt.s32.f32 %v2412
    %v2415 = vcvt.s32.f32 %v2413
    %2416 = vmax.xlane.f32.xlu0 %v2415
    %v2417 = vpop.xlane.xlu0 %2416
    %vm2418 = vcmp.eq.f32.partialorder %v2415, %v2417
    %v2419 = vsel %vm2418, %v2414, -inf
    %2420 = vmax.xlane.f32.xlu0 %v2419
    %v2421 = vpop.xlane.xlu0 %2420
    %v2422 = vcvt.f32.s32 %v2421
    %v2423 = vcvt.f32.s32 %v2417
    %v2424 = vshll.u32 %v2423, 16
    %v2425 = vadd.s32 %v2424, %v2422
    %v2426 = vsel %vm576, %v2408, 2147483648
    %v2427 = vand.u32 %v2426, 65535
    %v2428 = vshra.s32 %v2426, 16
    %v2429 = vcvt.s32.f32 %v2427
    %v2430 = vcvt.s32.f32 %v2428
    %2431 = vmax.xlane.f32.xlu0 %v2430
    %v2432 = vpop.xlane.xlu0 %2431
    %vm2433 = vcmp.eq.f32.partialorder %v2430, %v2432
    %v2434 = vsel %vm2433, %v2429, -inf
    %2435 = vmax.xlane.f32.xlu0 %v2434
    %v2436 = vpop.xlane.xlu0 %2435
    %v2437 = vcvt.f32.s32 %v2436
    %v2438 = vcvt.f32.s32 %v2432
    %v2439 = vshll.u32 %v2438, 16
    %v2440 = vadd.s32 %v2439, %v2437
    %v2441 = vsel %vm576, %v2409, 2147483648
    %v2442 = vand.u32 %v2441, 65535
    %v2443 = vshra.s32 %v2441, 16
    %v2444 = vcvt.s32.f32 %v2442
    %v2445 = vcvt.s32.f32 %v2443
    %2446 = vmax.xlane.f32.xlu0 %v2445
    %v2447 = vpop.xlane.xlu0 %2446
    %vm2448 = vcmp.eq.f32.partialorder %v2445, %v2447
    %v2449 = vsel %vm2448, %v2444, -inf
    %2450 = vmax.xlane.f32.xlu0 %v2449
    %v2451 = vpop.xlane.xlu0 %2450
    %v2452 = vcvt.f32.s32 %v2451
    %v2453 = vcvt.f32.s32 %v2447
    %v2454 = vshll.u32 %v2453, 16
    %v2455 = vadd.s32 %v2454, %v2452
    %v2456 = vsel %vm576, %v2410, 2147483648
    %v2457 = vand.u32 %v2456, 65535
    %v2458 = vshra.s32 %v2456, 16
    %v2459 = vcvt.s32.f32 %v2457
    %v2460 = vcvt.s32.f32 %v2458
    %2461 = vmax.xlane.f32.xlu0 %v2460
    %v2462 = vpop.xlane.xlu0 %2461
    %vm2463 = vcmp.eq.f32.partialorder %v2460, %v2462
    %v2464 = vsel %vm2463, %v2459, -inf
    %2465 = vmax.xlane.f32.xlu0 %v2464
    %v2466 = vpop.xlane.xlu0 %2465
    %v2467 = vcvt.f32.s32 %v2466
    %v2468 = vcvt.f32.s32 %v2462
    %v2469 = vshll.u32 %v2468, 16
    %v2470 = vadd.s32 %v2469, %v2467
    %v2471 = vand.u32 %v2425, 15
    %v2472 = vand.u32 %v2440, 15
    %v2473 = vand.u32 %v2455, 15
    %v2474 = vand.u32 %v2470, 15
    %v2475 = vsub.s32 15, %v2471
    %v2476 = vsub.s32 15, %v2472
    %v2477 = vsub.s32 15, %v2473
    %v2478 = vsub.s32 15, %v2474
    %vm2479 = vcmp.eq.s32.totalorder %v537, %v2475
    %vm2480 = vcmp.eq.s32.totalorder %v537, %v2476
    %vm2481 = vcmp.eq.s32.totalorder %v537, %v2477
    %vm2482 = vcmp.eq.s32.totalorder %v537, %v2478
    %v2483 = vsel %vm2479, 2147483648, %v2407
    %v2484 = vsel %vm2480, 2147483648, %v2408
    %v2485 = vsel %vm2481, 2147483648, %v2409
    %v2486 = vsel %vm2482, 2147483648, %v2410
    %v2487 = vsel %vm576, %v2483, 2147483648
    %v2488 = vand.u32 %v2487, 65535
    %v2489 = vshra.s32 %v2487, 16
    %v2490 = vcvt.s32.f32 %v2488
    %v2491 = vcvt.s32.f32 %v2489
    %2492 = vmax.xlane.f32.xlu0 %v2491
    %v2493 = vpop.xlane.xlu0 %2492
    %vm2494 = vcmp.eq.f32.partialorder %v2491, %v2493
    %v2495 = vsel %vm2494, %v2490, -inf
    %2496 = vmax.xlane.f32.xlu0 %v2495
    %v2497 = vpop.xlane.xlu0 %2496
    %v2498 = vcvt.f32.s32 %v2497
    %v2499 = vcvt.f32.s32 %v2493
    %v2500 = vshll.u32 %v2499, 16
    %v2501 = vadd.s32 %v2500, %v2498
    %v2502 = vsel %vm576, %v2484, 2147483648
    %v2503 = vand.u32 %v2502, 65535
    %v2504 = vshra.s32 %v2502, 16
    %v2505 = vcvt.s32.f32 %v2503
    %v2506 = vcvt.s32.f32 %v2504
    %2507 = vmax.xlane.f32.xlu0 %v2506
    %v2508 = vpop.xlane.xlu0 %2507
    %vm2509 = vcmp.eq.f32.partialorder %v2506, %v2508
    %v2510 = vsel %vm2509, %v2505, -inf
    %2511 = vmax.xlane.f32.xlu0 %v2510
    %v2512 = vpop.xlane.xlu0 %2511
    %v2513 = vcvt.f32.s32 %v2512
    %v2514 = vcvt.f32.s32 %v2508
    %v2515 = vshll.u32 %v2514, 16
    %v2516 = vadd.s32 %v2515, %v2513
    %v2517 = vsel %vm576, %v2485, 2147483648
    %v2518 = vand.u32 %v2517, 65535
    %v2519 = vshra.s32 %v2517, 16
    %v2520 = vcvt.s32.f32 %v2518
    %v2521 = vcvt.s32.f32 %v2519
    %2522 = vmax.xlane.f32.xlu0 %v2521
    %v2523 = vpop.xlane.xlu0 %2522
    %vm2524 = vcmp.eq.f32.partialorder %v2521, %v2523
    %v2525 = vsel %vm2524, %v2520, -inf
    %2526 = vmax.xlane.f32.xlu0 %v2525
    %v2527 = vpop.xlane.xlu0 %2526
    %v2528 = vcvt.f32.s32 %v2527
    %v2529 = vcvt.f32.s32 %v2523
    %v2530 = vshll.u32 %v2529, 16
    %v2531 = vadd.s32 %v2530, %v2528
    %v2532 = vsel %vm576, %v2486, 2147483648
    %v2533 = vand.u32 %v2532, 65535
    %v2534 = vshra.s32 %v2532, 16
    %v2535 = vcvt.s32.f32 %v2533
    %v2536 = vcvt.s32.f32 %v2534
    %2537 = vmax.xlane.f32.xlu0 %v2536
    %v2538 = vpop.xlane.xlu0 %2537
    %vm2539 = vcmp.eq.f32.partialorder %v2536, %v2538
    %v2540 = vsel %vm2539, %v2535, -inf
    %2541 = vmax.xlane.f32.xlu0 %v2540
    %v2542 = vpop.xlane.xlu0 %2541
    %v2543 = vcvt.f32.s32 %v2542
    %v2544 = vcvt.f32.s32 %v2538
    %v2545 = vshll.u32 %v2544, 16
    %v2546 = vadd.s32 %v2545, %v2543
    %v2547 = vand.u32 %v2501, 15
    %v2548 = vand.u32 %v2516, 15
    %v2549 = vand.u32 %v2531, 15
    %v2550 = vand.u32 %v2546, 15
    %v2551 = vsub.s32 15, %v2547
    %v2552 = vsub.s32 15, %v2548
    %v2553 = vsub.s32 15, %v2549
    %v2554 = vsub.s32 15, %v2550
    %vm2555 = vcmp.eq.s32.totalorder %v537, %v2551
    %vm2556 = vcmp.eq.s32.totalorder %v537, %v2552
    %vm2557 = vcmp.eq.s32.totalorder %v537, %v2553
    %vm2558 = vcmp.eq.s32.totalorder %v537, %v2554
    %v2559 = vsel %vm2555, 2147483648, %v2483
    %v2560 = vsel %vm2556, 2147483648, %v2484
    %v2561 = vsel %vm2557, 2147483648, %v2485
    %v2562 = vsel %vm2558, 2147483648, %v2486
    %v2563 = vsel %vm576, %v2559, 2147483648
    %v2564 = vand.u32 %v2563, 65535
    %v2565 = vshra.s32 %v2563, 16
    %v2566 = vcvt.s32.f32 %v2564
    %v2567 = vcvt.s32.f32 %v2565
    %2568 = vmax.xlane.f32.xlu0 %v2567
    %v2569 = vpop.xlane.xlu0 %2568
    %vm2570 = vcmp.eq.f32.partialorder %v2567, %v2569
    %v2571 = vsel %vm2570, %v2566, -inf
    %2572 = vmax.xlane.f32.xlu0 %v2571
    %v2573 = vpop.xlane.xlu0 %2572
    %v2574 = vcvt.f32.s32 %v2573
    %v2575 = vcvt.f32.s32 %v2569
    %v2576 = vshll.u32 %v2575, 16
    %v2577 = vadd.s32 %v2576, %v2574
    %v2578 = vsel %vm576, %v2560, 2147483648
    %v2579 = vand.u32 %v2578, 65535
    %v2580 = vshra.s32 %v2578, 16
    %v2581 = vcvt.s32.f32 %v2579
    %v2582 = vcvt.s32.f32 %v2580
    %2583 = vmax.xlane.f32.xlu0 %v2582
    %v2584 = vpop.xlane.xlu0 %2583
    %vm2585 = vcmp.eq.f32.partialorder %v2582, %v2584
    %v2586 = vsel %vm2585, %v2581, -inf
    %2587 = vmax.xlane.f32.xlu0 %v2586
    %v2588 = vpop.xlane.xlu0 %2587
    %v2589 = vcvt.f32.s32 %v2588
    %v2590 = vcvt.f32.s32 %v2584
    %v2591 = vshll.u32 %v2590, 16
    %v2592 = vadd.s32 %v2591, %v2589
    %v2593 = vsel %vm576, %v2561, 2147483648
    %v2594 = vand.u32 %v2593, 65535
    %v2595 = vshra.s32 %v2593, 16
    %v2596 = vcvt.s32.f32 %v2594
    %v2597 = vcvt.s32.f32 %v2595
    %2598 = vmax.xlane.f32.xlu0 %v2597
    %v2599 = vpop.xlane.xlu0 %2598
    %vm2600 = vcmp.eq.f32.partialorder %v2597, %v2599
    %v2601 = vsel %vm2600, %v2596, -inf
    %2602 = vmax.xlane.f32.xlu0 %v2601
    %v2603 = vpop.xlane.xlu0 %2602
    %v2604 = vcvt.f32.s32 %v2603
    %v2605 = vcvt.f32.s32 %v2599
    %v2606 = vshll.u32 %v2605, 16
    %v2607 = vadd.s32 %v2606, %v2604
    %v2608 = vsel %vm576, %v2562, 2147483648
    %v2609 = vand.u32 %v2608, 65535
    %v2610 = vshra.s32 %v2608, 16
    %v2611 = vcvt.s32.f32 %v2609
    %v2612 = vcvt.s32.f32 %v2610
    %2613 = vmax.xlane.f32.xlu0 %v2612
    %v2614 = vpop.xlane.xlu0 %2613
    %vm2615 = vcmp.eq.f32.partialorder %v2612, %v2614
    %v2616 = vsel %vm2615, %v2611, -inf
    %2617 = vmax.xlane.f32.xlu0 %v2616
    %v2618 = vpop.xlane.xlu0 %2617
    %v2619 = vcvt.f32.s32 %v2618
    %v2620 = vcvt.f32.s32 %v2614
    %v2621 = vshll.u32 %v2620, 16
    %v2622 = vadd.s32 %v2621, %v2619
    %v2623 = vand.u32 %v2577, 15
    %v2624 = vand.u32 %v2592, 15
    %v2625 = vand.u32 %v2607, 15
    %v2626 = vand.u32 %v2622, 15
    %v2627 = vsub.s32 15, %v2623
    %v2628 = vsub.s32 15, %v2624
    %v2629 = vsub.s32 15, %v2625
    %v2630 = vsub.s32 15, %v2626
    %vm2631 = vcmp.eq.s32.totalorder %v537, %v2627
    %vm2632 = vcmp.eq.s32.totalorder %v537, %v2628
    %vm2633 = vcmp.eq.s32.totalorder %v537, %v2629
    %vm2634 = vcmp.eq.s32.totalorder %v537, %v2630
    %v2635 = vsel %vm2631, 2147483648, %v2559
    %v2636 = vsel %vm2632, 2147483648, %v2560
    %v2637 = vsel %vm2633, 2147483648, %v2561
    %v2638 = vsel %vm2634, 2147483648, %v2562
    %v2639 = vsel %vm576, %v2635, 2147483648
    %v2640 = vand.u32 %v2639, 65535
    %v2641 = vshra.s32 %v2639, 16
    %v2642 = vcvt.s32.f32 %v2640
    %v2643 = vcvt.s32.f32 %v2641
    %2644 = vmax.xlane.f32.xlu0 %v2643
    %v2645 = vpop.xlane.xlu0 %2644
    %vm2646 = vcmp.eq.f32.partialorder %v2643, %v2645
    %v2647 = vsel %vm2646, %v2642, -inf
    %2648 = vmax.xlane.f32.xlu0 %v2647
    %v2649 = vpop.xlane.xlu0 %2648
    %v2650 = vcvt.f32.s32 %v2649
    %v2651 = vcvt.f32.s32 %v2645
    %v2652 = vshll.u32 %v2651, 16
    %v2653 = vadd.s32 %v2652, %v2650
    %v2654 = vsel %vm576, %v2636, 2147483648
    %v2655 = vand.u32 %v2654, 65535
    %v2656 = vshra.s32 %v2654, 16
    %v2657 = vcvt.s32.f32 %v2655
    %v2658 = vcvt.s32.f32 %v2656
    %2659 = vmax.xlane.f32.xlu0 %v2658
    %v2660 = vpop.xlane.xlu0 %2659
    %vm2661 = vcmp.eq.f32.partialorder %v2658, %v2660
    %v2662 = vsel %vm2661, %v2657, -inf
    %2663 = vmax.xlane.f32.xlu0 %v2662
    %v2664 = vpop.xlane.xlu0 %2663
    %v2665 = vcvt.f32.s32 %v2664
    %v2666 = vcvt.f32.s32 %v2660
    %v2667 = vshll.u32 %v2666, 16
    %v2668 = vadd.s32 %v2667, %v2665
    %v2669 = vsel %vm576, %v2637, 2147483648
    %v2670 = vand.u32 %v2669, 65535
    %v2671 = vshra.s32 %v2669, 16
    %v2672 = vcvt.s32.f32 %v2670
    %v2673 = vcvt.s32.f32 %v2671
    %2674 = vmax.xlane.f32.xlu0 %v2673
    %v2675 = vpop.xlane.xlu0 %2674
    %vm2676 = vcmp.eq.f32.partialorder %v2673, %v2675
    %v2677 = vsel %vm2676, %v2672, -inf
    %2678 = vmax.xlane.f32.xlu0 %v2677
    %v2679 = vpop.xlane.xlu0 %2678
    %v2680 = vcvt.f32.s32 %v2679
    %v2681 = vcvt.f32.s32 %v2675
    %v2682 = vshll.u32 %v2681, 16
    %v2683 = vadd.s32 %v2682, %v2680
    %v2684 = vsel %vm576, %v2638, 2147483648
    %v2685 = vand.u32 %v2684, 65535
    %v2686 = vshra.s32 %v2684, 16
    %v2687 = vcvt.s32.f32 %v2685
    %v2688 = vcvt.s32.f32 %v2686
    %2689 = vmax.xlane.f32.xlu0 %v2688
    %v2690 = vpop.xlane.xlu0 %2689
    %vm2691 = vcmp.eq.f32.partialorder %v2688, %v2690
    %v2692 = vsel %vm2691, %v2687, -inf
    %2693 = vmax.xlane.f32.xlu0 %v2692
    %v2694 = vpop.xlane.xlu0 %2693
    %v2695 = vcvt.f32.s32 %v2694
    %v2696 = vcvt.f32.s32 %v2690
    %v2697 = vshll.u32 %v2696, 16
    %v2698 = vadd.s32 %v2697, %v2695
    %v2699 = vand.u32 %v2653, 15
    %v2700 = vand.u32 %v2668, 15
    %v2701 = vand.u32 %v2683, 15
    %v2702 = vand.u32 %v2698, 15
    %v2703 = vsub.s32 15, %v2699
    %v2704 = vsub.s32 15, %v2700
    %v2705 = vsub.s32 15, %v2701
    %v2706 = vsub.s32 15, %v2702
    %vm2707 = vcmp.eq.s32.totalorder %v537, %v2703
    %vm2708 = vcmp.eq.s32.totalorder %v537, %v2704
    %vm2709 = vcmp.eq.s32.totalorder %v537, %v2705
    %vm2710 = vcmp.eq.s32.totalorder %v537, %v2706
    %v2711 = vsel %vm2707, 2147483648, %v2635
    %v2712 = vsel %vm2708, 2147483648, %v2636
    %v2713 = vsel %vm2709, 2147483648, %v2637
    %v2714 = vsel %vm2710, 2147483648, %v2638
    %v2715 = vsel %vm576, %v2711, 2147483648
    %v2716 = vand.u32 %v2715, 65535
    %v2717 = vshra.s32 %v2715, 16
    %v2718 = vcvt.s32.f32 %v2716
    %v2719 = vcvt.s32.f32 %v2717
    %2720 = vmax.xlane.f32.xlu0 %v2719
    %v2721 = vpop.xlane.xlu0 %2720
    %vm2722 = vcmp.eq.f32.partialorder %v2719, %v2721
    %v2723 = vsel %vm2722, %v2718, -inf
    %2724 = vmax.xlane.f32.xlu0 %v2723
    %v2725 = vpop.xlane.xlu0 %2724
    %v2726 = vcvt.f32.s32 %v2725
    %v2727 = vcvt.f32.s32 %v2721
    %v2728 = vshll.u32 %v2727, 16
    %v2729 = vadd.s32 %v2728, %v2726
    %v2730 = vsel %vm576, %v2712, 2147483648
    %v2731 = vand.u32 %v2730, 65535
    %v2732 = vshra.s32 %v2730, 16
    %v2733 = vcvt.s32.f32 %v2731
    %v2734 = vcvt.s32.f32 %v2732
    %2735 = vmax.xlane.f32.xlu0 %v2734
    %v2736 = vpop.xlane.xlu0 %2735
    %vm2737 = vcmp.eq.f32.partialorder %v2734, %v2736
    %v2738 = vsel %vm2737, %v2733, -inf
    %2739 = vmax.xlane.f32.xlu0 %v2738
    %v2740 = vpop.xlane.xlu0 %2739
    %v2741 = vcvt.f32.s32 %v2740
    %v2742 = vcvt.f32.s32 %v2736
    %v2743 = vshll.u32 %v2742, 16
    %v2744 = vadd.s32 %v2743, %v2741
    %v2745 = vsel %vm576, %v2713, 2147483648
    %v2746 = vand.u32 %v2745, 65535
    %v2747 = vshra.s32 %v2745, 16
    %v2748 = vcvt.s32.f32 %v2746
    %v2749 = vcvt.s32.f32 %v2747
    %2750 = vmax.xlane.f32.xlu0 %v2749
    %v2751 = vpop.xlane.xlu0 %2750
    %vm2752 = vcmp.eq.f32.partialorder %v2749, %v2751
    %v2753 = vsel %vm2752, %v2748, -inf
    %2754 = vmax.xlane.f32.xlu0 %v2753
    %v2755 = vpop.xlane.xlu0 %2754
    %v2756 = vcvt.f32.s32 %v2755
    %v2757 = vcvt.f32.s32 %v2751
    %v2758 = vshll.u32 %v2757, 16
    %v2759 = vadd.s32 %v2758, %v2756
    %v2760 = vsel %vm576, %v2714, 2147483648
    %v2761 = vand.u32 %v2760, 65535
    %v2762 = vshra.s32 %v2760, 16
    %v2763 = vcvt.s32.f32 %v2761
    %v2764 = vcvt.s32.f32 %v2762
    %2765 = vmax.xlane.f32.xlu0 %v2764
    %v2766 = vpop.xlane.xlu0 %2765
    %vm2767 = vcmp.eq.f32.partialorder %v2764, %v2766
    %v2768 = vsel %vm2767, %v2763, -inf
    %2769 = vmax.xlane.f32.xlu0 %v2768
    %v2770 = vpop.xlane.xlu0 %2769
    %v2771 = vcvt.f32.s32 %v2770
    %v2772 = vcvt.f32.s32 %v2766
    %v2773 = vshll.u32 %v2772, 16
    %v2774 = vadd.s32 %v2773, %v2771
    %v2775 = vand.u32 %v2729, 15
    %v2776 = vand.u32 %v2744, 15
    %v2777 = vand.u32 %v2759, 15
    %v2778 = vand.u32 %v2774, 15
    %v2779 = vsub.s32 15, %v2775
    %v2780 = vsub.s32 15, %v2776
    %v2781 = vsub.s32 15, %v2777
    %v2782 = vsub.s32 15, %v2778
    %vm2783 = vcmp.eq.s32.totalorder %v537, %v2779
    %vm2784 = vcmp.eq.s32.totalorder %v537, %v2780
    %vm2785 = vcmp.eq.s32.totalorder %v537, %v2781
    %vm2786 = vcmp.eq.s32.totalorder %v537, %v2782
    %v2787 = vsel %vm2783, 2147483648, %v2711
    %v2788 = vsel %vm2784, 2147483648, %v2712
    %v2789 = vsel %vm2785, 2147483648, %v2713
    %v2790 = vsel %vm2786, 2147483648, %v2714
    %v2791 = vsel %vm576, %v2787, 2147483648
    %v2792 = vand.u32 %v2791, 65535
    %v2793 = vshra.s32 %v2791, 16
    %v2794 = vcvt.s32.f32 %v2792
    %v2795 = vcvt.s32.f32 %v2793
    %2796 = vmax.xlane.f32.xlu0 %v2795
    %v2797 = vpop.xlane.xlu0 %2796
    %vm2798 = vcmp.eq.f32.partialorder %v2795, %v2797
    %v2799 = vsel %vm2798, %v2794, -inf
    %2800 = vmax.xlane.f32.xlu0 %v2799
    %v2801 = vpop.xlane.xlu0 %2800
    %v2802 = vcvt.f32.s32 %v2801
    %v2803 = vcvt.f32.s32 %v2797
    %v2804 = vshll.u32 %v2803, 16
    %v2805 = vadd.s32 %v2804, %v2802
    %v2806 = vsel %vm576, %v2788, 2147483648
    %v2807 = vand.u32 %v2806, 65535
    %v2808 = vshra.s32 %v2806, 16
    %v2809 = vcvt.s32.f32 %v2807
    %v2810 = vcvt.s32.f32 %v2808
    %2811 = vmax.xlane.f32.xlu0 %v2810
    %v2812 = vpop.xlane.xlu0 %2811
    %vm2813 = vcmp.eq.f32.partialorder %v2810, %v2812
    %v2814 = vsel %vm2813, %v2809, -inf
    %2815 = vmax.xlane.f32.xlu0 %v2814
    %v2816 = vpop.xlane.xlu0 %2815
    %v2817 = vcvt.f32.s32 %v2816
    %v2818 = vcvt.f32.s32 %v2812
    %v2819 = vshll.u32 %v2818, 16
    %v2820 = vadd.s32 %v2819, %v2817
    %v2821 = vsel %vm576, %v2789, 2147483648
    %v2822 = vand.u32 %v2821, 65535
    %v2823 = vshra.s32 %v2821, 16
    %v2824 = vcvt.s32.f32 %v2822
    %v2825 = vcvt.s32.f32 %v2823
    %2826 = vmax.xlane.f32.xlu0 %v2825
    %v2827 = vpop.xlane.xlu0 %2826
    %vm2828 = vcmp.eq.f32.partialorder %v2825, %v2827
    %v2829 = vsel %vm2828, %v2824, -inf
    %2830 = vmax.xlane.f32.xlu0 %v2829
    %v2831 = vpop.xlane.xlu0 %2830
    %v2832 = vcvt.f32.s32 %v2831
    %v2833 = vcvt.f32.s32 %v2827
    %v2834 = vshll.u32 %v2833, 16
    %v2835 = vadd.s32 %v2834, %v2832
    %v2836 = vsel %vm576, %v2790, 2147483648
    %v2837 = vand.u32 %v2836, 65535
    %v2838 = vshra.s32 %v2836, 16
    %v2839 = vcvt.s32.f32 %v2837
    %v2840 = vcvt.s32.f32 %v2838
    %2841 = vmax.xlane.f32.xlu0 %v2840
    %v2842 = vpop.xlane.xlu0 %2841
    %vm2843 = vcmp.eq.f32.partialorder %v2840, %v2842
    %v2844 = vsel %vm2843, %v2839, -inf
    %2845 = vmax.xlane.f32.xlu0 %v2844
    %v2846 = vpop.xlane.xlu0 %2845
    %v2847 = vcvt.f32.s32 %v2846
    %v2848 = vcvt.f32.s32 %v2842
    %v2849 = vshll.u32 %v2848, 16
    %v2850 = vadd.s32 %v2849, %v2847
    %v2851 = vand.u32 %v2805, 15
    %v2852 = vand.u32 %v2820, 15
    %v2853 = vand.u32 %v2835, 15
    %v2854 = vand.u32 %v2850, 15
    %v2855 = vsub.s32 15, %v2851
    %v2856 = vsub.s32 15, %v2852
    %v2857 = vsub.s32 15, %v2853
    %v2858 = vsub.s32 15, %v2854
    %vm2859 = vcmp.eq.s32.totalorder %v537, %v2855
    %vm2860 = vcmp.eq.s32.totalorder %v537, %v2856
    %vm2861 = vcmp.eq.s32.totalorder %v537, %v2857
    %vm2862 = vcmp.eq.s32.totalorder %v537, %v2858
    %v2863 = vsel %vm2859, 2147483648, %v2787
    %v2864 = vsel %vm2860, 2147483648, %v2788
    %v2865 = vsel %vm2861, 2147483648, %v2789
    %v2866 = vsel %vm2862, 2147483648, %v2790
    %v2867 = vsel %vm576, %v2863, 2147483648
    %v2868 = vand.u32 %v2867, 65535
    %v2869 = vshra.s32 %v2867, 16
    %v2870 = vcvt.s32.f32 %v2868
    %v2871 = vcvt.s32.f32 %v2869
    %2872 = vmax.xlane.f32.xlu0 %v2871
    %v2873 = vpop.xlane.xlu0 %2872
    %vm2874 = vcmp.eq.f32.partialorder %v2871, %v2873
    %v2875 = vsel %vm2874, %v2870, -inf
    %2876 = vmax.xlane.f32.xlu0 %v2875
    %v2877 = vpop.xlane.xlu0 %2876
    %v2878 = vcvt.f32.s32 %v2877
    %v2879 = vcvt.f32.s32 %v2873
    %v2880 = vshll.u32 %v2879, 16
    %v2881 = vadd.s32 %v2880, %v2878
    %v2882 = vsel %vm576, %v2864, 2147483648
    %v2883 = vand.u32 %v2882, 65535
    %v2884 = vshra.s32 %v2882, 16
    %v2885 = vcvt.s32.f32 %v2883
    %v2886 = vcvt.s32.f32 %v2884
    %2887 = vmax.xlane.f32.xlu0 %v2886
    %v2888 = vpop.xlane.xlu0 %2887
    %vm2889 = vcmp.eq.f32.partialorder %v2886, %v2888
    %v2890 = vsel %vm2889, %v2885, -inf
    %2891 = vmax.xlane.f32.xlu0 %v2890
    %v2892 = vpop.xlane.xlu0 %2891
    %v2893 = vcvt.f32.s32 %v2892
    %v2894 = vcvt.f32.s32 %v2888
    %v2895 = vshll.u32 %v2894, 16
    %v2896 = vadd.s32 %v2895, %v2893
    %v2897 = vsel %vm576, %v2865, 2147483648
    %v2898 = vand.u32 %v2897, 65535
    %v2899 = vshra.s32 %v2897, 16
    %v2900 = vcvt.s32.f32 %v2898
    %v2901 = vcvt.s32.f32 %v2899
    %2902 = vmax.xlane.f32.xlu0 %v2901
    %v2903 = vpop.xlane.xlu0 %2902
    %vm2904 = vcmp.eq.f32.partialorder %v2901, %v2903
    %v2905 = vsel %vm2904, %v2900, -inf
    %2906 = vmax.xlane.f32.xlu0 %v2905
    %v2907 = vpop.xlane.xlu0 %2906
    %v2908 = vcvt.f32.s32 %v2907
    %v2909 = vcvt.f32.s32 %v2903
    %v2910 = vshll.u32 %v2909, 16
    %v2911 = vadd.s32 %v2910, %v2908
    %v2912 = vsel %vm576, %v2866, 2147483648
    %v2913 = vand.u32 %v2912, 65535
    %v2914 = vshra.s32 %v2912, 16
    %v2915 = vcvt.s32.f32 %v2913
    %v2916 = vcvt.s32.f32 %v2914
    %2917 = vmax.xlane.f32.xlu0 %v2916
    %v2918 = vpop.xlane.xlu0 %2917
    %vm2919 = vcmp.eq.f32.partialorder %v2916, %v2918
    %v2920 = vsel %vm2919, %v2915, -inf
    %2921 = vmax.xlane.f32.xlu0 %v2920
    %v2922 = vpop.xlane.xlu0 %2921
    %v2923 = vcvt.f32.s32 %v2922
    %v2924 = vcvt.f32.s32 %v2918
    %v2925 = vshll.u32 %v2924, 16
    %v2926 = vadd.s32 %v2925, %v2923
    %v2927 = vand.u32 %v2881, 15
    %v2928 = vand.u32 %v2896, 15
    %v2929 = vand.u32 %v2911, 15
    %v2930 = vand.u32 %v2926, 15
    %v2931 = vsub.s32 15, %v2927
    %v2932 = vsub.s32 15, %v2928
    %v2933 = vsub.s32 15, %v2929
    %v2934 = vsub.s32 15, %v2930
    %vm2935 = vcmp.eq.s32.totalorder %v537, %v2931
    %vm2936 = vcmp.eq.s32.totalorder %v537, %v2932
    %vm2937 = vcmp.eq.s32.totalorder %v537, %v2933
    %vm2938 = vcmp.eq.s32.totalorder %v537, %v2934
    %v2939 = vsel %vm2479, 1, 0
    %v2940 = vsel %vm2480, 1, 0
    %v2941 = vsel %vm2555, 1, 0
    %v2942 = vsel %vm2556, 1, 0
    %v2943 = vsel %vm2631, 1, 0
    %v2944 = vsel %vm2632, 1, 0
    %v2945 = vsel %vm2707, 1, 0
    %v2946 = vsel %vm2708, 1, 0
    %v2947 = vsel %vm2783, 1, 0
    %v2948 = vsel %vm2784, 1, 0
    %v2949 = vsel %vm2859, 1, 0
    %v2950 = vsel %vm2860, 1, 0
    %v2951 = vsel %vm2935, 1, 0
    %v2952 = vsel %vm2936, 1, 0
    %v2953 = vsel %vm2481, 1, 0
    %v2954 = vsel %vm2482, 1, 0
    %v2955 = vsel %vm2557, 1, 0
    %v2956 = vsel %vm2558, 1, 0
    %v2957 = vsel %vm2633, 1, 0
    %v2958 = vsel %vm2634, 1, 0
    %v2959 = vsel %vm2709, 1, 0
    %v2960 = vsel %vm2710, 1, 0
    %v2961 = vsel %vm2785, 1, 0
    %v2962 = vsel %vm2786, 1, 0
    %v2963 = vsel %vm2861, 1, 0
    %v2964 = vsel %vm2862, 1, 0
    %v2965 = vsel %vm2937, 1, 0
    %v2966 = vsel %vm2938, 1, 0
    %v2967 = vcvt.s32.f32 %v2939
    %v2968 = vcvt.s32.f32 %v2940
    %v2969 = vcvt.s32.f32 %v2941
    %v2970 = vcvt.s32.f32 %v2942
    %v2971 = vcvt.s32.f32 %v2943
    %v2972 = vcvt.s32.f32 %v2944
    %v2973 = vcvt.s32.f32 %v2945
    %v2974 = vcvt.s32.f32 %v2946
    %v2975 = vcvt.s32.f32 %v2947
    %v2976 = vcvt.s32.f32 %v2948
    %v2977 = vcvt.s32.f32 %v2949
    %v2978 = vcvt.s32.f32 %v2950
    %v2979 = vcvt.s32.f32 %v2951
    %v2980 = vcvt.s32.f32 %v2952
    %v2981 = vcvt.s32.f32 %v2953
    %v2982 = vcvt.s32.f32 %v2954
    %v2983 = vcvt.s32.f32 %v2955
    %v2984 = vcvt.s32.f32 %v2956
    %v2985 = vcvt.s32.f32 %v2957
    %v2986 = vcvt.s32.f32 %v2958
    %v2987 = vcvt.s32.f32 %v2959
    %v2988 = vcvt.s32.f32 %v2960
    %v2989 = vcvt.s32.f32 %v2961
    %v2990 = vcvt.s32.f32 %v2962
    %v2991 = vcvt.s32.f32 %v2963
    %v2992 = vcvt.s32.f32 %v2964
    %v2993 = vcvt.s32.f32 %v2965
    %v2994 = vcvt.s32.f32 %v2966
    %v2995 = vpack.c.bf16 %v2968, %v2967
    %v2996 = vpack.c.bf16 %v2970, %v2969
    %v2997 = vpack.c.bf16 %v2972, %v2971
    %v2998 = vpack.c.bf16 %v2974, %v2973
    %v2999 = vpack.c.bf16 %v2976, %v2975
    %v3000 = vpack.c.bf16 %v2978, %v2977
    %v3001 = vpack.c.bf16 %v2980, %v2979
    %v3002 = vpack.c.bf16 %v2982, %v2981
    %v3003 = vpack.c.bf16 %v2984, %v2983
    %v3004 = vpack.c.bf16 %v2986, %v2985
    %v3005 = vpack.c.bf16 %v2988, %v2987
    %v3006 = vpack.c.bf16 %v2990, %v2989
    %v3007 = vpack.c.bf16 %v2992, %v2991
    %v3008 = vpack.c.bf16 %v2994, %v2993
    %v3009 = vpack.c.bf16 %v2101, %v2100
    %v3010 = vpack.c.bf16 %v2103, %v2102
    %3013 = vrot.lane.b32.xlu0 %v3009, 64
    %v3014 = vpop.permute.xlu0 %3013
    %3015 = vrot.lane.b32.xlu0 %v3010, 64
    %v3016 = vpop.permute.xlu0 %3015
    %v3021 = vunpack.c.l.b16 %v2108
    %v3022 = vunpack.c.h.b16 %v2108
    %v3023 = vunpack.c.l.b16 %v2109
    %v3024 = vunpack.c.h.b16 %v2109
    %v3025 = vunpack.c.l.b16 %v2110
    %v3026 = vunpack.c.h.b16 %v2110
    %v3027 = vunpack.c.l.b16 %v2111
    %v3028 = vunpack.c.h.b16 %v2111
    %v3029 = vpack.c.b16 %v3023, %v3021
    %v3030 = vpack.c.b16 %v3024, %v3022
    %v3031 = vpack.c.b16 %v3027, %v3025
    %v3032 = vpack.c.b16 %v3028, %v3026
    %v3038 = vsel %vm1585, %v3014, 0
    %v3041 = vsel %vm1585, %v3016, 0
    %3043 = vmatprep.subr.bf16.mxu0 %v3030
    %3044 = vmatpush1.bf16.msra.mxu0 %v3029
    %3045 = vmatprep.subr.bf16.mxu0 %v3032
    %3046 = vmatpush1.bf16.msra.mxu0 %v3031
    %3047 = vmatprep.subr.bf16.mxu0 0
    %3048 = vmatpush1.bf16.msra.mxu0 0
    %3049 = vmatprep.subr.bf16.mxu0 0
    %3050 = vmatpush1.bf16.msra.mxu0 0
    %3051 = vmatprep.subr.bf16.mxu0 0
    %3052 = vmatpush1.bf16.msra.mxu0 0
    %3053 = vmatprep.subr.bf16.mxu0 0
    %3054 = vmatpush1.bf16.msra.mxu0 0
    %3055 = vmatprep.subr.bf16.mxu0 0
    %3056 = vmatpush1.bf16.msra.mxu0 0
    %3057 = vmatprep.subr.bf16.mxu0 0
    %3058 = vmatpush1.bf16.msra.mxu0 0
    %3059 = vmatprep.subr.bf16.mxu0 0
    %3060 = vmatpush1.bf16.msra.mxu0 0
    %3061 = vmatprep.subr.bf16.mxu0 0
    %3062 = vmatpush1.bf16.msra.mxu0 0
    %3063 = vmatprep.subr.bf16.mxu0 0
    %3064 = vmatpush1.bf16.msra.mxu0 0
    %3065 = vmatprep.subr.bf16.mxu0 0
    %3066 = vmatpush1.bf16.msra.mxu0 0
    %3067 = vmatprep.subr.bf16.mxu0 0
    %3068 = vmatpush1.bf16.msra.mxu0 0
    %3069 = vmatprep.subr.bf16.mxu0 0
    %3070 = vmatpush1.bf16.msra.mxu0 0
    %3071 = vmatprep.subr.bf16.mxu0 0
    %3072 = vmatpush1.bf16.msra.mxu0 0
    %3073 = vmatprep.subr.bf16.mxu0 0
    %3074 = vmatpush1.bf16.msra.mxu0 0
    %3075 = vmatprep.mubr.bf16.mxu0 0
    %3076 = vmatmul.mubr.bf16.gmra.mrb[0].mxu0 %v3038
    %v3077 = vpop.f32.mrb[0].mxu0
    %v3078 = vadd.f32 0.0, %v3077
    %v3079 = vpop.f32.mrb[0].mxu0
    %v3080 = vadd.f32 0.0, %v3079
    %v3081 = vpop.f32.mrb[0].mxu0
    %v3082 = vadd.f32 0.0, %v3081
    %v3083 = vpop.f32.mrb[0].mxu0
    %v3084 = vadd.f32 0.0, %v3083
    %3085 = vmatprep.mubr.bf16.mxu0 0
    %3086 = vmatmul.mubr.bf16.gmra.mrb[0].mxu0 %v3041
    %v3087 = vpop.f32.mrb[0].mxu0
    %v3088 = vadd.f32 0.0, %v3087
    %v3089 = vpop.f32.mrb[0].mxu0
    %v3090 = vadd.f32 0.0, %v3089
    %v3091 = vpop.f32.mrb[0].mxu0
    %v3092 = vadd.f32 0.0, %v3091
    %v3093 = vpop.f32.mrb[0].mxu0
    %v3094 = vadd.f32 0.0, %v3093
    %3095 = vdwg.mxu0
    %v3097 = vlaneseq
    %v3098 = vshrl.u32 %v3097, 7
    %v3099 = vsub.s32 0, %v3098
    %v3100 = vrot.slane %v2112, %v3099
    %v3102 = vadd.f32 %v3078, %v3100
    %v3103 = vadd.f32 %v3082, %v3100
    %v3104 = vadd.f32 %v3088, %v3100
    %v3105 = vadd.f32 %v3092, %v3100
    %v3106 = vpack.c.bf16 %v3082, %v3078
    %v3107 = vpack.c.bf16 %v3092, %v3088
    %v3109 = vlaneseq
    %v3110 = vshrl.u32 %v3109, 7
    %v3111 = vsub.s32 0, %v3110
    %v3112 = vrot.slane %v2131, %v3111
    %v3114 = vadd.f32 %v3080, %v3112
    %v3115 = vadd.f32 %v3084, %v3112
    %v3116 = vadd.f32 %v3090, %v3112
    %v3117 = vadd.f32 %v3094, %v3112
    %3119 = vrot.lane.b32.xlu0 %v3106, 64
    %v3120 = vpop.permute.xlu0 %3119
    %v3123 = vsel %vm576, %v2995, 0
    %v3126 = vsel %vm576, %v2996, 0
    %v3129 = vsel %vm576, %v2997, 0
    %v3132 = vsel %vm576, %v2998, 0
    %v3135 = vsel %vm576, %v2999, 0
    %v3138 = vsel %vm576, %v3000, 0
    %v3141 = vsel %vm576, %v3001, 0
    %3143 = vmatprep.subr.bf16.mxu0 0
    %3144 = vmatpush1.bf16.msra.mxu0 %v3120
    %3145 = vmatprep.subr.bf16.mxu0 0
    %3146 = vmatpush1.bf16.msra.mxu0 0
    %3147 = vmatprep.subr.bf16.mxu0 0
    %3148 = vmatpush1.bf16.msra.mxu0 0
    %3149 = vmatprep.subr.bf16.mxu0 0
    %3150 = vmatpush1.bf16.msra.mxu0 0
    %3151 = vmatprep.subr.bf16.mxu0 0
    %3152 = vmatpush1.bf16.msra.mxu0 0
    %3153 = vmatprep.subr.bf16.mxu0 0
    %3154 = vmatpush1.bf16.msra.mxu0 0
    %3155 = vmatprep.subr.bf16.mxu0 0
    %3156 = vmatpush1.bf16.msra.mxu0 0
    %3157 = vmatprep.subr.bf16.mxu0 0
    %3158 = vmatpush1.bf16.msra.mxu0 0
    %3159 = vmatprep.subr.bf16.mxu0 0
    %3160 = vmatpush1.bf16.msra.mxu0 0
    %3161 = vmatprep.subr.bf16.mxu0 0
    %3162 = vmatpush1.bf16.msra.mxu0 0
    %3163 = vmatprep.subr.bf16.mxu0 0
    %3164 = vmatpush1.bf16.msra.mxu0 0
    %3165 = vmatprep.subr.bf16.mxu0 0
    %3166 = vmatpush1.bf16.msra.mxu0 0
    %3167 = vmatprep.subr.bf16.mxu0 0
    %3168 = vmatpush1.bf16.msra.mxu0 0
    %3169 = vmatprep.subr.bf16.mxu0 0
    %3170 = vmatpush1.bf16.msra.mxu0 0
    %3171 = vmatprep.subr.bf16.mxu0 0
    %3172 = vmatpush1.bf16.msra.mxu0 0
    %3173 = vmatprep.subr.bf16.mxu0 0
    %3174 = vmatpush1.bf16.msra.mxu0 0
    %3175 = vmatprep.mubr.bf16.mxu0 0
    %3176 = vmatmul.mubr.bf16.gmra.mrb[0].mxu0 %v3123
    %v3177 = vpop.f32.mrb[0].mxu0
    %v3178 = vadd.f32 0.0, %v3177
    %v3179 = vpop.f32.mrb[0].mxu0
    %v3180 = vpop.f32.mrb[0].mxu0
    %v3181 = vadd.f32 0.0, %v3180
    %v3182 = vpop.f32.mrb[0].mxu0
    %3183 = vmatprep.mubr.bf16.mxu0 0
    %3184 = vmatmul.mubr.bf16.gmra.mrb[0].mxu0 %v3126
    %v3185 = vpop.f32.mrb[0].mxu0
    %v3186 = vadd.f32 0.0, %v3185
    %v3187 = vpop.f32.mrb[0].mxu0
    %v3188 = vpop.f32.mrb[0].mxu0
    %v3189 = vadd.f32 0.0, %v3188
    %v3190 = vpop.f32.mrb[0].mxu0
    %3191 = vmatprep.mubr.bf16.mxu0 0
    %3192 = vmatmul.mubr.bf16.gmra.mrb[0].mxu0 %v3129
    %v3193 = vpop.f32.mrb[0].mxu0
    %v3194 = vadd.f32 0.0, %v3193
    %v3195 = vpop.f32.mrb[0].mxu0
    %v3196 = vpop.f32.mrb[0].mxu0
    %v3197 = vadd.f32 0.0, %v3196
    %v3198 = vpop.f32.mrb[0].mxu0
    %3199 = vmatprep.mubr.bf16.mxu0 0
    %3200 = vmatmul.mubr.bf16.gmra.mrb[0].mxu0 %v3132
    %v3201 = vpop.f32.mrb[0].mxu0
    %v3202 = vadd.f32 0.0, %v3201
    %v3203 = vpop.f32.mrb[0].mxu0
    %v3204 = vpop.f32.mrb[0].mxu0
    %v3205 = vadd.f32 0.0, %v3204
    %v3206 = vpop.f32.mrb[0].mxu0
    %3207 = vmatprep.mubr.bf16.mxu0 0
    %3208 = vmatmul.mubr.bf16.gmra.mrb[0].mxu0 %v3135
    %v3209 = vpop.f32.mrb[0].mxu0
    %v3210 = vadd.f32 0.0, %v3209
    %v3211 = vpop.f32.mrb[0].mxu0
    %v3212 = vpop.f32.mrb[0].mxu0
    %v3213 = vadd.f32 0.0, %v3212
    %v3214 = vpop.f32.mrb[0].mxu0
    %3215 = vmatprep.mubr.bf16.mxu0 0
    %3216 = vmatmul.mubr.bf16.gmra.mrb[0].mxu0 %v3138
    %v3217 = vpop.f32.mrb[0].mxu0
    %v3218 = vadd.f32 0.0, %v3217
    %v3219 = vpop.f32.mrb[0].mxu0
    %v3220 = vpop.f32.mrb[0].mxu0
    %v3221 = vadd.f32 0.0, %v3220
    %v3222 = vpop.f32.mrb[0].mxu0
    %3223 = vmatprep.mubr.bf16.mxu0 0
    %3224 = vmatmul.mubr.bf16.gmra.mrb[0].mxu0 %v3141
    %v3225 = vpop.f32.mrb[0].mxu0
    %v3226 = vadd.f32 0.0, %v3225
    %v3227 = vpop.f32.mrb[0].mxu0
    %v3228 = vpop.f32.mrb[0].mxu0
    %v3229 = vadd.f32 0.0, %v3228
    %v3230 = vpop.f32.mrb[0].mxu0
    %3231 = vdwg.mxu0
    %3233 = vrot.lane.b32.xlu0 %v3107, 64
    %v3234 = vpop.permute.xlu0 %3233
    %v3237 = vsel %vm576, %v3002, 0
    %v3240 = vsel %vm576, %v3003, 0
    %v3243 = vsel %vm576, %v3004, 0
    %v3246 = vsel %vm576, %v3005, 0
    %v3249 = vsel %vm576, %v3006, 0
    %v3252 = vsel %vm576, %v3007, 0
    %v3255 = vsel %vm576, %v3008, 0
    %3257 = vmatprep.subr.bf16.mxu0 0
    %3258 = vmatpush1.bf16.msra.mxu0 %v3234
    %3259 = vmatprep.subr.bf16.mxu0 0
    %3260 = vmatpush1.bf16.msra.mxu0 0
    %3261 = vmatprep.subr.bf16.mxu0 0
    %3262 = vmatpush1.bf16.msra.mxu0 0
    %3263 = vmatprep.subr.bf16.mxu0 0
    %3264 = vmatpush1.bf16.msra.mxu0 0
    %3265 = vmatprep.subr.bf16.mxu0 0
    %3266 = vmatpush1.bf16.msra.mxu0 0
    %3267 = vmatprep.subr.bf16.mxu0 0
    %3268 = vmatpush1.bf16.msra.mxu0 0
    %3269 = vmatprep.subr.bf16.mxu0 0
    %3270 = vmatpush1.bf16.msra.mxu0 0
    %3271 = vmatprep.subr.bf16.mxu0 0
    %3272 = vmatpush1.bf16.msra.mxu0 0
    %3273 = vmatprep.subr.bf16.mxu0 0
    %3274 = vmatpush1.bf16.msra.mxu0 0
    %3275 = vmatprep.subr.bf16.mxu0 0
    %3276 = vmatpush1.bf16.msra.mxu0 0
    %3277 = vmatprep.subr.bf16.mxu0 0
    %3278 = vmatpush1.bf16.msra.mxu0 0
    %3279 = vmatprep.subr.bf16.mxu0 0
    %3280 = vmatpush1.bf16.msra.mxu0 0
    %3281 = vmatprep.subr.bf16.mxu0 0
    %3282 = vmatpush1.bf16.msra.mxu0 0
    %3283 = vmatprep.subr.bf16.mxu0 0
    %3284 = vmatpush1.bf16.msra.mxu0 0
    %3285 = vmatprep.subr.bf16.mxu0 0
    %3286 = vmatpush1.bf16.msra.mxu0 0
    %3287 = vmatprep.subr.bf16.mxu0 0
    %3288 = vmatpush1.bf16.msra.mxu0 0
    %3289 = vmatprep.mubr.bf16.mxu0 0
    %3290 = vmatmul.mubr.bf16.gmra.mrb[0].mxu0 %v3237
    %v3291 = vpop.f32.mrb[0].mxu0
    %v3292 = vadd.f32 0.0, %v3291
    %v3293 = vpop.f32.mrb[0].mxu0
    %v3294 = vpop.f32.mrb[0].mxu0
    %v3295 = vadd.f32 0.0, %v3294
    %v3296 = vpop.f32.mrb[0].mxu0
    %3297 = vmatprep.mubr.bf16.mxu0 0
    %3298 = vmatmul.mubr.bf16.gmra.mrb[0].mxu0 %v3240
    %v3299 = vpop.f32.mrb[0].mxu0
    %v3300 = vadd.f32 0.0, %v3299
    %v3301 = vpop.f32.mrb[0].mxu0
    %v3302 = vpop.f32.mrb[0].mxu0
    %v3303 = vadd.f32 0.0, %v3302
    %v3304 = vpop.f32.mrb[0].mxu0
    %3305 = vmatprep.mubr.bf16.mxu0 0
    %3306 = vmatmul.mubr.bf16.gmra.mrb[0].mxu0 %v3243
    %v3307 = vpop.f32.mrb[0].mxu0
    %v3308 = vadd.f32 0.0, %v3307
    %v3309 = vpop.f32.mrb[0].mxu0
    %v3310 = vpop.f32.mrb[0].mxu0
    %v3311 = vadd.f32 0.0, %v3310
    %v3312 = vpop.f32.mrb[0].mxu0
    %3313 = vmatprep.mubr.bf16.mxu0 0
    %3314 = vmatmul.mubr.bf16.gmra.mrb[0].mxu0 %v3246
    %v3315 = vpop.f32.mrb[0].mxu0
    %v3316 = vadd.f32 0.0, %v3315
    %v3317 = vpop.f32.mrb[0].mxu0
    %v3318 = vpop.f32.mrb[0].mxu0
    %v3319 = vadd.f32 0.0, %v3318
    %v3320 = vpop.f32.mrb[0].mxu0
    %3321 = vmatprep.mubr.bf16.mxu0 0
    %3322 = vmatmul.mubr.bf16.gmra.mrb[0].mxu0 %v3249
    %v3323 = vpop.f32.mrb[0].mxu0
    %v3324 = vadd.f32 0.0, %v3323
    %v3325 = vpop.f32.mrb[0].mxu0
    %v3326 = vpop.f32.mrb[0].mxu0
    %v3327 = vadd.f32 0.0, %v3326
    %v3328 = vpop.f32.mrb[0].mxu0
    %3329 = vmatprep.mubr.bf16.mxu0 0
    %3330 = vmatmul.mubr.bf16.gmra.mrb[0].mxu0 %v3252
    %v3331 = vpop.f32.mrb[0].mxu0
    %v3332 = vadd.f32 0.0, %v3331
    %v3333 = vpop.f32.mrb[0].mxu0
    %v3334 = vpop.f32.mrb[0].mxu0
    %v3335 = vadd.f32 0.0, %v3334
    %v3336 = vpop.f32.mrb[0].mxu0
    %3337 = vmatprep.mubr.bf16.mxu0 0
    %3338 = vmatmul.mubr.bf16.gmra.mrb[0].mxu0 %v3255
    %v3339 = vpop.f32.mrb[0].mxu0
    %v3340 = vadd.f32 0.0, %v3339
    %v3341 = vpop.f32.mrb[0].mxu0
    %v3342 = vpop.f32.mrb[0].mxu0
    %v3343 = vadd.f32 0.0, %v3342
    %v3344 = vpop.f32.mrb[0].mxu0
    %3345 = vdwg.mxu0
    %v3346 = vadd.f32 %v3178, %v3102
    %v3347 = vadd.f32 %v3181, %v3103
    %v3348 = vadd.f32 %v3186, %v3102
    %v3349 = vadd.f32 %v3189, %v3103
    %v3350 = vadd.f32 %v3194, %v3102
    %v3351 = vadd.f32 %v3197, %v3103
    %v3352 = vadd.f32 %v3202, %v3102
    %v3353 = vadd.f32 %v3205, %v3103
    %v3354 = vadd.f32 %v3210, %v3102
    %v3355 = vadd.f32 %v3213, %v3103
    %v3356 = vadd.f32 %v3218, %v3102
    %v3357 = vadd.f32 %v3221, %v3103
    %v3358 = vadd.f32 %v3226, %v3102
    %v3359 = vadd.f32 %v3229, %v3103
    %v3360 = vadd.f32 %v3292, %v3104
    %v3361 = vadd.f32 %v3295, %v3105
    %v3362 = vadd.f32 %v3300, %v3104
    %v3363 = vadd.f32 %v3303, %v3105
    %v3364 = vadd.f32 %v3308, %v3104
    %v3365 = vadd.f32 %v3311, %v3105
    %v3366 = vadd.f32 %v3316, %v3104
    %v3367 = vadd.f32 %v3319, %v3105
    %v3368 = vadd.f32 %v3324, %v3104
    %v3369 = vadd.f32 %v3327, %v3105
    %v3370 = vadd.f32 %v3332, %v3104
    %v3371 = vadd.f32 %v3335, %v3105
    %v3372 = vadd.f32 %v3340, %v3104
    %v3373 = vadd.f32 %v3343, %v3105
    %v3374 = vmax.f32 %v3346, 0.0
    %v3375 = vmax.f32 %v3347, 0.0
    %v3376 = vmax.f32 %v3348, 0.0
    %v3377 = vmax.f32 %v3349, 0.0
    %v3378 = vmax.f32 %v3350, 0.0
    %v3379 = vmax.f32 %v3351, 0.0
    %v3380 = vmax.f32 %v3352, 0.0
    %v3381 = vmax.f32 %v3353, 0.0
    %v3382 = vmax.f32 %v3354, 0.0
    %v3383 = vmax.f32 %v3355, 0.0
    %v3384 = vmax.f32 %v3356, 0.0
    %v3385 = vmax.f32 %v3357, 0.0
    %v3386 = vmax.f32 %v3358, 0.0
    %v3387 = vmax.f32 %v3359, 0.0
    %v3388 = vmax.f32 %v3360, 0.0
    %v3389 = vmax.f32 %v3361, 0.0
    %v3390 = vmax.f32 %v3362, 0.0
    %v3391 = vmax.f32 %v3363, 0.0
    %v3392 = vmax.f32 %v3364, 0.0
    %v3393 = vmax.f32 %v3365, 0.0
    %v3394 = vmax.f32 %v3366, 0.0
    %v3395 = vmax.f32 %v3367, 0.0
    %v3396 = vmax.f32 %v3368, 0.0
    %v3397 = vmax.f32 %v3369, 0.0
    %v3398 = vmax.f32 %v3370, 0.0
    %v3399 = vmax.f32 %v3371, 0.0
    %v3400 = vmax.f32 %v3372, 0.0
    %v3401 = vmax.f32 %v3373, 0.0
    %v3402 = vpack.c.bf16 %v3375, %v3374
    %v3403 = vpack.c.bf16 %v3377, %v3376
    %v3404 = vpack.c.bf16 %v3379, %v3378
    %v3405 = vpack.c.bf16 %v3381, %v3380
    %v3406 = vpack.c.bf16 %v3383, %v3382
    %v3407 = vpack.c.bf16 %v3385, %v3384
    %v3408 = vpack.c.bf16 %v3387, %v3386
    %v3409 = vpack.c.bf16 %v3389, %v3388
    %v3410 = vpack.c.bf16 %v3391, %v3390
    %v3411 = vpack.c.bf16 %v3393, %v3392
    %v3412 = vpack.c.bf16 %v3395, %v3394
    %v3413 = vpack.c.bf16 %v3397, %v3396
    %v3414 = vpack.c.bf16 %v3399, %v3398
    %v3415 = vpack.c.bf16 %v3401, %v3400
    %v3417 = vlaneseq
    %v3418 = vshrl.u32 %v3417, 7
    %v3419 = vsub.s32 0, %v3418
    %v3420 = vrot.slane %v2121, %v3419
    %v3430 = vunpack.c.l.b16 %v2113
    %v3431 = vunpack.c.l.b16 %v2114
    %v3432 = vunpack.c.l.b16 %v2115
    %v3433 = vunpack.c.l.b16 %v2116
    %v3434 = vunpack.c.l.b16 %v2117
    %v3435 = vunpack.c.l.b16 %v2118
    %v3436 = vunpack.c.l.b16 %v2119
    %v3437 = vunpack.c.l.b16 %v2120
    %v3438 = vpack.c.b16 %v3431, %v3430
    %v3439 = vpack.c.b16 %v3433, %v3432
    %v3440 = vpack.c.b16 %v3435, %v3434
    %v3441 = vpack.c.b16 %v3437, %v3436
    %vm3446 = vcmask 523264
    %v3448 = vsel %vm3446, %v3402, 0
    %v3451 = vsel %vm3446, %v3403, 0
    %v3454 = vsel %vm3446, %v3404, 0
    %v3457 = vsel %vm3446, %v3405, 0
    %v3460 = vsel %vm3446, %v3406, 0
    %v3463 = vsel %vm3446, %v3407, 0
    %v3466 = vsel %vm3446, %v3408, 0
    %v3469 = vsel %vm3446, %v3409, 0
    %v3472 = vsel %vm3446, %v3410, 0
    %v3475 = vsel %vm3446, %v3411, 0
    %v3478 = vsel %vm3446, %v3412, 0
    %v3481 = vsel %vm3446, %v3413, 0
    %v3484 = vsel %vm3446, %v3414, 0
    %v3487 = vsel %vm3446, %v3415, 0
    %3489 = vmatprep.subr.bf16.mxu0 0
    %3490 = vmatpush1.bf16.msra.mxu0 %v3438
    %3491 = vmatprep.subr.bf16.mxu0 0
    %3492 = vmatpush1.bf16.msra.mxu0 %v3439
    %3493 = vmatprep.subr.bf16.mxu0 0
    %3494 = vmatpush1.bf16.msra.mxu0 %v3440
    %3495 = vmatprep.subr.bf16.mxu0 0
    %3496 = vmatpush1.bf16.msra.mxu0 %v3441
    %3497 = vmatprep.subr.bf16.mxu0 0
    %3498 = vmatpush1.bf16.msra.mxu0 0
    %3499 = vmatprep.subr.bf16.mxu0 0
    %3500 = vmatpush1.bf16.msra.mxu0 0
    %3501 = vmatprep.subr.bf16.mxu0 0
    %3502 = vmatpush1.bf16.msra.mxu0 0
    %3503 = vmatprep.subr.bf16.mxu0 0
    %3504 = vmatpush1.bf16.msra.mxu0 0
    %3505 = vmatprep.subr.bf16.mxu0 0
    %3506 = vmatpush1.bf16.msra.mxu0 0
    %3507 = vmatprep.subr.bf16.mxu0 0
    %3508 = vmatpush1.bf16.msra.mxu0 0
    %3509 = vmatprep.subr.bf16.mxu0 0
    %3510 = vmatpush1.bf16.msra.mxu0 0
    %3511 = vmatprep.subr.bf16.mxu0 0
    %3512 = vmatpush1.bf16.msra.mxu0 0
    %3513 = vmatprep.subr.bf16.mxu0 0
    %3514 = vmatpush1.bf16.msra.mxu0 0
    %3515 = vmatprep.subr.bf16.mxu0 0
    %3516 = vmatpush1.bf16.msra.mxu0 0
    %3517 = vmatprep.subr.bf16.mxu0 0
    %3518 = vmatpush1.bf16.msra.mxu0 0
    %3519 = vmatprep.subr.bf16.mxu0 0
    %3520 = vmatpush1.bf16.msra.mxu0 0
    %3521 = vmatprep.mubr.bf16.mxu0 0
    %3522 = vmatmul.mubr.bf16.gmra.mrb[0].mxu0 %v3448
    %v3523 = vpop.f32.mrb[0].mxu0
    %v3524 = vadd.f32 %v3420, %v3523
    %v3525 = vpop.f32.mrb[0].mxu0
    %v3526 = vpop.f32.mrb[0].mxu0
    %v3527 = vadd.f32 %v3420, %v3526
    %v3528 = vpop.f32.mrb[0].mxu0
    %3529 = vmatprep.mubr.bf16.mxu0 0
    %3530 = vmatmul.mubr.bf16.gmra.mrb[0].mxu0 %v3451
    %v3531 = vpop.f32.mrb[0].mxu0
    %v3532 = vadd.f32 %v3420, %v3531
    %v3533 = vpop.f32.mrb[0].mxu0
    %v3534 = vpop.f32.mrb[0].mxu0
    %v3535 = vadd.f32 %v3420, %v3534
    %v3536 = vpop.f32.mrb[0].mxu0
    %3537 = vmatprep.mubr.bf16.mxu0 0
    %3538 = vmatmul.mubr.bf16.gmra.mrb[0].mxu0 %v3454
    %v3539 = vpop.f32.mrb[0].mxu0
    %v3540 = vadd.f32 %v3420, %v3539
    %v3541 = vpop.f32.mrb[0].mxu0
    %v3542 = vpop.f32.mrb[0].mxu0
    %v3543 = vadd.f32 %v3420, %v3542
    %v3544 = vpop.f32.mrb[0].mxu0
    %3545 = vmatprep.mubr.bf16.mxu0 0
    %3546 = vmatmul.mubr.bf16.gmra.mrb[0].mxu0 %v3457
    %v3547 = vpop.f32.mrb[0].mxu0
    %v3548 = vadd.f32 %v3420, %v3547
    %v3549 = vpop.f32.mrb[0].mxu0
    %v3550 = vpop.f32.mrb[0].mxu0
    %v3551 = vadd.f32 %v3420, %v3550
    %v3552 = vpop.f32.mrb[0].mxu0
    %3553 = vmatprep.mubr.bf16.mxu0 0
    %3554 = vmatmul.mubr.bf16.gmra.mrb[0].mxu0 %v3460
    %v3555 = vpop.f32.mrb[0].mxu0
    %v3556 = vadd.f32 %v3420, %v3555
    %v3557 = vpop.f32.mrb[0].mxu0
    %v3558 = vpop.f32.mrb[0].mxu0
    %v3559 = vadd.f32 %v3420, %v3558
    %v3560 = vpop.f32.mrb[0].mxu0
    %3561 = vmatprep.mubr.bf16.mxu0 0
    %3562 = vmatmul.mubr.bf16.gmra.mrb[0].mxu0 %v3463
    %v3563 = vpop.f32.mrb[0].mxu0
    %v3564 = vadd.f32 %v3420, %v3563
    %v3565 = vpop.f32.mrb[0].mxu0
    %v3566 = vpop.f32.mrb[0].mxu0
    %v3567 = vadd.f32 %v3420, %v3566
    %v3568 = vpop.f32.mrb[0].mxu0
    %3569 = vmatprep.mubr.bf16.mxu0 0
    %3570 = vmatmul.mubr.bf16.gmra.mrb[0].mxu0 %v3466
    %v3571 = vpop.f32.mrb[0].mxu0
    %v3572 = vadd.f32 %v3420, %v3571
    %v3573 = vpop.f32.mrb[0].mxu0
    %v3574 = vpop.f32.mrb[0].mxu0
    %v3575 = vadd.f32 %v3420, %v3574
    %v3576 = vpop.f32.mrb[0].mxu0
    %3577 = vmatprep.mubr.bf16.mxu0 0
    %3578 = vmatmul.mubr.bf16.gmra.mrb[0].mxu0 %v3469
    %v3579 = vpop.f32.mrb[0].mxu0
    %v3580 = vadd.f32 %v3420, %v3579
    %v3581 = vpop.f32.mrb[0].mxu0
    %v3582 = vpop.f32.mrb[0].mxu0
    %v3583 = vadd.f32 %v3420, %v3582
    %v3584 = vpop.f32.mrb[0].mxu0
    %3585 = vmatprep.mubr.bf16.mxu0 0
    %3586 = vmatmul.mubr.bf16.gmra.mrb[0].mxu0 %v3472
    %v3587 = vpop.f32.mrb[0].mxu0
    %v3588 = vadd.f32 %v3420, %v3587
    %v3589 = vpop.f32.mrb[0].mxu0
    %v3590 = vpop.f32.mrb[0].mxu0
    %v3591 = vadd.f32 %v3420, %v3590
    %v3592 = vpop.f32.mrb[0].mxu0
    %3593 = vmatprep.mubr.bf16.mxu0 0
    %3594 = vmatmul.mubr.bf16.gmra.mrb[0].mxu0 %v3475
    %v3595 = vpop.f32.mrb[0].mxu0
    %v3596 = vadd.f32 %v3420, %v3595
    %v3597 = vpop.f32.mrb[0].mxu0
    %v3598 = vpop.f32.mrb[0].mxu0
    %v3599 = vadd.f32 %v3420, %v3598
    %v3600 = vpop.f32.mrb[0].mxu0
    %3601 = vmatprep.mubr.bf16.mxu0 0
    %3602 = vmatmul.mubr.bf16.gmra.mrb[0].mxu0 %v3478
    %v3603 = vpop.f32.mrb[0].mxu0
    %v3604 = vadd.f32 %v3420, %v3603
    %v3605 = vpop.f32.mrb[0].mxu0
    %v3606 = vpop.f32.mrb[0].mxu0
    %v3607 = vadd.f32 %v3420, %v3606
    %v3608 = vpop.f32.mrb[0].mxu0
    %3609 = vmatprep.mubr.bf16.mxu0 0
    %3610 = vmatmul.mubr.bf16.gmra.mrb[0].mxu0 %v3481
    %v3611 = vpop.f32.mrb[0].mxu0
    %v3612 = vadd.f32 %v3420, %v3611
    %v3613 = vpop.f32.mrb[0].mxu0
    %v3614 = vpop.f32.mrb[0].mxu0
    %v3615 = vadd.f32 %v3420, %v3614
    %v3616 = vpop.f32.mrb[0].mxu0
    %3617 = vmatprep.mubr.bf16.mxu0 0
    %3618 = vmatmul.mubr.bf16.gmra.mrb[0].mxu0 %v3484
    %v3619 = vpop.f32.mrb[0].mxu0
    %v3620 = vadd.f32 %v3420, %v3619
    %v3621 = vpop.f32.mrb[0].mxu0
    %v3622 = vpop.f32.mrb[0].mxu0
    %v3623 = vadd.f32 %v3420, %v3622
    %v3624 = vpop.f32.mrb[0].mxu0
    %3625 = vmatprep.mubr.bf16.mxu0 0
    %3626 = vmatmul.mubr.bf16.gmra.mrb[0].mxu0 %v3487
    %v3627 = vpop.f32.mrb[0].mxu0
    %v3628 = vadd.f32 %v3420, %v3627
    %v3629 = vpop.f32.mrb[0].mxu0
    %v3630 = vpop.f32.mrb[0].mxu0
    %v3631 = vadd.f32 %v3420, %v3630
    %v3632 = vpop.f32.mrb[0].mxu0
    %3633 = vdwg.mxu0
    %v3634 = vmax.f32 %v3524, 0.0
    %v3635 = vmax.f32 %v3527, 0.0
    %v3636 = vmax.f32 %v3532, 0.0
    %v3637 = vmax.f32 %v3535, 0.0
    %v3638 = vmax.f32 %v3540, 0.0
    %v3639 = vmax.f32 %v3543, 0.0
    %v3640 = vmax.f32 %v3548, 0.0
    %v3641 = vmax.f32 %v3551, 0.0
    %v3642 = vmax.f32 %v3556, 0.0
    %v3643 = vmax.f32 %v3559, 0.0
    %v3644 = vmax.f32 %v3564, 0.0
    %v3645 = vmax.f32 %v3567, 0.0
    %v3646 = vmax.f32 %v3572, 0.0
    %v3647 = vmax.f32 %v3575, 0.0
    %v3648 = vmax.f32 %v3580, 0.0
    %v3649 = vmax.f32 %v3583, 0.0
    %v3650 = vmax.f32 %v3588, 0.0
    %v3651 = vmax.f32 %v3591, 0.0
    %v3652 = vmax.f32 %v3596, 0.0
    %v3653 = vmax.f32 %v3599, 0.0
    %v3654 = vmax.f32 %v3604, 0.0
    %v3655 = vmax.f32 %v3607, 0.0
    %v3656 = vmax.f32 %v3612, 0.0
    %v3657 = vmax.f32 %v3615, 0.0
    %v3658 = vmax.f32 %v3620, 0.0
    %v3659 = vmax.f32 %v3623, 0.0
    %v3660 = vmax.f32 %v3628, 0.0
    %v3661 = vmax.f32 %v3631, 0.0
    %v3662 = vpack.c.bf16 %v3635, %v3634
    %v3663 = vpack.c.bf16 %v3637, %v3636
    %v3664 = vpack.c.bf16 %v3639, %v3638
    %v3665 = vpack.c.bf16 %v3641, %v3640
    %v3666 = vpack.c.bf16 %v3643, %v3642
    %v3667 = vpack.c.bf16 %v3645, %v3644
    %v3668 = vpack.c.bf16 %v3647, %v3646
    %v3669 = vpack.c.bf16 %v3649, %v3648
    %v3670 = vpack.c.bf16 %v3651, %v3650
    %v3671 = vpack.c.bf16 %v3653, %v3652
    %v3672 = vpack.c.bf16 %v3655, %v3654
    %v3673 = vpack.c.bf16 %v3657, %v3656
    %v3674 = vpack.c.bf16 %v3659, %v3658
    %v3675 = vpack.c.bf16 %v3661, %v3660
    %v3677 = vlaneseq
    %v3678 = vshrl.u32 %v3677, 7
    %v3679 = vsub.s32 0, %v3678
    %v3680 = vrot.slane %v2130, %v3679
    %v3690 = vunpack.c.l.b16 %v2122
    %v3691 = vunpack.c.l.b16 %v2123
    %v3692 = vunpack.c.l.b16 %v2124
    %v3693 = vunpack.c.l.b16 %v2125
    %v3694 = vunpack.c.l.b16 %v2126
    %v3695 = vunpack.c.l.b16 %v2127
    %v3696 = vunpack.c.l.b16 %v2128
    %v3697 = vunpack.c.l.b16 %v2129
    %v3698 = vpack.c.b16 %v3691, %v3690
    %v3699 = vpack.c.b16 %v3693, %v3692
    %v3700 = vpack.c.b16 %v3695, %v3694
    %v3701 = vpack.c.b16 %v3697, %v3696
    %v3707 = vsel %vm3446, %v3662, 0
    %v3710 = vsel %vm3446, %v3663, 0
    %v3713 = vsel %vm3446, %v3664, 0
    %v3716 = vsel %vm3446, %v3665, 0
    %v3719 = vsel %vm3446, %v3666, 0
    %v3722 = vsel %vm3446, %v3667, 0
    %v3725 = vsel %vm3446, %v3668, 0
    %v3728 = vsel %vm3446, %v3669, 0
    %v3731 = vsel %vm3446, %v3670, 0
    %v3734 = vsel %vm3446, %v3671, 0
    %v3737 = vsel %vm3446, %v3672, 0
    %v3740 = vsel %vm3446, %v3673, 0
    %v3743 = vsel %vm3446, %v3674, 0
    %v3746 = vsel %vm3446, %v3675, 0
    %3748 = vmatprep.subr.bf16.mxu0 0
    %3749 = vmatpush1.bf16.msra.mxu0 %v3698
    %3750 = vmatprep.subr.bf16.mxu0 0
    %3751 = vmatpush1.bf16.msra.mxu0 %v3699
    %3752 = vmatprep.subr.bf16.mxu0 0
    %3753 = vmatpush1.bf16.msra.mxu0 %v3700
    %3754 = vmatprep.subr.bf16.mxu0 0
    %3755 = vmatpush1.bf16.msra.mxu0 %v3701
    %3756 = vmatprep.subr.bf16.mxu0 0
    %3757 = vmatpush1.bf16.msra.mxu0 0
    %3758 = vmatprep.subr.bf16.mxu0 0
    %3759 = vmatpush1.bf16.msra.mxu0 0
    %3760 = vmatprep.subr.bf16.mxu0 0
    %3761 = vmatpush1.bf16.msra.mxu0 0
    %3762 = vmatprep.subr.bf16.mxu0 0
    %3763 = vmatpush1.bf16.msra.mxu0 0
    %3764 = vmatprep.subr.bf16.mxu0 0
    %3765 = vmatpush1.bf16.msra.mxu0 0
    %3766 = vmatprep.subr.bf16.mxu0 0
    %3767 = vmatpush1.bf16.msra.mxu0 0
    %3768 = vmatprep.subr.bf16.mxu0 0
    %3769 = vmatpush1.bf16.msra.mxu0 0
    %3770 = vmatprep.subr.bf16.mxu0 0
    %3771 = vmatpush1.bf16.msra.mxu0 0
    %3772 = vmatprep.subr.bf16.mxu0 0
    %3773 = vmatpush1.bf16.msra.mxu0 0
    %3774 = vmatprep.subr.bf16.mxu0 0
    %3775 = vmatpush1.bf16.msra.mxu0 0
    %3776 = vmatprep.subr.bf16.mxu0 0
    %3777 = vmatpush1.bf16.msra.mxu0 0
    %3778 = vmatprep.subr.bf16.mxu0 0
    %3779 = vmatpush1.bf16.msra.mxu0 0
    %3780 = vmatprep.mubr.bf16.mxu0 0
    %3781 = vmatmul.mubr.bf16.gmra.mrb[0].mxu0 %v3707
    %v3782 = vpop.f32.mrb[0].mxu0
    %v3783 = vadd.f32 %v3680, %v3782
    %v3784 = vpop.f32.mrb[0].mxu0
    %v3785 = vpop.f32.mrb[0].mxu0
    %v3786 = vadd.f32 %v3680, %v3785
    %v3787 = vpop.f32.mrb[0].mxu0
    %3788 = vmatprep.mubr.bf16.mxu0 0
    %3789 = vmatmul.mubr.bf16.gmra.mrb[0].mxu0 %v3710
    %v3790 = vpop.f32.mrb[0].mxu0
    %v3791 = vadd.f32 %v3680, %v3790
    %v3792 = vpop.f32.mrb[0].mxu0
    %v3793 = vpop.f32.mrb[0].mxu0
    %v3794 = vadd.f32 %v3680, %v3793
    %v3795 = vpop.f32.mrb[0].mxu0
    %3796 = vmatprep.mubr.bf16.mxu0 0
    %3797 = vmatmul.mubr.bf16.gmra.mrb[0].mxu0 %v3713
    %v3798 = vpop.f32.mrb[0].mxu0
    %v3799 = vadd.f32 %v3680, %v3798
    %v3800 = vpop.f32.mrb[0].mxu0
    %v3801 = vpop.f32.mrb[0].mxu0
    %v3802 = vadd.f32 %v3680, %v3801
    %v3803 = vpop.f32.mrb[0].mxu0
    %3804 = vmatprep.mubr.bf16.mxu0 0
    %3805 = vmatmul.mubr.bf16.gmra.mrb[0].mxu0 %v3716
    %v3806 = vpop.f32.mrb[0].mxu0
    %v3807 = vadd.f32 %v3680, %v3806
    %v3808 = vpop.f32.mrb[0].mxu0
    %v3809 = vpop.f32.mrb[0].mxu0
    %v3810 = vadd.f32 %v3680, %v3809
    %v3811 = vpop.f32.mrb[0].mxu0
    %3812 = vmatprep.mubr.bf16.mxu0 0
    %3813 = vmatmul.mubr.bf16.gmra.mrb[0].mxu0 %v3719
    %v3814 = vpop.f32.mrb[0].mxu0
    %v3815 = vadd.f32 %v3680, %v3814
    %v3816 = vpop.f32.mrb[0].mxu0
    %v3817 = vpop.f32.mrb[0].mxu0
    %v3818 = vadd.f32 %v3680, %v3817
    %v3819 = vpop.f32.mrb[0].mxu0
    %3820 = vmatprep.mubr.bf16.mxu0 0
    %3821 = vmatmul.mubr.bf16.gmra.mrb[0].mxu0 %v3722
    %v3822 = vpop.f32.mrb[0].mxu0
    %v3823 = vadd.f32 %v3680, %v3822
    %v3824 = vpop.f32.mrb[0].mxu0
    %v3825 = vpop.f32.mrb[0].mxu0
    %v3826 = vadd.f32 %v3680, %v3825
    %v3827 = vpop.f32.mrb[0].mxu0
    %3828 = vmatprep.mubr.bf16.mxu0 0
    %3829 = vmatmul.mubr.bf16.gmra.mrb[0].mxu0 %v3725
    %v3830 = vpop.f32.mrb[0].mxu0
    %v3831 = vadd.f32 %v3680, %v3830
    %v3832 = vpop.f32.mrb[0].mxu0
    %v3833 = vpop.f32.mrb[0].mxu0
    %v3834 = vadd.f32 %v3680, %v3833
    %v3835 = vpop.f32.mrb[0].mxu0
    %3836 = vmatprep.mubr.bf16.mxu0 0
    %3837 = vmatmul.mubr.bf16.gmra.mrb[0].mxu0 %v3728
    %v3838 = vpop.f32.mrb[0].mxu0
    %v3839 = vadd.f32 %v3680, %v3838
    %v3840 = vpop.f32.mrb[0].mxu0
    %v3841 = vpop.f32.mrb[0].mxu0
    %v3842 = vadd.f32 %v3680, %v3841
    %v3843 = vpop.f32.mrb[0].mxu0
    %3844 = vmatprep.mubr.bf16.mxu0 0
    %3845 = vmatmul.mubr.bf16.gmra.mrb[0].mxu0 %v3731
    %v3846 = vpop.f32.mrb[0].mxu0
    %v3847 = vadd.f32 %v3680, %v3846
    %v3848 = vpop.f32.mrb[0].mxu0
    %v3849 = vpop.f32.mrb[0].mxu0
    %v3850 = vadd.f32 %v3680, %v3849
    %v3851 = vpop.f32.mrb[0].mxu0
    %3852 = vmatprep.mubr.bf16.mxu0 0
    %3853 = vmatmul.mubr.bf16.gmra.mrb[0].mxu0 %v3734
    %v3854 = vpop.f32.mrb[0].mxu0
    %v3855 = vadd.f32 %v3680, %v3854
    %v3856 = vpop.f32.mrb[0].mxu0
    %v3857 = vpop.f32.mrb[0].mxu0
    %v3858 = vadd.f32 %v3680, %v3857
    %v3859 = vpop.f32.mrb[0].mxu0
    %3860 = vmatprep.mubr.bf16.mxu0 0
    %3861 = vmatmul.mubr.bf16.gmra.mrb[0].mxu0 %v3737
    %v3862 = vpop.f32.mrb[0].mxu0
    %v3863 = vadd.f32 %v3680, %v3862
    %v3864 = vpop.f32.mrb[0].mxu0
    %v3865 = vpop.f32.mrb[0].mxu0
    %v3866 = vadd.f32 %v3680, %v3865
    %v3867 = vpop.f32.mrb[0].mxu0
    %3868 = vmatprep.mubr.bf16.mxu0 0
    %3869 = vmatmul.mubr.bf16.gmra.mrb[0].mxu0 %v3740
    %v3870 = vpop.f32.mrb[0].mxu0
    %v3871 = vadd.f32 %v3680, %v3870
    %v3872 = vpop.f32.mrb[0].mxu0
    %v3873 = vpop.f32.mrb[0].mxu0
    %v3874 = vadd.f32 %v3680, %v3873
    %v3875 = vpop.f32.mrb[0].mxu0
    %3876 = vmatprep.mubr.bf16.mxu0 0
    %3877 = vmatmul.mubr.bf16.gmra.mrb[0].mxu0 %v3743
    %v3878 = vpop.f32.mrb[0].mxu0
    %v3879 = vadd.f32 %v3680, %v3878
    %v3880 = vpop.f32.mrb[0].mxu0
    %v3881 = vpop.f32.mrb[0].mxu0
    %v3882 = vadd.f32 %v3680, %v3881
    %v3883 = vpop.f32.mrb[0].mxu0
    %3884 = vmatprep.mubr.bf16.mxu0 0
    %3885 = vmatmul.mubr.bf16.gmra.mrb[0].mxu0 %v3746
    %v3886 = vpop.f32.mrb[0].mxu0
    %v3887 = vadd.f32 %v3680, %v3886
    %v3888 = vpop.f32.mrb[0].mxu0
    %v3889 = vpop.f32.mrb[0].mxu0
    %v3890 = vadd.f32 %v3680, %v3889
    %v3891 = vpop.f32.mrb[0].mxu0
    %3892 = vdwg.mxu0
    %v3893 = vmax.f32 %v3783, 0.0
    %v3894 = vmax.f32 %v3786, 0.0
    %v3895 = vmax.f32 %v3791, 0.0
    %v3896 = vmax.f32 %v3794, 0.0
    %v3897 = vmax.f32 %v3799, 0.0
    %v3898 = vmax.f32 %v3802, 0.0
    %v3899 = vmax.f32 %v3807, 0.0
    %v3900 = vmax.f32 %v3810, 0.0
    %v3901 = vmax.f32 %v3815, 0.0
    %v3902 = vmax.f32 %v3818, 0.0
    %v3903 = vmax.f32 %v3823, 0.0
    %v3904 = vmax.f32 %v3826, 0.0
    %v3905 = vmax.f32 %v3831, 0.0
    %v3906 = vmax.f32 %v3834, 0.0
    %v3907 = vmax.f32 %v3839, 0.0
    %v3908 = vmax.f32 %v3842, 0.0
    %v3909 = vmax.f32 %v3847, 0.0
    %v3910 = vmax.f32 %v3850, 0.0
    %v3911 = vmax.f32 %v3855, 0.0
    %v3912 = vmax.f32 %v3858, 0.0
    %v3913 = vmax.f32 %v3863, 0.0
    %v3914 = vmax.f32 %v3866, 0.0
    %v3915 = vmax.f32 %v3871, 0.0
    %v3916 = vmax.f32 %v3874, 0.0
    %v3917 = vmax.f32 %v3879, 0.0
    %v3918 = vmax.f32 %v3882, 0.0
    %v3919 = vmax.f32 %v3887, 0.0
    %v3920 = vmax.f32 %v3890, 0.0
    %v3921 = vadd.f32 %v3893, %v3895
    %v3922 = vadd.f32 %v3894, %v3896
    %v3923 = vadd.f32 %v3907, %v3909
    %v3924 = vadd.f32 %v3908, %v3910
    %v3925 = vadd.f32 %v3921, %v3897
    %v3926 = vadd.f32 %v3922, %v3898
    %v3927 = vadd.f32 %v3923, %v3911
    %v3928 = vadd.f32 %v3924, %v3912
    %v3929 = vadd.f32 %v3925, %v3899
    %v3930 = vadd.f32 %v3926, %v3900
    %v3931 = vadd.f32 %v3927, %v3913
    %v3932 = vadd.f32 %v3928, %v3914
    %v3933 = vadd.f32 %v3929, %v3901
    %v3934 = vadd.f32 %v3930, %v3902
    %v3935 = vadd.f32 %v3931, %v3915
    %v3936 = vadd.f32 %v3932, %v3916
    %v3937 = vadd.f32 %v3933, %v3903
    %v3938 = vadd.f32 %v3934, %v3904
    %v3939 = vadd.f32 %v3935, %v3917
    %v3940 = vadd.f32 %v3936, %v3918
    %v3941 = vadd.f32 %v3937, %v3905
    %v3942 = vadd.f32 %v3938, %v3906
    %v3943 = vadd.f32 %v3939, %v3919
    %v3944 = vadd.f32 %v3940, %v3920
    %v3945 = vmul.f32 %v3941, 0.14285715
    %v3946 = vmul.f32 %v3942, 0.14285715
    %v3947 = vmul.f32 %v3943, 0.14285715
    %v3948 = vmul.f32 %v3944, 0.14285715
    %v3949 = vadd.f32 %v3114, %v3945
    %v3950 = vadd.f32 %v3115, %v3946
    %v3951 = vadd.f32 %v3116, %v3947
    %v3952 = vadd.f32 %v3117, %v3948
    %v3953 = vmax.f32 %v3949, 0.0
    %v3954 = vmax.f32 %v3950, 0.0
    %v3955 = vmax.f32 %v3951, 0.0
    %v3956 = vmax.f32 %v3952, 0.0
    %v3957 = vmul.f32 %v3953, %v254
    %v3958 = vmul.f32 %v3954, %v255
    %v3959 = vmul.f32 %v3955, %v256
    %v3960 = vmul.f32 %v3956, %v257
    %v3961 = vld [vmem:[%s17] sm:$0xf]
    %v3962 = vld [vmem:[%s17 + $0x4] sm:$0xf]
    %v3963 = vld [vmem:[%s17 + $0x8] sm:$0xf]
    %v3964 = vld [vmem:[%s17 + $0xc] sm:$0xf]
    %v3965 = vld [vmem:[%s17 + $0x10] sm:$0xf]
    %v3966 = vld [vmem:[%s17 + $0x14] sm:$0xf]
    %v3967 = vld [vmem:[%s17 + $0x18] sm:$0xf]
    %v3968 = vld [vmem:[%s17 + $0x1c] sm:$0xf]
    %v3969 = vld [vmem:[%s17 + $0x20] sm:$0xf]
    %v3970 = vld [vmem:[%s17 + $0x24] sm:$0xf]
    %v3971 = vld [vmem:[%s17 + $0x28] sm:$0xf]
    %v3972 = vld [vmem:[%s17 + $0x2c] sm:$0xf]
    %v3973 = vpack.c.bf16 %v3958, %v3957
    %v3974 = vpack.c.bf16 %v3960, %v3959
    %v3983 = vunpack.c.l.b16 %v3965
    %v3984 = vunpack.c.l.b16 %v3966
    %v3985 = vunpack.c.l.b16 %v3967
    %v3986 = vunpack.c.l.b16 %v3968
    %v3987 = vunpack.c.l.b16 %v3969
    %v3988 = vunpack.c.l.b16 %v3970
    %v3989 = vunpack.c.l.b16 %v3971
    %v3990 = vunpack.c.l.b16 %v3972
    %v3991 = vpack.c.b16 %v3984, %v3983
    %v3992 = vpack.c.b16 %v3986, %v3985
    %v3993 = vpack.c.b16 %v3988, %v3987
    %v3994 = vpack.c.b16 %v3990, %v3989
    %v4000 = vsel %vm3446, %v3973, 0
    %v4003 = vsel %vm3446, %v3974, 0
    %4005 = vmatprep.subr.bf16.mxu0 0
    %4006 = vmatpush1.bf16.msra.mxu0 %v3991
    %4007 = vmatprep.subr.bf16.mxu0 0
    %4008 = vmatpush1.bf16.msra.mxu0 %v3992
    %4009 = vmatprep.subr.bf16.mxu0 0
    %4010 = vmatpush1.bf16.msra.mxu0 %v3993
    %4011 = vmatprep.subr.bf16.mxu0 0
    %4012 = vmatpush1.bf16.msra.mxu0 %v3994
    %4013 = vmatprep.subr.bf16.mxu0 0
    %4014 = vmatpush1.bf16.msra.mxu0 0
    %4015 = vmatprep.subr.bf16.mxu0 0
    %4016 = vmatpush1.bf16.msra.mxu0 0
    %4017 = vmatprep.subr.bf16.mxu0 0
    %4018 = vmatpush1.bf16.msra.mxu0 0
    %4019 = vmatprep.subr.bf16.mxu0 0
    %4020 = vmatpush1.bf16.msra.mxu0 0
    %4021 = vmatprep.subr.bf16.mxu0 0
    %4022 = vmatpush1.bf16.msra.mxu0 0
    %4023 = vmatprep.subr.bf16.mxu0 0
    %4024 = vmatpush1.bf16.msra.mxu0 0
    %4025 = vmatprep.subr.bf16.mxu0 0
    %4026 = vmatpush1.bf16.msra.mxu0 0
    %4027 = vmatprep.subr.bf16.mxu0 0
    %4028 = vmatpush1.bf16.msra.mxu0 0
    %4029 = vmatprep.subr.bf16.mxu0 0
    %4030 = vmatpush1.bf16.msra.mxu0 0
    %4031 = vmatprep.subr.bf16.mxu0 0
    %4032 = vmatpush1.bf16.msra.mxu0 0
    %4033 = vmatprep.subr.bf16.mxu0 0
    %4034 = vmatpush1.bf16.msra.mxu0 0
    %4035 = vmatprep.subr.bf16.mxu0 0
    %4036 = vmatpush1.bf16.msra.mxu0 0
    %4037 = vmatprep.mubr.bf16.mxu0 0
    %4038 = vmatmul.mubr.bf16.gmra.mrb[0].mxu0 %v4000
    %v4039 = vpop.f32.mrb[0].mxu0
    %v4040 = vadd.f32 0.0, %v4039
    %v4041 = vpop.f32.mrb[0].mxu0
    %v4042 = vpop.f32.mrb[0].mxu0
    %v4043 = vadd.f32 0.0, %v4042
    %v4044 = vpop.f32.mrb[0].mxu0
    %4045 = vmatprep.mubr.bf16.mxu0 0
    %4046 = vmatmul.mubr.bf16.gmra.mrb[0].mxu0 %v4003
    %v4047 = vpop.f32.mrb[0].mxu0
    %v4048 = vadd.f32 0.0, %v4047
    %v4049 = vpop.f32.mrb[0].mxu0
    %v4050 = vpop.f32.mrb[0].mxu0
    %v4051 = vadd.f32 0.0, %v4050
    %v4052 = vpop.f32.mrb[0].mxu0
    %4053 = vdwg.mxu0
    %v4058 = vunpack.c.l.b16 %v3961
    %v4059 = vunpack.c.l.b16 %v3962
    %v4060 = vunpack.c.l.b16 %v3963
    %v4061 = vunpack.c.l.b16 %v3964
    %v4062 = vpack.c.b16 %v4059, %v4058
    %v4063 = vpack.c.b16 %v4061, %v4060
    %4066 = vmatprep.subr.bf16.mxu0 0
    %4067 = vmatpush1.bf16.msra.mxu0 %v4062
    %4068 = vmatprep.subr.bf16.mxu0 0
    %4069 = vmatpush1.bf16.msra.mxu0 %v4063
    %4070 = vmatprep.subr.bf16.mxu0 0
    %4071 = vmatpush1.bf16.msra.mxu0 0
    %4072 = vmatprep.subr.bf16.mxu0 0
    %4073 = vmatpush1.bf16.msra.mxu0 0
    %4074 = vmatprep.subr.bf16.mxu0 0
    %4075 = vmatpush1.bf16.msra.mxu0 0
    %4076 = vmatprep.subr.bf16.mxu0 0
    %4077 = vmatpush1.bf16.msra.mxu0 0
    %4078 = vmatprep.subr.bf16.mxu0 0
    %4079 = vmatpush1.bf16.msra.mxu0 0
    %4080 = vmatprep.subr.bf16.mxu0 0
    %4081 = vmatpush1.bf16.msra.mxu0 0
    %4082 = vmatprep.subr.bf16.mxu0 0
    %4083 = vmatpush1.bf16.msra.mxu0 0
    %4084 = vmatprep.subr.bf16.mxu0 0
    %4085 = vmatpush1.bf16.msra.mxu0 0
    %4086 = vmatprep.subr.bf16.mxu0 0
    %4087 = vmatpush1.bf16.msra.mxu0 0
    %4088 = vmatprep.subr.bf16.mxu0 0
    %4089 = vmatpush1.bf16.msra.mxu0 0
    %4090 = vmatprep.subr.bf16.mxu0 0
    %4091 = vmatpush1.bf16.msra.mxu0 0
    %4092 = vmatprep.subr.bf16.mxu0 0
    %4093 = vmatpush1.bf16.msra.mxu0 0
    %4094 = vmatprep.subr.bf16.mxu0 0
    %4095 = vmatpush1.bf16.msra.mxu0 0
    %4096 = vmatprep.subr.bf16.mxu0 0
    %4097 = vmatpush1.bf16.msra.mxu0 0
    %4098 = vmatprep.mubr.bf16.mxu0 0
    %4099 = vmatmul.mubr.bf16.gmra.mrb[0].mxu0 %v3038
    %v4100 = vpop.f32.mrb[0].mxu0
    %v4101 = vadd.f32 %v4040, %v4100
    %v4102 = vpop.f32.mrb[0].mxu0
    %v4103 = vpop.f32.mrb[0].mxu0
    %v4104 = vadd.f32 %v4043, %v4103
    %v4105 = vpop.f32.mrb[0].mxu0
    %4106 = vmatprep.mubr.bf16.mxu0 0
    %4107 = vmatmul.mubr.bf16.gmra.mrb[0].mxu0 %v3041
    %v4108 = vpop.f32.mrb[0].mxu0
    %v4109 = vadd.f32 %v4048, %v4108
    %v4110 = vpop.f32.mrb[0].mxu0
    %v4111 = vpop.f32.mrb[0].mxu0
    %v4112 = vadd.f32 %v4051, %v4111
    %v4113 = vpop.f32.mrb[0].mxu0
    %4114 = vdwg.mxu0
    %v4115 = vld [vmem:[%s18] sm:$0x1]
    %v4117 = vlaneseq
    %v4118 = vshrl.u32 %v4117, 7
    %v4119 = vsub.s32 0, %v4118
    %v4120 = vrot.slane %v4115, %v4119
    %v4122 = vadd.f32 %v4101, %v4120
    %v4123 = vadd.f32 %v4104, %v4120
    %v4124 = vadd.f32 %v4109, %v4120
    %v4125 = vadd.f32 %v4112, %v4120
    %v4126 = vmax.f32 %v4122, 0.0
    %v4127 = vmax.f32 %v4123, 0.0
    %v4128 = vmax.f32 %v4124, 0.0
    %v4129 = vmax.f32 %v4125, 0.0
    %v4130 = vmul.f32 %v4126, %v254
    %v4131 = vmul.f32 %v4127, %v255
    %v4132 = vmul.f32 %v4128, %v256
    %v4133 = vmul.f32 %v4129, %v257
    %v4134 = vadd.f32 %v4130, %v4131
    %v4135 = vrot.slane %v4134, 4
    %v4136 = vadd.f32 %v4134, %v4135
    %v4137 = vrot.slane %v4136, 2
    %v4138 = vadd.f32 %v4136, %v4137
    %v4139 = vrot.slane %v4138, 1
    %v4140 = vadd.f32 %v4138, %v4139
    %v4141 = vadd.f32 %v4132, %v4133
    %v4142 = vrot.slane %v4141, 4
    %v4143 = vadd.f32 %v4141, %v4142
    %v4144 = vrot.slane %v4143, 2
    %v4145 = vadd.f32 %v4143, %v4144
    %v4146 = vrot.slane %v4145, 1
    %v4147 = vadd.f32 %v4145, %v4146
    %v4148 = vrcp.pop %v284
    %v4149 = vmul.f32 %v4140, %v4148
    %v4150 = vrcp.pop %v285
    %v4151 = vmul.f32 %v4147, %v4150
    %vm4154 = vcmask 1041409
    %v4155 = vsel %vm4154, %v4151, %v4149
    %4157 = vst [vmem:[#allocation22] sm:$0x3] %v4155
    // Predicated region
    $region126: #{tpu_custom_call.1} parent=1 // pred_check
      _
    $region127: #{tpu_custom_call.1} parent=1 // pred_check_branch
      %4159 = sbr.rel (0) target = $region129
    $region128: #{tpu_custom_call.1} parent=1 // pred_region
      %s4161 = ssub.s32 32, 32
      %4162 = vsyncadd [#allocation4], %s4161
      %s4164 = sshll.u32 [#allocation22], 4
      %s4165 = int_to_ptr.vmem [resolvable:$true] %s4164
      %4167 = dma.vmem_to_hbm [thread:$0]  %s4165, 32, %s19, [#allocation4]
    $region129: #{tpu_custom_call.1} parent=1 // pred_fallthru
      _
    // Predicated region
    $region130: #{tpu_custom_call.1} parent=1 // pred_check
      _
    $region131: #{tpu_custom_call.1} parent=1 // pred_check_branch
      %4169 = sbr.rel (0) target = $region133
    $region132: #{tpu_custom_call.1} parent=1 // pred_region
      %4170 = dma.done [#allocation4], 32
    $region133: #{tpu_custom_call.1} parent=1 // pred_fallthru
      _
    %4171 = vsyncpa [#allocation3], 1
    %4172 = vsyncpa [#allocation6], 1
    %4173 = vsyncpa [#allocation9], 1
    %4174 = vsyncpa [#allocation12], 1
    %4175 = vsyncpa [#allocation15], 1
    %4176 = vsyncpa [#allocation18], 1
    %4177 = vsyncpa [#allocation21], 1
    %4178 = vsyncpa [#allocation4], 1

</llo_original>
